<compile_context>
chip_gen: v6e
topology: v6e:2x2x1
jax: 0.10.0
libtpu: 0.0.40
codegen_flags: <defaults>
</compile_context>

<pallas_src>
import jax
import jax.numpy as jnp
from jax.experimental import pallas as pl
from jax.experimental.pallas import tpu as pltpu

LANE = 128
ROW_TILE = 16          # bf16 sublane tile -> keep row blocks multiples of 16
NEG_BIG = -1e30        # penalty for invalid pooling positions (finite, avoids inf math)


def _round_up(v, m):
    return (v + m - 1) // m * m


def _pad_axis_to(a, target, axis):
    pad = target - a.shape[axis]
    if pad <= 0:
        return a
    widths = [(0, 0)] * a.ndim
    widths[axis] = (0, pad)
    return jnp.pad(a, widths)


def _vmem_bytes(tile_n, w_pad, d, v_pad, l_max, depth, f_pack, out_pad, gather_in_kernel):
    """Rough per-grid-step VMEM footprint (double-buffered streams + intermediates)."""
    b = 0
    if gather_in_kernel:
        b += 2 * tile_n * w_pad * 4                 # int32 indices (double-buffered)
        b += 2 * v_pad * d * 2                      # resident bf16 table
        b += tile_n * w_pad * v_pad * (2 + 4)       # one-hot (+ f32 compare temp)
    else:
        b += 2 * tile_n * w_pad * d * 2             # streamed bf16 embeddings
    b += tile_n * w_pad * d * 2                     # emb value
    b += tile_n * l_max * depth * 2                 # im2col columns (bf16)
    b += tile_n * l_max * f_pack * 4                # conv accumulator (f32)
    b += 2 * tile_n * f_pack * 4                    # pooled / feats
    b += 2 * (depth * f_pack * 2 + f_pack * 4 + l_max * f_pack * 4
              + f_pack * out_pad * 2 + out_pad * 4)  # weights / biases / penalty
    b += 2 * tile_n * 4                             # mask
    b += 2 * tile_n * out_pad * 2                   # bf16 output
    return b


def _pick_tile_n(n, max_tile, vmem_fn):
    """Large row tile (multiple of 16), >=2 grid steps, bounded per-step VMEM."""
    tile = min(max_tile, max(ROW_TILE, _round_up(-(-n // 2), ROW_TILE)))
    while tile > ROW_TILE and vmem_fn(tile) > 16 * 2**20:
        tile = max(ROW_TILE, _round_up(tile // 2, ROW_TILE))
    return tile


def _make_kernel(k_max, l_max, v_pad, w_pad, gather_in_kernel):
    def kernel(*refs):
        if gather_in_kernel:
            idx_ref, table_ref = refs[0], refs[1]
            (convw_ref, convb_ref, pen_ref, fcw_ref, fcb_ref,
             mask_ref, out_ref) = refs[2:]
            idx = idx_ref[...]                                   # (TN, W_pad) int32
            tn = idx.shape[0]
            # One-hot gather on the MXU: indices -> exact bf16 embedding rows.
            vocab_iota = jax.lax.broadcasted_iota(jnp.int32, (tn, w_pad, v_pad), 2)
            onehot = jnp.where(idx[:, :, None] == vocab_iota, 1.0, 0.0)
            emb = jax.lax.dot_general(
                onehot.astype(jnp.bfloat16), table_ref[...],
                dimension_numbers=(((2,), (0,)), ((), ())),
                preferred_element_type=jnp.float32).astype(jnp.bfloat16)
        else:
            emb_ref = refs[0]
            (convw_ref, convb_ref, pen_ref, fcw_ref, fcb_ref,
             mask_ref, out_ref) = refs[1:]
            emb = emb_ref[...]                                   # (TN, W_pad, D) bf16

        # ONE shared im2col for all branches: (TN, Lmax, Kmax*D).
        cols = jnp.concatenate([emb[:, k:k + l_max, :] for k in range(k_max)], axis=-1)
        # ONE packed conv matmul: all branches' filters in disjoint lane ranges.
        acc = jax.lax.dot_general(
            cols, convw_ref[...],
            dimension_numbers=(((2,), (0,)), ((), ())),
            preferred_element_type=jnp.float32)                  # (TN, Lmax, F_pack)
        # Mask invalid pooling positions (per-branch valid length) before the max.
        acc = acc + pen_ref[...][None]
        pooled = jnp.max(acc, axis=1)                            # (TN, F_pack)
        # bias + ReLU after the pool (bias const over time, ReLU monotone).
        pooled = jnp.maximum(pooled + convb_ref[...], 0.0)
        # ONE fc matmul over the packed feature lanes (padded rows of fc_w are zero).
        feats = jnp.dot(pooled.astype(jnp.bfloat16), fcw_ref[...],
                        preferred_element_type=jnp.float32)
        feats = jnp.maximum(feats + fcb_ref[...], 0.0)
        out_ref[...] = (feats * mask_ref[...]).astype(out_ref.dtype)

    return kernel


def cnn_feature_extractor(x, umask, params, *, kernel_sizes, tile_n=None, max_tile=2048):
    """Pallas-backed forward pass of CNNFeatureExtractor (eval mode)."""
    num_utt, batch, num_words = x.shape
    N = num_utt * batch
    emb_table = params["embedding"]                              # (V, D)
    V, D = emb_table.shape
    filters = params["conv0_w"].shape[-1]
    out_dim = params["fc_w"].shape[-1]
    n_ks = len(kernel_sizes)
    k_max, k_min = max(kernel_sizes), min(kernel_sizes)
    l_max = num_words - k_min + 1
    w_pad = num_words + (k_max - k_min)          # shared time padding for one im2col
    depth = k_max * D                            # shared contraction depth
    f_pack = _round_up(n_ks * filters, LANE)     # packed (all branches) filter lanes
    out_pad = _round_up(out_dim, LANE)
    v_pad = _round_up(V, LANE)
    gather_in_kernel = v_pad <= 512              # one-hot MXU gather only for small vocab

    # ---- packed weights (branch i owns lanes [i*filters, (i+1)*filters)) ----
    convw_parts, convb_parts, pen_parts = [], [], []
    for i, K in enumerate(kernel_sizes):
        w = params[f"conv{i}_w"]                                 # (K, D, F)
        w = jnp.pad(w, ((0, k_max - K), (0, 0), (0, 0)))         # zero rows for missing shifts
        convw_parts.append(w.reshape(depth, filters))
        convb_parts.append(params[f"conv{i}_b"])
        L = num_words - K + 1
        col = jnp.where(jnp.arange(l_max)[:, None] < L, 0.0, NEG_BIG)
        pen_parts.append(jnp.broadcast_to(col, (l_max, filters)))
    convw = _pad_axis_to(jnp.concatenate(convw_parts, 1), f_pack, 1).astype(jnp.bfloat16)
    convb = _pad_axis_to(jnp.concatenate(convb_parts, 1), f_pack, 1).astype(jnp.float32)
    pen = _pad_axis_to(jnp.concatenate(pen_parts, 1), f_pack, 1).astype(jnp.float32)
    # fc rows already line up with the packed lane order (branch-major, filter-minor).
    fcw = _pad_axis_to(_pad_axis_to(params["fc_w"], out_pad, 1), f_pack, 0).astype(jnp.bfloat16)
    fcb = _pad_axis_to(params["fc_b"], out_pad, 1).astype(jnp.float32)

    # ---- per-row streams: int32 indices + utterance mask ----
    x_flat = x.reshape(N, num_words).astype(jnp.int32)
    # features.view is utt-major: flat n = u*batch + b  ->  umask[b, u].
    mask_flat = umask.T.reshape(N, 1).astype(jnp.float32)

    def vm(t):
        return _vmem_bytes(t, w_pad, D, v_pad, l_max, depth, f_pack, out_pad,
                           gather_in_kernel)

    if tile_n is None:
        tile_n = _pick_tile_n(N, max_tile, vm)
    tile_n = max(ROW_TILE, _round_up(tile_n, ROW_TILE))
    steps = max(2, -(-N // tile_n))              # >=2 steps: dual-TC + pipelining
    n_pad = steps * tile_n                       # tile_n need not divide N

    x_flat = jnp.pad(x_flat, ((0, n_pad - N), (0, w_pad - num_words)))   # pad ids = 0
    mask_flat = jnp.pad(mask_flat, ((0, n_pad - N), (0, 0)))             # pad mask = 0

    in_specs, operands = [], []
    if gather_in_kernel:
        table = _pad_axis_to(emb_table, v_pad, 0).astype(jnp.bfloat16)
        in_specs += [pl.BlockSpec((tile_n, w_pad), lambda i: (i, 0)),
                     pl.BlockSpec((v_pad, D), lambda i: (0, 0))]
        operands += [x_flat, table]
    else:
        # TODO(synk): large-vocab path gathers in the wrapper and streams bf16 emb.
        emb = jnp.take(emb_table.astype(jnp.bfloat16), x_flat, axis=0)   # (n_pad, w_pad, D)
        in_specs += [pl.BlockSpec((tile_n, w_pad, D), lambda i: (i, 0, 0))]
        operands += [emb]
    in_specs += [pl.BlockSpec((depth, f_pack), lambda i: (0, 0)),
                 pl.BlockSpec((1, f_pack), lambda i: (0, 0)),
                 pl.BlockSpec((l_max, f_pack), lambda i: (0, 0)),
                 pl.BlockSpec((f_pack, out_pad), lambda i: (0, 0)),
                 pl.BlockSpec((1, out_pad), lambda i: (0, 0)),
                 pl.BlockSpec((tile_n, 1), lambda i: (i, 0))]
    operands += [convw, convb, pen, fcw, fcb, mask_flat]

    kernel = _make_kernel(k_max, l_max, v_pad, w_pad, gather_in_kernel)
    vmem_limit = int(min(32 * 2**20, max(8 * 2**20, vm(tile_n) * 3 // 2 + 2 * 2**20)))

    out = pl.pallas_call(
        kernel,
        out_shape=jax.ShapeDtypeStruct((n_pad, out_pad), jnp.bfloat16),
        grid_spec=pltpu.PrefetchScalarGridSpec(
            num_scalar_prefetch=0,
            grid=(steps,),
            in_specs=in_specs,
            out_specs=pl.BlockSpec((tile_n, out_pad), lambda i: (i, 0)),
        ),
        compiler_params=pltpu.CompilerParams(
            dimension_semantics=("parallel",),
            vmem_limit_bytes=vmem_limit),
    )(*operands)

    return out[:N, :out_dim].astype(jnp.float32).reshape(num_utt, batch, out_dim)


def ref_forward(x, umask, params, kernel_sizes):
    """Pure-JAX reference (PyTorch forward in eval mode, mirroring the kernel's mixed
    precision: bf16 matmul inputs, f32 accumulation, bf16 output store)."""
    num_utt, batch, W = x.shape
    N = num_utt * batch
    xf = x.reshape(N, W)
    bf = lambda a: a.astype(jnp.bfloat16).astype(jnp.float32)
    emb = bf(params["embedding"])[xf]                            # (N, W, D)
    pooled_all = []
    for i, K in enumerate(kernel_sizes):
        w = bf(params[f"conv{i}_w"])                             # (K, D, F)
        b = params[f"conv{i}_b"]
        L = W - K + 1
        acc = jnp.zeros((N, L, w.shape[-1]), jnp.float32)
        for k in range(K):
            acc = acc + jnp.einsum("nld,df->nlf", emb[:, k:k + L, :], w[k])
        acc = jax.nn.relu(acc + b)                               # PyTorch order (== post-pool)
        pooled_all.append(bf(jnp.max(acc, axis=1)))              # mirror bf16 fc input
    concat = jnp.concatenate(pooled_all, axis=-1)
    feats = jax.nn.relu(concat @ bf(params["fc_w"]) + params["fc_b"])
    feats = feats.reshape(num_utt, batch, -1)
    out = feats * umask.T[..., None].astype(jnp.float32)
    return out.astype(jnp.bfloat16).astype(jnp.float32)          # mirror bf16 store


def init_params(key, vocab_size, embedding_dim, output_size, filters, kernel_sizes):
    """Deterministic synthetic parameters (shapes match the nn.Module)."""
    params = {}
    keys = jax.random.split(key, 3 + 2 * len(kernel_sizes))
    params["embedding"] = (
        jax.random.normal(keys[0], (vocab_size, embedding_dim), jnp.float32) * 0.1)
    for i, K in enumerate(kernel_sizes):
        # PyTorch Conv1d weight is (F, D, K); stored here pre-transposed as (K, D, F).
        params[f"conv{i}_w"] = (
            jax.random.normal(keys[1 + 2 * i], (K, embedding_dim, filters),
                              jnp.float32) * 0.1)
        params[f"conv{i}_b"] = (
            jax.random.normal(keys[2 + 2 * i], (1, filters), jnp.float32) * 0.1)
    fc_in = len(kernel_sizes) * filters
    # PyTorch Linear weight is (out, in); stored here pre-transposed as (in, out).
    params["fc_w"] = (
        jax.random.normal(keys[-2], (fc_in, output_size), jnp.float32) * 0.1)
    params["fc_b"] = (
        jax.random.normal(keys[-1], (1, output_size), jnp.float32) * 0.1)
    return params


if __name__ == "__main__":
    vocab_size = 50
    embedding_dim = 32
    output_size = 32
    filters = 16
    kernel_sizes = (3, 4, 5)
    dropout = 0.5  # eval mode => identity

    num_utt, batch, num_words = 8, 2, 8

    key = jax.random.PRNGKey(0)
    k_param, k_x, k_mask = jax.random.split(key, 3)

    params = init_params(k_param, vocab_size, embedding_dim, output_size,
                         filters, kernel_sizes)

    x = jax.random.randint(k_x, (num_utt, batch, num_words), 0, vocab_size,
                           dtype=jnp.int32)
    umask = (jax.random.uniform(k_mask, (batch, num_utt)) > 0.2).astype(jnp.float32)

    out = cnn_feature_extractor(x, umask, params, kernel_sizes=kernel_sizes)
    out = jax.block_until_ready(out)

    expected = ref_forward(x, umask, params, kernel_sizes)
    assert out.shape == (num_utt, batch, output_size), out.shape
    assert jnp.allclose(out, expected, rtol=2e-2, atol=2e-3), "mismatch vs reference"

    print("KERNEL_OK")
</pallas_src>

<mosaic_0001>
module attributes {stable_mosaic.version = 11 : i64} {
  func.func @kernel(%arg0: i32, %arg1: memref<16x10xi32, #tpu.memory_space<vmem>>, %arg2: memref<128x32xbf16, #tpu.memory_space<vmem>>, %arg3: memref<160x128xbf16, #tpu.memory_space<vmem>>, %arg4: memref<1x128xf32, #tpu.memory_space<vmem>>, %arg5: memref<6x128xf32, #tpu.memory_space<vmem>>, %arg6: memref<128x128xbf16, #tpu.memory_space<vmem>>, %arg7: memref<1x128xf32, #tpu.memory_space<vmem>>, %arg8: memref<16x1xf32, #tpu.memory_space<vmem>>, %arg9: memref<16x128xbf16, #tpu.memory_space<vmem>>) attributes {dimension_semantics = [#tpu.dimension_semantics<parallel>], iteration_bounds = array<i64: 2>, scalar_prefetch = 0 : i64, scratch_operands = 0 : i64, tpu.core_type = #tpu.core_type<tc>, window_params = [{transform_indices = @transform_0, window_bounds = array<i64: 16, 10>}, {pipeline_mode = #tpu.pipeline_mode<synchronous>, transform_indices = @transform_1, window_bounds = array<i64: 128, 32>}, {pipeline_mode = #tpu.pipeline_mode<synchronous>, transform_indices = @transform_2, window_bounds = array<i64: 160, 128>}, {pipeline_mode = #tpu.pipeline_mode<synchronous>, transform_indices = @transform_3, window_bounds = array<i64: 1, 128>}, {pipeline_mode = #tpu.pipeline_mode<synchronous>, transform_indices = @transform_4, window_bounds = array<i64: 6, 128>}, {pipeline_mode = #tpu.pipeline_mode<synchronous>, transform_indices = @transform_5, window_bounds = array<i64: 128, 128>}, {pipeline_mode = #tpu.pipeline_mode<synchronous>, transform_indices = @transform_6, window_bounds = array<i64: 1, 128>}, {transform_indices = @transform_7, window_bounds = array<i64: 16, 1>}, {transform_indices = @transform_8, window_bounds = array<i64: 16, 128>}]} {
    %c0 = arith.constant 0 : index
    %c0_0 = arith.constant 0 : index
    %0 = vector.load %arg1[%c0, %c0_0] : memref<16x10xi32, #tpu.memory_space<vmem>>, vector<16x10xi32>
    %1 = tpu.iota {dimensions = array<i32: 2>} : vector<16x10x128xi32>
    %2 = vector.shape_cast %0 : vector<16x10xi32> to vector<16x10x1xi32>
    %3 = vector.broadcast %2 : vector<16x10x1xi32> to vector<16x10x128xi32>
    %4 = arith.cmpi eq, %3, %1 : vector<16x10x128xi32>
    %cst = arith.constant 1.000000e+00 : f32
    %cst_1 = arith.constant 0.000000e+00 : f32
    %5 = vector.broadcast %cst : f32 to vector<16x10x128xf32>
    %6 = vector.broadcast %cst_1 : f32 to vector<16x10x128xf32>
    %7 = arith.select %4, %5, %6 : vector<16x10x128xi1>, vector<16x10x128xf32>
    %8 = arith.truncf %7 : vector<16x10x128xf32> to vector<16x10x128xbf16>
    %c0_2 = arith.constant 0 : index
    %c0_3 = arith.constant 0 : index
    %9 = vector.load %arg2[%c0_2, %c0_3] : memref<128x32xbf16, #tpu.memory_space<vmem>>, vector<128x32xbf16>
    %cst_4 = arith.constant dense<0.000000e+00> : vector<16x10x32xf32>
    %10 = tpu.matmul %8, %9, %cst_4 {dimension_numbers = #tpu.dot_dimension_numbers<[2], [0], [0, 1], [1], [0, 0, 0, 1, 1, 1], [], []>} : vector<16x10x128xbf16>, vector<128x32xbf16>, vector<16x10x32xf32> -> vector<16x10x32xf32>
    %11 = arith.truncf %10 : vector<16x10x32xf32> to vector<16x10x32xbf16>
    %12 = vector.extract_strided_slice %11 {offsets = [0, 0, 0], sizes = [16, 6, 32], strides = [1, 1, 1]} : vector<16x10x32xbf16> to vector<16x6x32xbf16>
    %13 = vector.extract_strided_slice %11 {offsets = [0, 1, 0], sizes = [16, 6, 32], strides = [1, 1, 1]} : vector<16x10x32xbf16> to vector<16x6x32xbf16>
    %14 = vector.extract_strided_slice %11 {offsets = [0, 2, 0], sizes = [16, 6, 32], strides = [1, 1, 1]} : vector<16x10x32xbf16> to vector<16x6x32xbf16>
    %15 = vector.extract_strided_slice %11 {offsets = [0, 3, 0], sizes = [16, 6, 32], strides = [1, 1, 1]} : vector<16x10x32xbf16> to vector<16x6x32xbf16>
    %16 = vector.extract_strided_slice %11 {offsets = [0, 4, 0], sizes = [16, 6, 32], strides = [1, 1, 1]} : vector<16x10x32xbf16> to vector<16x6x32xbf16>
    %17 = tpu.concatenate %12, %13, %14, %15, %16 in 2 : vector<16x6x32xbf16>, vector<16x6x32xbf16>, vector<16x6x32xbf16>, vector<16x6x32xbf16>, vector<16x6x32xbf16> -> vector<16x6x160xbf16>
    %c0_5 = arith.constant 0 : index
    %c0_6 = arith.constant 0 : index
    %18 = vector.load %arg3[%c0_5, %c0_6] : memref<160x128xbf16, #tpu.memory_space<vmem>>, vector<160x128xbf16>
    %cst_7 = arith.constant dense<0.000000e+00> : vector<16x6x128xf32>
    %19 = tpu.matmul %17, %18, %cst_7 {dimension_numbers = #tpu.dot_dimension_numbers<[2], [0], [0, 1], [1], [0, 0, 0, 1, 1, 1], [], []>} : vector<16x6x160xbf16>, vector<160x128xbf16>, vector<16x6x128xf32> -> vector<16x6x128xf32>
    %c0_8 = arith.constant 0 : index
    %c0_9 = arith.constant 0 : index
    %20 = vector.load %arg5[%c0_8, %c0_9] : memref<6x128xf32, #tpu.memory_space<vmem>>, vector<6x128xf32>
    %21 = vector.shape_cast %20 : vector<6x128xf32> to vector<1x6x128xf32>
    %22 = vector.broadcast %21 : vector<1x6x128xf32> to vector<16x6x128xf32>
    %23 = arith.addf %19, %22 : vector<16x6x128xf32>
    %cst_10 = arith.constant dense<0xFF800000> : vector<16x128xf32>
    %24 = vector.multi_reduction <maximumf>, %23, %cst_10 [1] : vector<16x6x128xf32> to vector<16x128xf32>
    %c0_11 = arith.constant 0 : index
    %c0_12 = arith.constant 0 : index
    %25 = vector.load %arg4[%c0_11, %c0_12] : memref<1x128xf32, #tpu.memory_space<vmem>>, vector<1x128xf32>
    %26 = vector.broadcast %25 : vector<1x128xf32> to vector<16x128xf32>
    %27 = arith.addf %24, %26 : vector<16x128xf32>
    %cst_13 = arith.constant 0.000000e+00 : f32
    %28 = vector.broadcast %cst_13 : f32 to vector<16x128xf32>
    %29 = arith.maximumf %27, %28 : vector<16x128xf32>
    %30 = arith.truncf %29 : vector<16x128xf32> to vector<16x128xbf16>
    %c0_14 = arith.constant 0 : index
    %c0_15 = arith.constant 0 : index
    %31 = vector.load %arg6[%c0_14, %c0_15] : memref<128x128xbf16, #tpu.memory_space<vmem>>, vector<128x128xbf16>
    %cst_16 = arith.constant dense<0.000000e+00> : vector<16x128xf32>
    %32 = tpu.matmul %30, %31, %cst_16 {dimension_numbers = #tpu.dot_dimension_numbers<[1], [0], [0], [1], [0, 0, 1, 1], [], []>} : vector<16x128xbf16>, vector<128x128xbf16>, vector<16x128xf32> -> vector<16x128xf32>
    %c0_17 = arith.constant 0 : index
    %c0_18 = arith.constant 0 : index
    %33 = vector.load %arg7[%c0_17, %c0_18] : memref<1x128xf32, #tpu.memory_space<vmem>>, vector<1x128xf32>
    %34 = vector.broadcast %33 : vector<1x128xf32> to vector<16x128xf32>
    %35 = arith.addf %32, %34 : vector<16x128xf32>
    %cst_19 = arith.constant 0.000000e+00 : f32
    %36 = vector.broadcast %cst_19 : f32 to vector<16x128xf32>
    %37 = arith.maximumf %35, %36 : vector<16x128xf32>
    %c0_20 = arith.constant 0 : index
    %c0_21 = arith.constant 0 : index
    %38 = vector.load %arg8[%c0_20, %c0_21] : memref<16x1xf32, #tpu.memory_space<vmem>>, vector<16x1xf32>
    %39 = vector.broadcast %38 : vector<16x1xf32> to vector<16x128xf32>
    %40 = arith.mulf %37, %39 : vector<16x128xf32>
    %41 = arith.truncf %40 : vector<16x128xf32> to vector<16x128xbf16>
    %c0_22 = arith.constant 0 : index
    %c0_23 = arith.constant 0 : index
    %42 = vector.load %arg9[%c0_22, %c0_23] : memref<16x128xbf16, #tpu.memory_space<vmem>>, vector<16x128xbf16>
    tpu.vector_store %arg9[%c0_22, %c0_23], %41 {strides = array<i32>} : memref<16x128xbf16, #tpu.memory_space<vmem>>, vector<16x128xbf16>,
    return
  }
  func.func @transform_0(%arg0: i32) -> (i32, i32) {
    %c0_i32 = arith.constant 0 : i32
    %c0_i32_0 = arith.constant 0 : i32
    return %arg0, %c0_i32 : i32, i32
  }
  func.func @transform_1(%arg0: i32) -> (i32, i32) {
    %c0_i32 = arith.constant 0 : i32
    %c0_i32_0 = arith.constant 0 : i32
    %c0_i32_1 = arith.constant 0 : i32
    return %c0_i32, %c0_i32_0 : i32, i32
  }
  func.func @transform_2(%arg0: i32) -> (i32, i32) {
    %c0_i32 = arith.constant 0 : i32
    %c0_i32_0 = arith.constant 0 : i32
    %c0_i32_1 = arith.constant 0 : i32
    return %c0_i32, %c0_i32_0 : i32, i32
  }
  func.func @transform_3(%arg0: i32) -> (i32, i32) {
    %c0_i32 = arith.constant 0 : i32
    %c0_i32_0 = arith.constant 0 : i32
    %c0_i32_1 = arith.constant 0 : i32
    return %c0_i32, %c0_i32_0 : i32, i32
  }
  func.func @transform_4(%arg0: i32) -> (i32, i32) {
    %c0_i32 = arith.constant 0 : i32
    %c0_i32_0 = arith.constant 0 : i32
    %c0_i32_1 = arith.constant 0 : i32
    return %c0_i32, %c0_i32_0 : i32, i32
  }
  func.func @transform_5(%arg0: i32) -> (i32, i32) {
    %c0_i32 = arith.constant 0 : i32
    %c0_i32_0 = arith.constant 0 : i32
    %c0_i32_1 = arith.constant 0 : i32
    return %c0_i32, %c0_i32_0 : i32, i32
  }
  func.func @transform_6(%arg0: i32) -> (i32, i32) {
    %c0_i32 = arith.constant 0 : i32
    %c0_i32_0 = arith.constant 0 : i32
    %c0_i32_1 = arith.constant 0 : i32
    return %c0_i32, %c0_i32_0 : i32, i32
  }
  func.func @transform_7(%arg0: i32) -> (i32, i32) {
    %c0_i32 = arith.constant 0 : i32
    %c0_i32_0 = arith.constant 0 : i32
    return %arg0, %c0_i32 : i32, i32
  }
  func.func @transform_8(%arg0: i32) -> (i32, i32) {
    %c0_i32 = arith.constant 0 : i32
    %c0_i32_0 = arith.constant 0 : i32
    return %arg0, %c0_i32 : i32, i32
  }
}

</mosaic_0001>

<llo_original>
// kernel: tpu_custom_call.1
$region0: #{tpu_custom_call.1}
  #allocation0 [shape = 'u32[]', space=smem, size = 0x4, offset = 0x4, fixed_abs, tag = 'smem constant byte address 0x4 - core index']
  #allocation1 [shape = 'u32[144,128]{1,0:T(1,128)}', space=vmem, size = 0x12000, scoped, tag = 'internal scratch']
  %s0 = inlined_call_operand.vmem [shape: s32[32,10], index: 0, kind: input, shape index: {}]
  %s1 = inlined_call_operand.vmem [shape: bf16[128,32], index: 1, kind: input, shape index: {}]
  %s2 = inlined_call_operand.vmem [shape: bf16[160,128], index: 2, kind: input, shape index: {}]
  %s3 = inlined_call_operand.hbm [shape: f32[1,128], index: 3, kind: input, shape index: {}]
  %s4 = inlined_call_operand.vmem [shape: f32[6,128], index: 4, kind: input, shape index: {}]
  %s5 = inlined_call_operand.vmem [shape: bf16[128,128], index: 5, kind: input, shape index: {}]
  %s6 = inlined_call_operand.vmem [shape: f32[1,128], index: 6, kind: input, shape index: {}]
  %s7 = inlined_call_operand.vmem [shape: f32[32,1], index: 7, kind: input, shape index: {}]
  %s8 = inlined_call_operand.hbm [shape: bf16[32,128], index: 8, kind: output, shape index: {}]
  %s9 = sld [smem:[#allocation0]]
  $region69: #{tpu_custom_call.1} parent=0
    _
  %s11 = ssub.s32 1, %s9
  %s12 = scalar_select 0, %s11, %s9
  $region1: #{tpu_custom_call.1} parent=0
    #allocation2 [shape = 'u8[512]{0}', space=vmem, size = 0x400, scoped, tag = 'input window, operand 3, single buffered']
    #allocation3 [shape = 's32[2]{0}', space=sflag, size = 0x8, scoped, tag = 'scoped memory for tpu_custom_call.1']
    #allocation4 [shape = 's32[2]{0}', space=sflag, size = 0x8, scoped, tag = 'scoped memory for tpu_custom_call.1']
    #allocation5 [shape = 'u8[8192]{0}', space=vmem, size = 0x2000, scoped, tag = 'output window, operand 0']
    %13 = vsyncpa [#allocation3], 0
    %14 = vsyncpa [#allocation4], 0
    %s15 = scalar_lea.sflag [#allocation4], 1
    %16 = vsyncpa %s15, 0
    loop: start=0, step=1, limit=4
    $region2: #{tpu_custom_call.1} parent=1 // loop_pre_header
      _
    $region3: #{tpu_custom_call.1} parent=1 // loop_header
      %s18 = sphi 0, %s22
      %p19 = scmp.ge.s32.totalorder %s18, 4
      %s28 = sphi 0, %s30
      %s31 = sphi 0, %s28
      %s32 = sphi 0, %s31
      %s48 = sphi 0, %s32
      %s52 = sphi 0, %s52
      %s54 = sphi 0, %s52
      %s55 = sphi 0, %s54
      %s69 = sphi 0, %s55
      %s73 = sphi 0, %s73
      %s75 = sphi 0, %s73
      %s76 = sphi 0, %s75
      %s90 = sphi 0, %s76
      %s94 = sphi 0, %s94
      %s96 = sphi 0, %s94
      %s97 = sphi 0, %s96
      %s111 = sphi 0, %s97
      %s115 = sphi 0, %s115
      %s117 = sphi 0, %s115
      %s118 = sphi 0, %s117
      %s132 = sphi 0, %s118
      %s136 = sphi 0, %s136
      %s138 = sphi 0, %s136
      %s139 = sphi 0, %s138
      %s153 = sphi 0, %s139
      %s157 = sphi 0, %s157
      %s159 = sphi 0, %s157
      %s160 = sphi 0, %s159
      %s174 = sphi 0, %s160
      %s180 = sphi 0, %s182
      %s183 = sphi 0, %s180
      %s184 = sphi 0, %s183
      %s200 = sphi 0, %s184
      %s206 = sphi 0, %s208
      %s209 = sphi 0, %s206
      %s210 = sphi 0, %s209
      %s226 = sphi 0, %s210
    $region4: #{tpu_custom_call.1} parent=1 // loop_header_branch
      %21 = sbr.rel (%p19) target = $region8
    $region5: #{tpu_custom_call.1} parent=1 // loop_body
      %s23 = ssub.s32 %s18, 1
      %s24 = ssub.s32 %s18, 2
      %s25 = sadd.s32 %s18, 1
      %s26 = ssub.s32 %s18, %s25
      %p27 = scmp.eq.s32.totalorder %s26, 0
      %s29 = sadd.s32 %s28, 1
      %s30 = scalar_select %p27, %s28, %s29
      %p33 = pneg %p27
      %p34 = scmp.eq.s32.totalorder %s18, 1
      %p35 = por %p33, %p34
      %p36 = scmp.ne.s32.totalorder %s28, %s31
      %p37 = scmp.eq.s32.totalorder %s18, 0
      %p38 = por %p36, %p37
      %p39 = scmp.ne.s32.totalorder %s28, %s31
      %p40 = scmp.eq.s32.totalorder %s23, 1
      %p41 = por %p39, %p40
      %p42 = scmp.ne.s32.totalorder %s31, %s32
      %p43 = scmp.eq.s32.totalorder %s23, 0
      %p44 = por %p42, %p43
      %p45 = scmp.ne.s32.totalorder %s31, %s32
      %p46 = scmp.eq.s32.totalorder %s24, 1
      %p47 = por %p45, %p46
      %p49 = scmp.ne.s32.totalorder %s32, %s48
      %p50 = scmp.eq.s32.totalorder %s24, 0
      %p51 = por %p49, %p50
      %s53 = sadd.s32 %s52, 1
      %p56 = scmp.eq.s32.totalorder %s18, 1
      %p57 = scmp.ne.s32.totalorder %s52, %s54
      %p58 = scmp.eq.s32.totalorder %s18, 0
      %p59 = por %p57, %p58
      %p60 = scmp.ne.s32.totalorder %s52, %s54
      %p61 = scmp.eq.s32.totalorder %s23, 1
      %p62 = por %p60, %p61
      %p63 = scmp.ne.s32.totalorder %s54, %s55
      %p64 = scmp.eq.s32.totalorder %s23, 0
      %p65 = por %p63, %p64
      %p66 = scmp.ne.s32.totalorder %s54, %s55
      %p67 = scmp.eq.s32.totalorder %s24, 1
      %p68 = por %p66, %p67
      %p70 = scmp.ne.s32.totalorder %s55, %s69
      %p71 = scmp.eq.s32.totalorder %s24, 0
      %p72 = por %p70, %p71
      %s74 = sadd.s32 %s73, 1
      %p77 = scmp.eq.s32.totalorder %s18, 1
      %p78 = scmp.ne.s32.totalorder %s73, %s75
      %p79 = scmp.eq.s32.totalorder %s18, 0
      %p80 = por %p78, %p79
      %p81 = scmp.ne.s32.totalorder %s73, %s75
      %p82 = scmp.eq.s32.totalorder %s23, 1
      %p83 = por %p81, %p82
      %p84 = scmp.ne.s32.totalorder %s75, %s76
      %p85 = scmp.eq.s32.totalorder %s23, 0
      %p86 = por %p84, %p85
      %p87 = scmp.ne.s32.totalorder %s75, %s76
      %p88 = scmp.eq.s32.totalorder %s24, 1
      %p89 = por %p87, %p88
      %p91 = scmp.ne.s32.totalorder %s76, %s90
      %p92 = scmp.eq.s32.totalorder %s24, 0
      %p93 = por %p91, %p92
      %s95 = sadd.s32 %s94, 1
      %p98 = scmp.eq.s32.totalorder %s18, 1
      %p99 = scmp.ne.s32.totalorder %s94, %s96
      %p100 = scmp.eq.s32.totalorder %s18, 0
      %p101 = por %p99, %p100
      %p102 = scmp.ne.s32.totalorder %s94, %s96
      %p103 = scmp.eq.s32.totalorder %s23, 1
      %p104 = por %p102, %p103
      %p105 = scmp.ne.s32.totalorder %s96, %s97
      %p106 = scmp.eq.s32.totalorder %s23, 0
      %p107 = por %p105, %p106
      %p108 = scmp.ne.s32.totalorder %s96, %s97
      %p109 = scmp.eq.s32.totalorder %s24, 1
      %p110 = por %p108, %p109
      %p112 = scmp.ne.s32.totalorder %s97, %s111
      %p113 = scmp.eq.s32.totalorder %s24, 0
      %p114 = por %p112, %p113
      %s116 = sadd.s32 %s115, 1
      %p119 = scmp.eq.s32.totalorder %s18, 1
      %p120 = scmp.ne.s32.totalorder %s115, %s117
      %p121 = scmp.eq.s32.totalorder %s18, 0
      %p122 = por %p120, %p121
      %p123 = scmp.ne.s32.totalorder %s115, %s117
      %p124 = scmp.eq.s32.totalorder %s23, 1
      %p125 = por %p123, %p124
      %p126 = scmp.ne.s32.totalorder %s117, %s118
      %p127 = scmp.eq.s32.totalorder %s23, 0
      %p128 = por %p126, %p127
      %p129 = scmp.ne.s32.totalorder %s117, %s118
      %p130 = scmp.eq.s32.totalorder %s24, 1
      %p131 = por %p129, %p130
      %p133 = scmp.ne.s32.totalorder %s118, %s132
      %p134 = scmp.eq.s32.totalorder %s24, 0
      %p135 = por %p133, %p134
      %s137 = sadd.s32 %s136, 1
      %p140 = scmp.eq.s32.totalorder %s18, 1
      %p141 = scmp.ne.s32.totalorder %s136, %s138
      %p142 = scmp.eq.s32.totalorder %s18, 0
      %p143 = por %p141, %p142
      %p144 = scmp.ne.s32.totalorder %s136, %s138
      %p145 = scmp.eq.s32.totalorder %s23, 1
      %p146 = por %p144, %p145
      %p147 = scmp.ne.s32.totalorder %s138, %s139
      %p148 = scmp.eq.s32.totalorder %s23, 0
      %p149 = por %p147, %p148
      %p150 = scmp.ne.s32.totalorder %s138, %s139
      %p151 = scmp.eq.s32.totalorder %s24, 1
      %p152 = por %p150, %p151
      %p154 = scmp.ne.s32.totalorder %s139, %s153
      %p155 = scmp.eq.s32.totalorder %s24, 0
      %p156 = por %p154, %p155
      %s158 = sadd.s32 %s157, 1
      %p161 = scmp.eq.s32.totalorder %s18, 1
      %p162 = scmp.ne.s32.totalorder %s157, %s159
      %p163 = scmp.eq.s32.totalorder %s18, 0
      %p164 = por %p162, %p163
      %p165 = scmp.ne.s32.totalorder %s157, %s159
      %p166 = scmp.eq.s32.totalorder %s23, 1
      %p167 = por %p165, %p166
      %p168 = scmp.ne.s32.totalorder %s159, %s160
      %p169 = scmp.eq.s32.totalorder %s23, 0
      %p170 = por %p168, %p169
      %p171 = scmp.ne.s32.totalorder %s159, %s160
      %p172 = scmp.eq.s32.totalorder %s24, 1
      %p173 = por %p171, %p172
      %p175 = scmp.ne.s32.totalorder %s160, %s174
      %p176 = scmp.eq.s32.totalorder %s24, 0
      %p177 = por %p175, %p176
      %s178 = ssub.s32 %s18, %s25
      %p179 = scmp.eq.s32.totalorder %s178, 0
      %s181 = sadd.s32 %s180, 1
      %s182 = scalar_select %p179, %s180, %s181
      %p185 = pneg %p179
      %p186 = scmp.eq.s32.totalorder %s18, 1
      %p187 = por %p185, %p186
      %p188 = scmp.ne.s32.totalorder %s180, %s183
      %p189 = scmp.eq.s32.totalorder %s18, 0
      %p190 = por %p188, %p189
      %p191 = scmp.ne.s32.totalorder %s180, %s183
      %p192 = scmp.eq.s32.totalorder %s23, 1
      %p193 = por %p191, %p192
      %p194 = scmp.ne.s32.totalorder %s183, %s184
      %p195 = scmp.eq.s32.totalorder %s23, 0
      %p196 = por %p194, %p195
      %p197 = scmp.ne.s32.totalorder %s183, %s184
      %p198 = scmp.eq.s32.totalorder %s24, 1
      %p199 = por %p197, %p198
      %p201 = scmp.ne.s32.totalorder %s184, %s200
      %p202 = scmp.eq.s32.totalorder %s24, 0
      %p203 = por %p201, %p202
      %s204 = ssub.s32 %s18, %s25
      %p205 = scmp.eq.s32.totalorder %s204, 0
      %s207 = sadd.s32 %s206, 1
      %s208 = scalar_select %p205, %s206, %s207
      %p211 = pneg %p205
      %p212 = scmp.eq.s32.totalorder %s18, 1
      %p213 = por %p211, %p212
      %p214 = scmp.ne.s32.totalorder %s206, %s209
      %p215 = scmp.eq.s32.totalorder %s18, 0
      %p216 = por %p214, %p215
      %p217 = scmp.ne.s32.totalorder %s206, %s209
      %p218 = scmp.eq.s32.totalorder %s23, 1
      %p219 = por %p217, %p218
      %p220 = scmp.ne.s32.totalorder %s209, %s210
      %p221 = scmp.eq.s32.totalorder %s23, 0
      %p222 = por %p220, %p221
      %p223 = scmp.ne.s32.totalorder %s209, %s210
      %p224 = scmp.eq.s32.totalorder %s24, 1
      %p225 = por %p223, %p224
      %p227 = scmp.ne.s32.totalorder %s210, %s226
      %p228 = scmp.eq.s32.totalorder %s24, 0
      %p229 = por %p227, %p228
      %p230 = scmp.le.s32.totalorder 1, %s18
      %p231 = scmp.lt.s32.totalorder %s18, 3
      %p232 = pnand %p230, %p231
      %p233 = pneg %p232
      // Predicated region
      $region9: #{tpu_custom_call.1} parent=5 // pred_check
        _
      $region10: #{tpu_custom_call.1} parent=5 // pred_check_branch
        %235 = sbr.rel (%p232) target = $region12
      $region11: #{tpu_custom_call.1} parent=5 // pred_region
        %s236 = ssub.s32 %s18, 1
        // Predicated region
        $region13: #{tpu_custom_call.1} parent=11 // pred_check
          %p237 = pneg %p65
        $region14: #{tpu_custom_call.1} parent=11 // pred_check_branch
          %239 = sbr.rel (%p237) target = $region16
        $region15: #{tpu_custom_call.1} parent=11 // pred_region
          _
        $region16: #{tpu_custom_call.1} parent=11 // pred_fallthru
          _
        // Predicated region
        $region17: #{tpu_custom_call.1} parent=11 // pred_check
          %p240 = pneg %p86
        $region18: #{tpu_custom_call.1} parent=11 // pred_check_branch
          %242 = sbr.rel (%p240) target = $region20
        $region19: #{tpu_custom_call.1} parent=11 // pred_region
          _
        $region20: #{tpu_custom_call.1} parent=11 // pred_fallthru
          _
        // Predicated region
        $region21: #{tpu_custom_call.1} parent=11 // pred_check
          %p243 = pneg %p107
        $region22: #{tpu_custom_call.1} parent=11 // pred_check_branch
          %245 = sbr.rel (%p243) target = $region24
        $region23: #{tpu_custom_call.1} parent=11 // pred_region
          %s247 = ssub.s32 16, 16
          %248 = vsyncadd [#allocation3], %s247
          %s250 = sshll.u32 [#allocation2], 4
          %s251 = int_to_ptr.vmem [resolvable:$true] %s250
          %253 = dma.hbm_to_vmem [thread:$0]  %s3, 16, %s251, [#allocation3]
        $region24: #{tpu_custom_call.1} parent=11 // pred_fallthru
          _
        // Predicated region
        $region25: #{tpu_custom_call.1} parent=11 // pred_check
          %p254 = pneg %p128
        $region26: #{tpu_custom_call.1} parent=11 // pred_check_branch
          %256 = sbr.rel (%p254) target = $region28
        $region27: #{tpu_custom_call.1} parent=11 // pred_region
          _
        $region28: #{tpu_custom_call.1} parent=11 // pred_fallthru
          _
        // Predicated region
        $region29: #{tpu_custom_call.1} parent=11 // pred_check
          %p257 = pneg %p149
        $region30: #{tpu_custom_call.1} parent=11 // pred_check_branch
          %259 = sbr.rel (%p257) target = $region32
        $region31: #{tpu_custom_call.1} parent=11 // pred_region
          _
        $region32: #{tpu_custom_call.1} parent=11 // pred_fallthru
          _
        // Predicated region
        $region33: #{tpu_custom_call.1} parent=11 // pred_check
          %p260 = pneg %p170
        $region34: #{tpu_custom_call.1} parent=11 // pred_check_branch
          %262 = sbr.rel (%p260) target = $region36
        $region35: #{tpu_custom_call.1} parent=11 // pred_region
          _
        $region36: #{tpu_custom_call.1} parent=11 // pred_fallthru
          _
      $region12: #{tpu_custom_call.1} parent=5 // pred_fallthru
        _
      %p263 = scmp.lt.s32.totalorder %s18, 2
      // Predicated region
      $region37: #{tpu_custom_call.1} parent=5 // pred_check
        %p264 = pneg %p263
      $region38: #{tpu_custom_call.1} parent=5 // pred_check_branch
        %266 = sbr.rel (%p264) target = $region40
      $region39: #{tpu_custom_call.1} parent=5 // pred_region
        // Predicated region
        $region41: #{tpu_custom_call.1} parent=39 // pred_check
          %p267 = pneg %p38
        $region42: #{tpu_custom_call.1} parent=39 // pred_check_branch
          %269 = sbr.rel (%p267) target = $region44
        $region43: #{tpu_custom_call.1} parent=39 // pred_region
          %s270 = smul.u32 2, %s18
          %p271 = scmp.lt.s32.totalorder %s270, 3
          %s272 = scalar_select %p271, %s270, 3
          %s273 = smul.addr %s272, 8
          %s274 = scalar_lea.vmem %s0, %s273
          %s275 = smul.u32 2, %s18
        $region44: #{tpu_custom_call.1} parent=39 // pred_fallthru
          _
        // Predicated region
        $region45: #{tpu_custom_call.1} parent=39 // pred_check
          %p276 = pneg %p190
        $region46: #{tpu_custom_call.1} parent=39 // pred_check_branch
          %278 = sbr.rel (%p276) target = $region48
        $region47: #{tpu_custom_call.1} parent=39 // pred_region
          %s279 = smul.u32 2, %s18
          %p280 = scmp.lt.s32.totalorder %s279, 3
          %s281 = scalar_select %p280, %s279, 3
          %s282 = smul.addr %s281, 8
          %s283 = scalar_lea.vmem %s7, %s282
          %s284 = smul.u32 2, %s18
        $region48: #{tpu_custom_call.1} parent=39 // pred_fallthru
          _
      $region40: #{tpu_custom_call.1} parent=5 // pred_fallthru
        _
      %p285 = scmp.le.s32.totalorder 1, %s18
      %p286 = scmp.lt.s32.totalorder %s18, 3
      %p287 = pnand %p285, %p286
      %p288 = pneg %p287
      // Predicated region
      $region49: #{tpu_custom_call.1} parent=5 // pred_check
        _
      $region50: #{tpu_custom_call.1} parent=5 // pred_check_branch
        %290 = sbr.rel (%p287) target = $region52
      $region51: #{tpu_custom_call.1} parent=5 // pred_region
        %s291 = ssub.s32 %s18, 1
        // Predicated region
        $region53: #{tpu_custom_call.1} parent=51 // pred_check
          %p292 = pneg %p107
        $region54: #{tpu_custom_call.1} parent=51 // pred_check_branch
          %294 = sbr.rel (%p292) target = $region56
        $region55: #{tpu_custom_call.1} parent=51 // pred_region
          %295 = dma.done [#allocation3], 16
        $region56: #{tpu_custom_call.1} parent=51 // pred_fallthru
          _
        %s296 = smul.u32 2, %s23
        %p297 = scmp.lt.s32.totalorder %s296, 3
        %s298 = scalar_select %p297, %s296, 3
        %s299 = smul.addr %s298, 8
        %s300 = scalar_lea.vmem %s0, %s299
        %p301 = pneg %p44
        %p302 = pneg %p41
        %p303 = pneg %p65
        %p304 = pneg %p62
        %p305 = pneg %p86
        %p306 = pneg %p83
        %p307 = pneg %p107
        %p308 = pneg %p104
        %p309 = pneg %p128
        %p310 = pneg %p125
        %p311 = pneg %p149
        %p312 = pneg %p146
        %p313 = pneg %p170
        %p314 = pneg %p167
        %s315 = smul.u32 2, %s23
        %p316 = scmp.lt.s32.totalorder %s315, 3
        %s317 = scalar_select %p316, %s315, 3
        %s318 = smul.addr %s317, 8
        %s319 = scalar_lea.vmem %s7, %s318
        %p320 = pneg %p196
        %p321 = pneg %p193
        %p322 = pneg %p222
        %p323 = pneg %p219
        %s324 = sand.u32 %s209, 1
        %s325 = scalar_lea.sflag [#allocation4], %s324
        %s326 = sand.u32 %s209, 1
        %s327 = smul.addr %s326, 8
        %s328 = scalar_lea.vmem [#allocation5], %s327
        %s329 = smul.u32 2, %s23
        %p330 = scmp.lt.s32.totalorder %s329, 3
        %s331 = scalar_select %p330, %s329, 3
        %s332 = smul.addr %s331, 8
        %s333 = scalar_lea.vmem %s0, %s332
        %s334 = smul.u32 2, %s23
        %s335 = smul.u32 2, %s23
        %p336 = scmp.lt.s32.totalorder %s335, 3
        %s337 = scalar_select %p336, %s335, 3
        %s338 = smul.addr %s337, 8
        %s339 = scalar_lea.vmem %s7, %s338
        %s340 = smul.u32 2, %s23
        %s341 = smul.u32 2, %s23
        %v343 = vld [vmem:[%s333] sm:$0xff]
        %v344 = vld [vmem:[%s333 + $0x8] sm:$0xff]
        %v345 = vlaneseq
        %v346 = vand.u32 %v345, 127
        %v347 = vlaneseq
        %v348 = vshrl.u32 %v347, 7
        %v349 = vsub.s32 0, %v348
        %v350 = vrot.slane %v343, %v349
        %352 = vbcast.lane.b32.xlu0 %v350, 256
        %v353 = vpop.permute.xlu0 %352
        %s355 = sor.u32 256, 8
        %356 = vbcast.lane.b32.xlu0 %v350, %s355
        %v357 = vpop.permute.xlu0 %356
        %v358 = vlaneseq
        %v359 = vshrl.u32 %v358, 7
        %v360 = vsub.s32 1, %v359
        %v361 = vrot.slane %v343, %v360
        %363 = vbcast.lane.b32.xlu0 %v361, 256
        %v364 = vpop.permute.xlu0 %363
        %s366 = sor.u32 256, 8
        %367 = vbcast.lane.b32.xlu0 %v361, %s366
        %v368 = vpop.permute.xlu0 %367
        %v369 = vlaneseq
        %v370 = vshrl.u32 %v369, 7
        %v371 = vsub.s32 2, %v370
        %v372 = vrot.slane %v343, %v371
        %374 = vbcast.lane.b32.xlu0 %v372, 256
        %v375 = vpop.permute.xlu0 %374
        %s377 = sor.u32 256, 8
        %378 = vbcast.lane.b32.xlu0 %v372, %s377
        %v379 = vpop.permute.xlu0 %378
        %v380 = vlaneseq
        %v381 = vshrl.u32 %v380, 7
        %v382 = vsub.s32 3, %v381
        %v383 = vrot.slane %v343, %v382
        %385 = vbcast.lane.b32.xlu0 %v383, 256
        %v386 = vpop.permute.xlu0 %385
        %s388 = sor.u32 256, 8
        %389 = vbcast.lane.b32.xlu0 %v383, %s388
        %v390 = vpop.permute.xlu0 %389
        %v391 = vlaneseq
        %v392 = vshrl.u32 %v391, 7
        %v393 = vsub.s32 4, %v392
        %v394 = vrot.slane %v343, %v393
        %396 = vbcast.lane.b32.xlu0 %v394, 256
        %v397 = vpop.permute.xlu0 %396
        %s399 = sor.u32 256, 8
        %400 = vbcast.lane.b32.xlu0 %v394, %s399
        %v401 = vpop.permute.xlu0 %400
        %v402 = vlaneseq
        %v403 = vshrl.u32 %v402, 7
        %v404 = vsub.s32 5, %v403
        %v405 = vrot.slane %v343, %v404
        %407 = vbcast.lane.b32.xlu0 %v405, 256
        %v408 = vpop.permute.xlu0 %407
        %s410 = sor.u32 256, 8
        %411 = vbcast.lane.b32.xlu0 %v405, %s410
        %v412 = vpop.permute.xlu0 %411
        %v413 = vlaneseq
        %v414 = vshrl.u32 %v413, 7
        %v415 = vsub.s32 6, %v414
        %v416 = vrot.slane %v343, %v415
        %418 = vbcast.lane.b32.xlu0 %v416, 256
        %v419 = vpop.permute.xlu0 %418
        %s421 = sor.u32 256, 8
        %422 = vbcast.lane.b32.xlu0 %v416, %s421
        %v423 = vpop.permute.xlu0 %422
        %v424 = vlaneseq
        %v425 = vshrl.u32 %v424, 7
        %v426 = vsub.s32 7, %v425
        %v427 = vrot.slane %v343, %v426
        %429 = vbcast.lane.b32.xlu0 %v427, 256
        %v430 = vpop.permute.xlu0 %429
        %s432 = sor.u32 256, 8
        %433 = vbcast.lane.b32.xlu0 %v427, %s432
        %v434 = vpop.permute.xlu0 %433
        %v435 = vlaneseq
        %v436 = vshrl.u32 %v435, 7
        %v437 = vsub.s32 0, %v436
        %v438 = vrot.slane %v344, %v437
        %440 = vbcast.lane.b32.xlu0 %v438, 256
        %v441 = vpop.permute.xlu0 %440
        %s443 = sor.u32 256, 8
        %444 = vbcast.lane.b32.xlu0 %v438, %s443
        %v445 = vpop.permute.xlu0 %444
        %v446 = vlaneseq
        %v447 = vshrl.u32 %v446, 7
        %v448 = vsub.s32 1, %v447
        %v449 = vrot.slane %v344, %v448
        %451 = vbcast.lane.b32.xlu0 %v449, 256
        %v452 = vpop.permute.xlu0 %451
        %s454 = sor.u32 256, 8
        %455 = vbcast.lane.b32.xlu0 %v449, %s454
        %v456 = vpop.permute.xlu0 %455
        %v457 = vlaneseq
        %v458 = vshrl.u32 %v457, 7
        %v459 = vsub.s32 2, %v458
        %v460 = vrot.slane %v344, %v459
        %462 = vbcast.lane.b32.xlu0 %v460, 256
        %v463 = vpop.permute.xlu0 %462
        %s465 = sor.u32 256, 8
        %466 = vbcast.lane.b32.xlu0 %v460, %s465
        %v467 = vpop.permute.xlu0 %466
        %v468 = vlaneseq
        %v469 = vshrl.u32 %v468, 7
        %v470 = vsub.s32 3, %v469
        %v471 = vrot.slane %v344, %v470
        %473 = vbcast.lane.b32.xlu0 %v471, 256
        %v474 = vpop.permute.xlu0 %473
        %s476 = sor.u32 256, 8
        %477 = vbcast.lane.b32.xlu0 %v471, %s476
        %v478 = vpop.permute.xlu0 %477
        %v479 = vlaneseq
        %v480 = vshrl.u32 %v479, 7
        %v481 = vsub.s32 4, %v480
        %v482 = vrot.slane %v344, %v481
        %484 = vbcast.lane.b32.xlu0 %v482, 256
        %v485 = vpop.permute.xlu0 %484
        %s487 = sor.u32 256, 8
        %488 = vbcast.lane.b32.xlu0 %v482, %s487
        %v489 = vpop.permute.xlu0 %488
        %v490 = vlaneseq
        %v491 = vshrl.u32 %v490, 7
        %v492 = vsub.s32 5, %v491
        %v493 = vrot.slane %v344, %v492
        %495 = vbcast.lane.b32.xlu0 %v493, 256
        %v496 = vpop.permute.xlu0 %495
        %s498 = sor.u32 256, 8
        %499 = vbcast.lane.b32.xlu0 %v493, %s498
        %v500 = vpop.permute.xlu0 %499
        %v501 = vlaneseq
        %v502 = vshrl.u32 %v501, 7
        %v503 = vsub.s32 6, %v502
        %v504 = vrot.slane %v344, %v503
        %506 = vbcast.lane.b32.xlu0 %v504, 256
        %v507 = vpop.permute.xlu0 %506
        %s509 = sor.u32 256, 8
        %510 = vbcast.lane.b32.xlu0 %v504, %s509
        %v511 = vpop.permute.xlu0 %510
        %v512 = vlaneseq
        %v513 = vshrl.u32 %v512, 7
        %v514 = vsub.s32 7, %v513
        %v515 = vrot.slane %v344, %v514
        %517 = vbcast.lane.b32.xlu0 %v515, 256
        %v518 = vpop.permute.xlu0 %517
        %s520 = sor.u32 256, 8
        %521 = vbcast.lane.b32.xlu0 %v515, %s520
        %v522 = vpop.permute.xlu0 %521
        %vm523 = vcmp.eq.s32.totalorder %v353, %v346
        %vm524 = vcmp.eq.s32.totalorder %v357, %v346
        %vm525 = vcmp.eq.s32.totalorder %v364, %v346
        %vm526 = vcmp.eq.s32.totalorder %v368, %v346
        %vm527 = vcmp.eq.s32.totalorder %v375, %v346
        %vm528 = vcmp.eq.s32.totalorder %v379, %v346
        %vm529 = vcmp.eq.s32.totalorder %v386, %v346
        %vm530 = vcmp.eq.s32.totalorder %v390, %v346
        %vm531 = vcmp.eq.s32.totalorder %v397, %v346
        %vm532 = vcmp.eq.s32.totalorder %v401, %v346
        %vm533 = vcmp.eq.s32.totalorder %v408, %v346
        %vm534 = vcmp.eq.s32.totalorder %v412, %v346
        %vm535 = vcmp.eq.s32.totalorder %v419, %v346
        %vm536 = vcmp.eq.s32.totalorder %v423, %v346
        %vm537 = vcmp.eq.s32.totalorder %v430, %v346
        %vm538 = vcmp.eq.s32.totalorder %v434, %v346
        %vm539 = vcmp.eq.s32.totalorder %v441, %v346
        %vm540 = vcmp.eq.s32.totalorder %v445, %v346
        %vm541 = vcmp.eq.s32.totalorder %v452, %v346
        %vm542 = vcmp.eq.s32.totalorder %v456, %v346
        %vm543 = vcmp.eq.s32.totalorder %v463, %v346
        %vm544 = vcmp.eq.s32.totalorder %v467, %v346
        %vm545 = vcmp.eq.s32.totalorder %v474, %v346
        %vm546 = vcmp.eq.s32.totalorder %v478, %v346
        %vm547 = vcmp.eq.s32.totalorder %v485, %v346
        %vm548 = vcmp.eq.s32.totalorder %v489, %v346
        %vm549 = vcmp.eq.s32.totalorder %v496, %v346
        %vm550 = vcmp.eq.s32.totalorder %v500, %v346
        %vm551 = vcmp.eq.s32.totalorder %v507, %v346
        %vm552 = vcmp.eq.s32.totalorder %v511, %v346
        %vm553 = vcmp.eq.s32.totalorder %v518, %v346
        %vm554 = vcmp.eq.s32.totalorder %v522, %v346
        %v555 = vsel %vm523, 1.0, 0.0
        %v556 = vsel %vm524, 1.0, 0.0
        %v557 = vsel %vm525, 1.0, 0.0
        %v558 = vsel %vm526, 1.0, 0.0
        %v559 = vsel %vm527, 1.0, 0.0
        %v560 = vsel %vm528, 1.0, 0.0
        %v561 = vsel %vm529, 1.0, 0.0
        %v562 = vsel %vm530, 1.0, 0.0
        %v563 = vsel %vm531, 1.0, 0.0
        %v564 = vsel %vm532, 1.0, 0.0
        %v565 = vsel %vm533, 1.0, 0.0
        %v566 = vsel %vm534, 1.0, 0.0
        %v567 = vsel %vm535, 1.0, 0.0
        %v568 = vsel %vm536, 1.0, 0.0
        %v569 = vsel %vm537, 1.0, 0.0
        %v570 = vsel %vm538, 1.0, 0.0
        %v571 = vsel %vm539, 1.0, 0.0
        %v572 = vsel %vm540, 1.0, 0.0
        %v573 = vsel %vm541, 1.0, 0.0
        %v574 = vsel %vm542, 1.0, 0.0
        %v575 = vsel %vm543, 1.0, 0.0
        %v576 = vsel %vm544, 1.0, 0.0
        %v577 = vsel %vm545, 1.0, 0.0
        %v578 = vsel %vm546, 1.0, 0.0
        %v579 = vsel %vm547, 1.0, 0.0
        %v580 = vsel %vm548, 1.0, 0.0
        %v581 = vsel %vm549, 1.0, 0.0
        %v582 = vsel %vm550, 1.0, 0.0
        %v583 = vsel %vm551, 1.0, 0.0
        %v584 = vsel %vm552, 1.0, 0.0
        %v585 = vsel %vm553, 1.0, 0.0
        %v586 = vsel %vm554, 1.0, 0.0
        %v587 = vpack.c.bf16 %v556, %v555
        %v588 = vpack.c.bf16 %v558, %v557
        %v589 = vpack.c.bf16 %v560, %v559
        %v590 = vpack.c.bf16 %v562, %v561
        %v591 = vpack.c.bf16 %v564, %v563
        %v592 = vpack.c.bf16 %v566, %v565
        %v593 = vpack.c.bf16 %v568, %v567
        %v594 = vpack.c.bf16 %v570, %v569
        %v595 = vpack.c.bf16 %v572, %v571
        %v596 = vpack.c.bf16 %v574, %v573
        %v597 = vpack.c.bf16 %v576, %v575
        %v598 = vpack.c.bf16 %v578, %v577
        %v599 = vpack.c.bf16 %v580, %v579
        %v600 = vpack.c.bf16 %v582, %v581
        %v601 = vpack.c.bf16 %v584, %v583
        %v602 = vpack.c.bf16 %v586, %v585
        %v603 = vld [vmem:[%s1] sm:$0xf]
        %v604 = vld [vmem:[%s1 + $0x4] sm:$0xf]
        %v605 = vld [vmem:[%s1 + $0x8] sm:$0xf]
        %v606 = vld [vmem:[%s1 + $0xc] sm:$0xf]
        %v607 = vld [vmem:[%s1 + $0x10] sm:$0xf]
        %v608 = vld [vmem:[%s1 + $0x14] sm:$0xf]
        %v609 = vld [vmem:[%s1 + $0x18] sm:$0xf]
        %v610 = vld [vmem:[%s1 + $0x1c] sm:$0xf]
        %v611 = vld [vmem:[%s1 + $0x20] sm:$0xf]
        %v612 = vld [vmem:[%s1 + $0x24] sm:$0xf]
        %v613 = vld [vmem:[%s1 + $0x28] sm:$0xf]
        %v614 = vld [vmem:[%s1 + $0x2c] sm:$0xf]
        %v615 = vld [vmem:[%s1 + $0x30] sm:$0xf]
        %v616 = vld [vmem:[%s1 + $0x34] sm:$0xf]
        %v617 = vld [vmem:[%s1 + $0x38] sm:$0xf]
        %v618 = vld [vmem:[%s1 + $0x3c] sm:$0xf]
        %v635 = vcombine.high %v587, %v587
        %v637 = vunpack.c.l.s4 1966171168
        %v638 = vunpack.c.0.s8 %v637
        %v639 = vlaneseq
        %v640 = vshrl.u32 %v639, 7
        %v641 = vsub.s32 %v638, %v640
        %v642 = vrot.slane %v587, %v641
        %v644 = vunpack.c.l.s4 1966171168
        %v645 = vunpack.c.0.s8 %v644
        %v646 = vlaneseq
        %v647 = vshrl.u32 %v646, 7
        %v648 = vsub.s32 %v645, %v647
        %v649 = vrot.slane %v635, %v648
        %v650 = vcombine.high %v642, %v642
        %v652 = vunpack.c.l.s4 1966171168
        %v653 = vunpack.c.0.s8 %v652
        %v654 = vlaneseq
        %v655 = vshrl.u32 %v654, 7
        %v656 = vsub.s32 %v653, %v655
        %v657 = vrot.slane %v642, %v656
        %v659 = vunpack.c.l.s4 1966171168
        %v660 = vunpack.c.0.s8 %v659
        %v661 = vlaneseq
        %v662 = vshrl.u32 %v661, 7
        %v663 = vsub.s32 %v660, %v662
        %v664 = vrot.slane %v649, %v663
        %v666 = vunpack.c.l.s4 1966171168
        %v667 = vunpack.c.0.s8 %v666
        %v668 = vlaneseq
        %v669 = vshrl.u32 %v668, 7
        %v670 = vsub.s32 %v667, %v669
        %v671 = vrot.slane %v650, %v670
        %v672 = vcombine.high %v657, %v657
        %v673 = vcombine.high %v671, %v671
        %v674 = vcombine.high %v588, %v588
        %v676 = vunpack.c.l.s4 1966171168
        %v677 = vunpack.c.0.s8 %v676
        %v678 = vlaneseq
        %v679 = vshrl.u32 %v678, 7
        %v680 = vsub.s32 %v677, %v679
        %v681 = vrot.slane %v588, %v680
        %v683 = vunpack.c.l.s4 1966171168
        %v684 = vunpack.c.0.s8 %v683
        %v685 = vlaneseq
        %v686 = vshrl.u32 %v685, 7
        %v687 = vsub.s32 %v684, %v686
        %v688 = vrot.slane %v674, %v687
        %v689 = vcombine.high %v681, %v681
        %v691 = vunpack.c.l.s4 1966171168
        %v692 = vunpack.c.0.s8 %v691
        %v693 = vlaneseq
        %v694 = vshrl.u32 %v693, 7
        %v695 = vsub.s32 %v692, %v694
        %v696 = vrot.slane %v681, %v695
        %v698 = vunpack.c.l.s4 1966171168
        %v699 = vunpack.c.0.s8 %v698
        %v700 = vlaneseq
        %v701 = vshrl.u32 %v700, 7
        %v702 = vsub.s32 %v699, %v701
        %v703 = vrot.slane %v688, %v702
        %v705 = vunpack.c.l.s4 1966171168
        %v706 = vunpack.c.0.s8 %v705
        %v707 = vlaneseq
        %v708 = vshrl.u32 %v707, 7
        %v709 = vsub.s32 %v706, %v708
        %v710 = vrot.slane %v689, %v709
        %v711 = vcombine.high %v696, %v696
        %v712 = vcombine.high %v710, %v710
        %v713 = vcombine.high %v589, %v589
        %v715 = vunpack.c.l.s4 1966171168
        %v716 = vunpack.c.0.s8 %v715
        %v717 = vlaneseq
        %v718 = vshrl.u32 %v717, 7
        %v719 = vsub.s32 %v716, %v718
        %v720 = vrot.slane %v589, %v719
        %v722 = vunpack.c.l.s4 1966171168
        %v723 = vunpack.c.0.s8 %v722
        %v724 = vlaneseq
        %v725 = vshrl.u32 %v724, 7
        %v726 = vsub.s32 %v723, %v725
        %v727 = vrot.slane %v713, %v726
        %v728 = vcombine.high %v720, %v720
        %v730 = vunpack.c.l.s4 1966171168
        %v731 = vunpack.c.0.s8 %v730
        %v732 = vlaneseq
        %v733 = vshrl.u32 %v732, 7
        %v734 = vsub.s32 %v731, %v733
        %v735 = vrot.slane %v720, %v734
        %v737 = vunpack.c.l.s4 1966171168
        %v738 = vunpack.c.0.s8 %v737
        %v739 = vlaneseq
        %v740 = vshrl.u32 %v739, 7
        %v741 = vsub.s32 %v738, %v740
        %v742 = vrot.slane %v727, %v741
        %v744 = vunpack.c.l.s4 1966171168
        %v745 = vunpack.c.0.s8 %v744
        %v746 = vlaneseq
        %v747 = vshrl.u32 %v746, 7
        %v748 = vsub.s32 %v745, %v747
        %v749 = vrot.slane %v728, %v748
        %v750 = vcombine.high %v735, %v735
        %v751 = vcombine.high %v749, %v749
        %v752 = vcombine.high %v590, %v590
        %v754 = vunpack.c.l.s4 1966171168
        %v755 = vunpack.c.0.s8 %v754
        %v756 = vlaneseq
        %v757 = vshrl.u32 %v756, 7
        %v758 = vsub.s32 %v755, %v757
        %v759 = vrot.slane %v590, %v758
        %v761 = vunpack.c.l.s4 1966171168
        %v762 = vunpack.c.0.s8 %v761
        %v763 = vlaneseq
        %v764 = vshrl.u32 %v763, 7
        %v765 = vsub.s32 %v762, %v764
        %v766 = vrot.slane %v752, %v765
        %v767 = vcombine.high %v759, %v759
        %v769 = vunpack.c.l.s4 1966171168
        %v770 = vunpack.c.0.s8 %v769
        %v771 = vlaneseq
        %v772 = vshrl.u32 %v771, 7
        %v773 = vsub.s32 %v770, %v772
        %v774 = vrot.slane %v759, %v773
        %v776 = vunpack.c.l.s4 1966171168
        %v777 = vunpack.c.0.s8 %v776
        %v778 = vlaneseq
        %v779 = vshrl.u32 %v778, 7
        %v780 = vsub.s32 %v777, %v779
        %v781 = vrot.slane %v766, %v780
        %v783 = vunpack.c.l.s4 1966171168
        %v784 = vunpack.c.0.s8 %v783
        %v785 = vlaneseq
        %v786 = vshrl.u32 %v785, 7
        %v787 = vsub.s32 %v784, %v786
        %v788 = vrot.slane %v767, %v787
        %v789 = vcombine.high %v774, %v774
        %v790 = vcombine.high %v788, %v788
        %v791 = vcombine.high %v591, %v591
        %v793 = vunpack.c.l.s4 1966171168
        %v794 = vunpack.c.0.s8 %v793
        %v795 = vlaneseq
        %v796 = vshrl.u32 %v795, 7
        %v797 = vsub.s32 %v794, %v796
        %v798 = vrot.slane %v591, %v797
        %v800 = vunpack.c.l.s4 1966171168
        %v801 = vunpack.c.0.s8 %v800
        %v802 = vlaneseq
        %v803 = vshrl.u32 %v802, 7
        %v804 = vsub.s32 %v801, %v803
        %v805 = vrot.slane %v791, %v804
        %v806 = vcombine.high %v798, %v798
        %v808 = vunpack.c.l.s4 1966171168
        %v809 = vunpack.c.0.s8 %v808
        %v810 = vlaneseq
        %v811 = vshrl.u32 %v810, 7
        %v812 = vsub.s32 %v809, %v811
        %v813 = vrot.slane %v798, %v812
        %v815 = vunpack.c.l.s4 1966171168
        %v816 = vunpack.c.0.s8 %v815
        %v817 = vlaneseq
        %v818 = vshrl.u32 %v817, 7
        %v819 = vsub.s32 %v816, %v818
        %v820 = vrot.slane %v805, %v819
        %v822 = vunpack.c.l.s4 1966171168
        %v823 = vunpack.c.0.s8 %v822
        %v824 = vlaneseq
        %v825 = vshrl.u32 %v824, 7
        %v826 = vsub.s32 %v823, %v825
        %v827 = vrot.slane %v806, %v826
        %v828 = vcombine.high %v813, %v813
        %v829 = vcombine.high %v827, %v827
        %v830 = vcombine.high %v592, %v592
        %v832 = vunpack.c.l.s4 1966171168
        %v833 = vunpack.c.0.s8 %v832
        %v834 = vlaneseq
        %v835 = vshrl.u32 %v834, 7
        %v836 = vsub.s32 %v833, %v835
        %v837 = vrot.slane %v592, %v836
        %v839 = vunpack.c.l.s4 1966171168
        %v840 = vunpack.c.0.s8 %v839
        %v841 = vlaneseq
        %v842 = vshrl.u32 %v841, 7
        %v843 = vsub.s32 %v840, %v842
        %v844 = vrot.slane %v830, %v843
        %v845 = vcombine.high %v837, %v837
        %v847 = vunpack.c.l.s4 1966171168
        %v848 = vunpack.c.0.s8 %v847
        %v849 = vlaneseq
        %v850 = vshrl.u32 %v849, 7
        %v851 = vsub.s32 %v848, %v850
        %v852 = vrot.slane %v837, %v851
        %v854 = vunpack.c.l.s4 1966171168
        %v855 = vunpack.c.0.s8 %v854
        %v856 = vlaneseq
        %v857 = vshrl.u32 %v856, 7
        %v858 = vsub.s32 %v855, %v857
        %v859 = vrot.slane %v844, %v858
        %v861 = vunpack.c.l.s4 1966171168
        %v862 = vunpack.c.0.s8 %v861
        %v863 = vlaneseq
        %v864 = vshrl.u32 %v863, 7
        %v865 = vsub.s32 %v862, %v864
        %v866 = vrot.slane %v845, %v865
        %v867 = vcombine.high %v852, %v852
        %v868 = vcombine.high %v866, %v866
        %v869 = vcombine.high %v593, %v593
        %v871 = vunpack.c.l.s4 1966171168
        %v872 = vunpack.c.0.s8 %v871
        %v873 = vlaneseq
        %v874 = vshrl.u32 %v873, 7
        %v875 = vsub.s32 %v872, %v874
        %v876 = vrot.slane %v593, %v875
        %v878 = vunpack.c.l.s4 1966171168
        %v879 = vunpack.c.0.s8 %v878
        %v880 = vlaneseq
        %v881 = vshrl.u32 %v880, 7
        %v882 = vsub.s32 %v879, %v881
        %v883 = vrot.slane %v869, %v882
        %v884 = vcombine.high %v876, %v876
        %v886 = vunpack.c.l.s4 1966171168
        %v887 = vunpack.c.0.s8 %v886
        %v888 = vlaneseq
        %v889 = vshrl.u32 %v888, 7
        %v890 = vsub.s32 %v887, %v889
        %v891 = vrot.slane %v876, %v890
        %v893 = vunpack.c.l.s4 1966171168
        %v894 = vunpack.c.0.s8 %v893
        %v895 = vlaneseq
        %v896 = vshrl.u32 %v895, 7
        %v897 = vsub.s32 %v894, %v896
        %v898 = vrot.slane %v883, %v897
        %v900 = vunpack.c.l.s4 1966171168
        %v901 = vunpack.c.0.s8 %v900
        %v902 = vlaneseq
        %v903 = vshrl.u32 %v902, 7
        %v904 = vsub.s32 %v901, %v903
        %v905 = vrot.slane %v884, %v904
        %v906 = vcombine.high %v891, %v891
        %v907 = vcombine.high %v905, %v905
        %v908 = vcombine.high %v594, %v594
        %v910 = vunpack.c.l.s4 1966171168
        %v911 = vunpack.c.0.s8 %v910
        %v912 = vlaneseq
        %v913 = vshrl.u32 %v912, 7
        %v914 = vsub.s32 %v911, %v913
        %v915 = vrot.slane %v594, %v914
        %v917 = vunpack.c.l.s4 1966171168
        %v918 = vunpack.c.0.s8 %v917
        %v919 = vlaneseq
        %v920 = vshrl.u32 %v919, 7
        %v921 = vsub.s32 %v918, %v920
        %v922 = vrot.slane %v908, %v921
        %v923 = vcombine.high %v915, %v915
        %v925 = vunpack.c.l.s4 1966171168
        %v926 = vunpack.c.0.s8 %v925
        %v927 = vlaneseq
        %v928 = vshrl.u32 %v927, 7
        %v929 = vsub.s32 %v926, %v928
        %v930 = vrot.slane %v915, %v929
        %v932 = vunpack.c.l.s4 1966171168
        %v933 = vunpack.c.0.s8 %v932
        %v934 = vlaneseq
        %v935 = vshrl.u32 %v934, 7
        %v936 = vsub.s32 %v933, %v935
        %v937 = vrot.slane %v922, %v936
        %v939 = vunpack.c.l.s4 1966171168
        %v940 = vunpack.c.0.s8 %v939
        %v941 = vlaneseq
        %v942 = vshrl.u32 %v941, 7
        %v943 = vsub.s32 %v940, %v942
        %v944 = vrot.slane %v923, %v943
        %v945 = vcombine.high %v930, %v930
        %v946 = vcombine.high %v944, %v944
        %v947 = vcombine.high %v595, %v595
        %v949 = vunpack.c.l.s4 1966171168
        %v950 = vunpack.c.0.s8 %v949
        %v951 = vlaneseq
        %v952 = vshrl.u32 %v951, 7
        %v953 = vsub.s32 %v950, %v952
        %v954 = vrot.slane %v595, %v953
        %v956 = vunpack.c.l.s4 1966171168
        %v957 = vunpack.c.0.s8 %v956
        %v958 = vlaneseq
        %v959 = vshrl.u32 %v958, 7
        %v960 = vsub.s32 %v957, %v959
        %v961 = vrot.slane %v947, %v960
        %v962 = vcombine.high %v954, %v954
        %v964 = vunpack.c.l.s4 1966171168
        %v965 = vunpack.c.0.s8 %v964
        %v966 = vlaneseq
        %v967 = vshrl.u32 %v966, 7
        %v968 = vsub.s32 %v965, %v967
        %v969 = vrot.slane %v954, %v968
        %v971 = vunpack.c.l.s4 1966171168
        %v972 = vunpack.c.0.s8 %v971
        %v973 = vlaneseq
        %v974 = vshrl.u32 %v973, 7
        %v975 = vsub.s32 %v972, %v974
        %v976 = vrot.slane %v961, %v975
        %v978 = vunpack.c.l.s4 1966171168
        %v979 = vunpack.c.0.s8 %v978
        %v980 = vlaneseq
        %v981 = vshrl.u32 %v980, 7
        %v982 = vsub.s32 %v979, %v981
        %v983 = vrot.slane %v962, %v982
        %v984 = vcombine.high %v969, %v969
        %v985 = vcombine.high %v983, %v983
        %v986 = vcombine.high %v596, %v596
        %v988 = vunpack.c.l.s4 1966171168
        %v989 = vunpack.c.0.s8 %v988
        %v990 = vlaneseq
        %v991 = vshrl.u32 %v990, 7
        %v992 = vsub.s32 %v989, %v991
        %v993 = vrot.slane %v596, %v992
        %v995 = vunpack.c.l.s4 1966171168
        %v996 = vunpack.c.0.s8 %v995
        %v997 = vlaneseq
        %v998 = vshrl.u32 %v997, 7
        %v999 = vsub.s32 %v996, %v998
        %v1000 = vrot.slane %v986, %v999
        %v1001 = vcombine.high %v993, %v993
        %v1003 = vunpack.c.l.s4 1966171168
        %v1004 = vunpack.c.0.s8 %v1003
        %v1005 = vlaneseq
        %v1006 = vshrl.u32 %v1005, 7
        %v1007 = vsub.s32 %v1004, %v1006
        %v1008 = vrot.slane %v993, %v1007
        %v1010 = vunpack.c.l.s4 1966171168
        %v1011 = vunpack.c.0.s8 %v1010
        %v1012 = vlaneseq
        %v1013 = vshrl.u32 %v1012, 7
        %v1014 = vsub.s32 %v1011, %v1013
        %v1015 = vrot.slane %v1000, %v1014
        %v1017 = vunpack.c.l.s4 1966171168
        %v1018 = vunpack.c.0.s8 %v1017
        %v1019 = vlaneseq
        %v1020 = vshrl.u32 %v1019, 7
        %v1021 = vsub.s32 %v1018, %v1020
        %v1022 = vrot.slane %v1001, %v1021
        %v1023 = vcombine.high %v1008, %v1008
        %v1024 = vcombine.high %v1022, %v1022
        %v1025 = vcombine.high %v597, %v597
        %v1027 = vunpack.c.l.s4 1966171168
        %v1028 = vunpack.c.0.s8 %v1027
        %v1029 = vlaneseq
        %v1030 = vshrl.u32 %v1029, 7
        %v1031 = vsub.s32 %v1028, %v1030
        %v1032 = vrot.slane %v597, %v1031
        %v1034 = vunpack.c.l.s4 1966171168
        %v1035 = vunpack.c.0.s8 %v1034
        %v1036 = vlaneseq
        %v1037 = vshrl.u32 %v1036, 7
        %v1038 = vsub.s32 %v1035, %v1037
        %v1039 = vrot.slane %v1025, %v1038
        %v1040 = vcombine.high %v1032, %v1032
        %v1042 = vunpack.c.l.s4 1966171168
        %v1043 = vunpack.c.0.s8 %v1042
        %v1044 = vlaneseq
        %v1045 = vshrl.u32 %v1044, 7
        %v1046 = vsub.s32 %v1043, %v1045
        %v1047 = vrot.slane %v1032, %v1046
        %v1049 = vunpack.c.l.s4 1966171168
        %v1050 = vunpack.c.0.s8 %v1049
        %v1051 = vlaneseq
        %v1052 = vshrl.u32 %v1051, 7
        %v1053 = vsub.s32 %v1050, %v1052
        %v1054 = vrot.slane %v1039, %v1053
        %v1056 = vunpack.c.l.s4 1966171168
        %v1057 = vunpack.c.0.s8 %v1056
        %v1058 = vlaneseq
        %v1059 = vshrl.u32 %v1058, 7
        %v1060 = vsub.s32 %v1057, %v1059
        %v1061 = vrot.slane %v1040, %v1060
        %v1062 = vcombine.high %v1047, %v1047
        %v1063 = vcombine.high %v1061, %v1061
        %v1064 = vcombine.high %v598, %v598
        %v1066 = vunpack.c.l.s4 1966171168
        %v1067 = vunpack.c.0.s8 %v1066
        %v1068 = vlaneseq
        %v1069 = vshrl.u32 %v1068, 7
        %v1070 = vsub.s32 %v1067, %v1069
        %v1071 = vrot.slane %v598, %v1070
        %v1073 = vunpack.c.l.s4 1966171168
        %v1074 = vunpack.c.0.s8 %v1073
        %v1075 = vlaneseq
        %v1076 = vshrl.u32 %v1075, 7
        %v1077 = vsub.s32 %v1074, %v1076
        %v1078 = vrot.slane %v1064, %v1077
        %v1079 = vcombine.high %v1071, %v1071
        %v1081 = vunpack.c.l.s4 1966171168
        %v1082 = vunpack.c.0.s8 %v1081
        %v1083 = vlaneseq
        %v1084 = vshrl.u32 %v1083, 7
        %v1085 = vsub.s32 %v1082, %v1084
        %v1086 = vrot.slane %v1071, %v1085
        %v1088 = vunpack.c.l.s4 1966171168
        %v1089 = vunpack.c.0.s8 %v1088
        %v1090 = vlaneseq
        %v1091 = vshrl.u32 %v1090, 7
        %v1092 = vsub.s32 %v1089, %v1091
        %v1093 = vrot.slane %v1078, %v1092
        %v1095 = vunpack.c.l.s4 1966171168
        %v1096 = vunpack.c.0.s8 %v1095
        %v1097 = vlaneseq
        %v1098 = vshrl.u32 %v1097, 7
        %v1099 = vsub.s32 %v1096, %v1098
        %v1100 = vrot.slane %v1079, %v1099
        %v1101 = vcombine.high %v1086, %v1086
        %v1102 = vcombine.high %v1100, %v1100
        %v1103 = vcombine.high %v599, %v599
        %v1105 = vunpack.c.l.s4 1966171168
        %v1106 = vunpack.c.0.s8 %v1105
        %v1107 = vlaneseq
        %v1108 = vshrl.u32 %v1107, 7
        %v1109 = vsub.s32 %v1106, %v1108
        %v1110 = vrot.slane %v599, %v1109
        %v1112 = vunpack.c.l.s4 1966171168
        %v1113 = vunpack.c.0.s8 %v1112
        %v1114 = vlaneseq
        %v1115 = vshrl.u32 %v1114, 7
        %v1116 = vsub.s32 %v1113, %v1115
        %v1117 = vrot.slane %v1103, %v1116
        %v1118 = vcombine.high %v1110, %v1110
        %v1120 = vunpack.c.l.s4 1966171168
        %v1121 = vunpack.c.0.s8 %v1120
        %v1122 = vlaneseq
        %v1123 = vshrl.u32 %v1122, 7
        %v1124 = vsub.s32 %v1121, %v1123
        %v1125 = vrot.slane %v1110, %v1124
        %v1127 = vunpack.c.l.s4 1966171168
        %v1128 = vunpack.c.0.s8 %v1127
        %v1129 = vlaneseq
        %v1130 = vshrl.u32 %v1129, 7
        %v1131 = vsub.s32 %v1128, %v1130
        %v1132 = vrot.slane %v1117, %v1131
        %v1134 = vunpack.c.l.s4 1966171168
        %v1135 = vunpack.c.0.s8 %v1134
        %v1136 = vlaneseq
        %v1137 = vshrl.u32 %v1136, 7
        %v1138 = vsub.s32 %v1135, %v1137
        %v1139 = vrot.slane %v1118, %v1138
        %v1140 = vcombine.high %v1125, %v1125
        %v1141 = vcombine.high %v1139, %v1139
        %v1142 = vcombine.high %v600, %v600
        %v1144 = vunpack.c.l.s4 1966171168
        %v1145 = vunpack.c.0.s8 %v1144
        %v1146 = vlaneseq
        %v1147 = vshrl.u32 %v1146, 7
        %v1148 = vsub.s32 %v1145, %v1147
        %v1149 = vrot.slane %v600, %v1148
        %v1151 = vunpack.c.l.s4 1966171168
        %v1152 = vunpack.c.0.s8 %v1151
        %v1153 = vlaneseq
        %v1154 = vshrl.u32 %v1153, 7
        %v1155 = vsub.s32 %v1152, %v1154
        %v1156 = vrot.slane %v1142, %v1155
        %v1157 = vcombine.high %v1149, %v1149
        %v1159 = vunpack.c.l.s4 1966171168
        %v1160 = vunpack.c.0.s8 %v1159
        %v1161 = vlaneseq
        %v1162 = vshrl.u32 %v1161, 7
        %v1163 = vsub.s32 %v1160, %v1162
        %v1164 = vrot.slane %v1149, %v1163
        %v1166 = vunpack.c.l.s4 1966171168
        %v1167 = vunpack.c.0.s8 %v1166
        %v1168 = vlaneseq
        %v1169 = vshrl.u32 %v1168, 7
        %v1170 = vsub.s32 %v1167, %v1169
        %v1171 = vrot.slane %v1156, %v1170
        %v1173 = vunpack.c.l.s4 1966171168
        %v1174 = vunpack.c.0.s8 %v1173
        %v1175 = vlaneseq
        %v1176 = vshrl.u32 %v1175, 7
        %v1177 = vsub.s32 %v1174, %v1176
        %v1178 = vrot.slane %v1157, %v1177
        %v1179 = vcombine.high %v1164, %v1164
        %v1180 = vcombine.high %v1178, %v1178
        %v1181 = vcombine.high %v601, %v601
        %v1183 = vunpack.c.l.s4 1966171168
        %v1184 = vunpack.c.0.s8 %v1183
        %v1185 = vlaneseq
        %v1186 = vshrl.u32 %v1185, 7
        %v1187 = vsub.s32 %v1184, %v1186
        %v1188 = vrot.slane %v601, %v1187
        %v1190 = vunpack.c.l.s4 1966171168
        %v1191 = vunpack.c.0.s8 %v1190
        %v1192 = vlaneseq
        %v1193 = vshrl.u32 %v1192, 7
        %v1194 = vsub.s32 %v1191, %v1193
        %v1195 = vrot.slane %v1181, %v1194
        %v1196 = vcombine.high %v1188, %v1188
        %v1198 = vunpack.c.l.s4 1966171168
        %v1199 = vunpack.c.0.s8 %v1198
        %v1200 = vlaneseq
        %v1201 = vshrl.u32 %v1200, 7
        %v1202 = vsub.s32 %v1199, %v1201
        %v1203 = vrot.slane %v1188, %v1202
        %v1205 = vunpack.c.l.s4 1966171168
        %v1206 = vunpack.c.0.s8 %v1205
        %v1207 = vlaneseq
        %v1208 = vshrl.u32 %v1207, 7
        %v1209 = vsub.s32 %v1206, %v1208
        %v1210 = vrot.slane %v1195, %v1209
        %v1212 = vunpack.c.l.s4 1966171168
        %v1213 = vunpack.c.0.s8 %v1212
        %v1214 = vlaneseq
        %v1215 = vshrl.u32 %v1214, 7
        %v1216 = vsub.s32 %v1213, %v1215
        %v1217 = vrot.slane %v1196, %v1216
        %v1218 = vcombine.high %v1203, %v1203
        %v1219 = vcombine.high %v1217, %v1217
        %v1220 = vcombine.high %v602, %v602
        %v1222 = vunpack.c.l.s4 1966171168
        %v1223 = vunpack.c.0.s8 %v1222
        %v1224 = vlaneseq
        %v1225 = vshrl.u32 %v1224, 7
        %v1226 = vsub.s32 %v1223, %v1225
        %v1227 = vrot.slane %v602, %v1226
        %v1229 = vunpack.c.l.s4 1966171168
        %v1230 = vunpack.c.0.s8 %v1229
        %v1231 = vlaneseq
        %v1232 = vshrl.u32 %v1231, 7
        %v1233 = vsub.s32 %v1230, %v1232
        %v1234 = vrot.slane %v1220, %v1233
        %v1235 = vcombine.high %v1227, %v1227
        %v1237 = vunpack.c.l.s4 1966171168
        %v1238 = vunpack.c.0.s8 %v1237
        %v1239 = vlaneseq
        %v1240 = vshrl.u32 %v1239, 7
        %v1241 = vsub.s32 %v1238, %v1240
        %v1242 = vrot.slane %v1227, %v1241
        %v1244 = vunpack.c.l.s4 1966171168
        %v1245 = vunpack.c.0.s8 %v1244
        %v1246 = vlaneseq
        %v1247 = vshrl.u32 %v1246, 7
        %v1248 = vsub.s32 %v1245, %v1247
        %v1249 = vrot.slane %v1234, %v1248
        %v1251 = vunpack.c.l.s4 1966171168
        %v1252 = vunpack.c.0.s8 %v1251
        %v1253 = vlaneseq
        %v1254 = vshrl.u32 %v1253, 7
        %v1255 = vsub.s32 %v1252, %v1254
        %v1256 = vrot.slane %v1235, %v1255
        %v1257 = vcombine.high %v1242, %v1242
        %v1258 = vcombine.high %v1256, %v1256
        %v1259 = vcombine.low %v657, %v671
        %v1260 = vcombine.low %v672, %v673
        %v1261 = vcombine.low %v664, %v696
        %v1262 = vcombine.low %v710, %v711
        %v1264 = vunpack.c.l.s4 1966171168
        %v1265 = vunpack.c.0.s8 %v1264
        %v1266 = vlaneseq
        %v1267 = vshrl.u32 %v1266, 7
        %v1268 = vsub.s32 %v1265, %v1267
        %v1269 = vrot.slane %v1259, %v1268
        %v1271 = vunpack.c.l.s4 1966171168
        %v1272 = vunpack.c.0.s8 %v1271
        %v1273 = vlaneseq
        %v1274 = vshrl.u32 %v1273, 7
        %v1275 = vsub.s32 %v1272, %v1274
        %v1276 = vrot.slane %v1260, %v1275
        %v1278 = vunpack.c.l.s4 1966171168
        %v1279 = vunpack.c.0.s8 %v1278
        %v1280 = vlaneseq
        %v1281 = vshrl.u32 %v1280, 7
        %v1282 = vsub.s32 %v1279, %v1281
        %v1283 = vrot.slane %v1261, %v1282
        %v1285 = vunpack.c.l.s4 1966171168
        %v1286 = vunpack.c.0.s8 %v1285
        %v1287 = vlaneseq
        %v1288 = vshrl.u32 %v1287, 7
        %v1289 = vsub.s32 %v1286, %v1288
        %v1290 = vrot.slane %v1262, %v1289
        %v1291 = vcombine.low %v1269, %v1276
        %v1292 = vcombine.low %v1283, %v1290
        %v1294 = vunpack.c.l.s4 1966171168
        %v1295 = vunpack.c.0.s8 %v1294
        %v1296 = vlaneseq
        %v1297 = vshrl.u32 %v1296, 7
        %v1298 = vsub.s32 %v1295, %v1297
        %v1299 = vrot.slane %v1291, %v1298
        %v1301 = vunpack.c.l.s4 1966171168
        %v1302 = vunpack.c.0.s8 %v1301
        %v1303 = vlaneseq
        %v1304 = vshrl.u32 %v1303, 7
        %v1305 = vsub.s32 %v1302, %v1304
        %v1306 = vrot.slane %v1292, %v1305
        %v1307 = vcombine.low %v1299, %v1306
        %v1308 = vcombine.low %v712, %v703
        %v1309 = vcombine.low %v735, %v749
        %v1310 = vcombine.low %v750, %v751
        %v1311 = vcombine.low %v742, %v774
        %v1313 = vunpack.c.l.s4 1966171168
        %v1314 = vunpack.c.0.s8 %v1313
        %v1315 = vlaneseq
        %v1316 = vshrl.u32 %v1315, 7
        %v1317 = vsub.s32 %v1314, %v1316
        %v1318 = vrot.slane %v1308, %v1317
        %v1320 = vunpack.c.l.s4 1966171168
        %v1321 = vunpack.c.0.s8 %v1320
        %v1322 = vlaneseq
        %v1323 = vshrl.u32 %v1322, 7
        %v1324 = vsub.s32 %v1321, %v1323
        %v1325 = vrot.slane %v1309, %v1324
        %v1327 = vunpack.c.l.s4 1966171168
        %v1328 = vunpack.c.0.s8 %v1327
        %v1329 = vlaneseq
        %v1330 = vshrl.u32 %v1329, 7
        %v1331 = vsub.s32 %v1328, %v1330
        %v1332 = vrot.slane %v1310, %v1331
        %v1334 = vunpack.c.l.s4 1966171168
        %v1335 = vunpack.c.0.s8 %v1334
        %v1336 = vlaneseq
        %v1337 = vshrl.u32 %v1336, 7
        %v1338 = vsub.s32 %v1335, %v1337
        %v1339 = vrot.slane %v1311, %v1338
        %v1340 = vcombine.low %v1318, %v1325
        %v1341 = vcombine.low %v1332, %v1339
        %v1343 = vunpack.c.l.s4 1966171168
        %v1344 = vunpack.c.0.s8 %v1343
        %v1345 = vlaneseq
        %v1346 = vshrl.u32 %v1345, 7
        %v1347 = vsub.s32 %v1344, %v1346
        %v1348 = vrot.slane %v1340, %v1347
        %v1350 = vunpack.c.l.s4 1966171168
        %v1351 = vunpack.c.0.s8 %v1350
        %v1352 = vlaneseq
        %v1353 = vshrl.u32 %v1352, 7
        %v1354 = vsub.s32 %v1351, %v1353
        %v1355 = vrot.slane %v1341, %v1354
        %v1356 = vcombine.low %v1348, %v1355
        %v1357 = vcombine.low %v788, %v789
        %v1358 = vcombine.low %v790, %v781
        %v1359 = vcombine.low %v813, %v827
        %v1360 = vcombine.low %v828, %v829
        %v1362 = vunpack.c.l.s4 1966171168
        %v1363 = vunpack.c.0.s8 %v1362
        %v1364 = vlaneseq
        %v1365 = vshrl.u32 %v1364, 7
        %v1366 = vsub.s32 %v1363, %v1365
        %v1367 = vrot.slane %v1357, %v1366
        %v1369 = vunpack.c.l.s4 1966171168
        %v1370 = vunpack.c.0.s8 %v1369
        %v1371 = vlaneseq
        %v1372 = vshrl.u32 %v1371, 7
        %v1373 = vsub.s32 %v1370, %v1372
        %v1374 = vrot.slane %v1358, %v1373
        %v1376 = vunpack.c.l.s4 1966171168
        %v1377 = vunpack.c.0.s8 %v1376
        %v1378 = vlaneseq
        %v1379 = vshrl.u32 %v1378, 7
        %v1380 = vsub.s32 %v1377, %v1379
        %v1381 = vrot.slane %v1359, %v1380
        %v1383 = vunpack.c.l.s4 1966171168
        %v1384 = vunpack.c.0.s8 %v1383
        %v1385 = vlaneseq
        %v1386 = vshrl.u32 %v1385, 7
        %v1387 = vsub.s32 %v1384, %v1386
        %v1388 = vrot.slane %v1360, %v1387
        %v1389 = vcombine.low %v1367, %v1374
        %v1390 = vcombine.low %v1381, %v1388
        %v1392 = vunpack.c.l.s4 1966171168
        %v1393 = vunpack.c.0.s8 %v1392
        %v1394 = vlaneseq
        %v1395 = vshrl.u32 %v1394, 7
        %v1396 = vsub.s32 %v1393, %v1395
        %v1397 = vrot.slane %v1389, %v1396
        %v1399 = vunpack.c.l.s4 1966171168
        %v1400 = vunpack.c.0.s8 %v1399
        %v1401 = vlaneseq
        %v1402 = vshrl.u32 %v1401, 7
        %v1403 = vsub.s32 %v1400, %v1402
        %v1404 = vrot.slane %v1390, %v1403
        %v1405 = vcombine.low %v1397, %v1404
        %v1406 = vcombine.low %v820, %v852
        %v1407 = vcombine.low %v866, %v867
        %v1408 = vcombine.low %v868, %v859
        %v1409 = vcombine.low %v891, %v905
        %v1411 = vunpack.c.l.s4 1966171168
        %v1412 = vunpack.c.0.s8 %v1411
        %v1413 = vlaneseq
        %v1414 = vshrl.u32 %v1413, 7
        %v1415 = vsub.s32 %v1412, %v1414
        %v1416 = vrot.slane %v1406, %v1415
        %v1418 = vunpack.c.l.s4 1966171168
        %v1419 = vunpack.c.0.s8 %v1418
        %v1420 = vlaneseq
        %v1421 = vshrl.u32 %v1420, 7
        %v1422 = vsub.s32 %v1419, %v1421
        %v1423 = vrot.slane %v1407, %v1422
        %v1425 = vunpack.c.l.s4 1966171168
        %v1426 = vunpack.c.0.s8 %v1425
        %v1427 = vlaneseq
        %v1428 = vshrl.u32 %v1427, 7
        %v1429 = vsub.s32 %v1426, %v1428
        %v1430 = vrot.slane %v1408, %v1429
        %v1432 = vunpack.c.l.s4 1966171168
        %v1433 = vunpack.c.0.s8 %v1432
        %v1434 = vlaneseq
        %v1435 = vshrl.u32 %v1434, 7
        %v1436 = vsub.s32 %v1433, %v1435
        %v1437 = vrot.slane %v1409, %v1436
        %v1438 = vcombine.low %v1416, %v1423
        %v1439 = vcombine.low %v1430, %v1437
        %v1441 = vunpack.c.l.s4 1966171168
        %v1442 = vunpack.c.0.s8 %v1441
        %v1443 = vlaneseq
        %v1444 = vshrl.u32 %v1443, 7
        %v1445 = vsub.s32 %v1442, %v1444
        %v1446 = vrot.slane %v1438, %v1445
        %v1448 = vunpack.c.l.s4 1966171168
        %v1449 = vunpack.c.0.s8 %v1448
        %v1450 = vlaneseq
        %v1451 = vshrl.u32 %v1450, 7
        %v1452 = vsub.s32 %v1449, %v1451
        %v1453 = vrot.slane %v1439, %v1452
        %v1454 = vcombine.low %v1446, %v1453
        %v1455 = vcombine.low %v906, %v907
        %v1456 = vcombine.low %v898, %v930
        %v1457 = vcombine.low %v944, %v945
        %v1458 = vcombine.low %v946, %v937
        %v1460 = vunpack.c.l.s4 1966171168
        %v1461 = vunpack.c.0.s8 %v1460
        %v1462 = vlaneseq
        %v1463 = vshrl.u32 %v1462, 7
        %v1464 = vsub.s32 %v1461, %v1463
        %v1465 = vrot.slane %v1455, %v1464
        %v1467 = vunpack.c.l.s4 1966171168
        %v1468 = vunpack.c.0.s8 %v1467
        %v1469 = vlaneseq
        %v1470 = vshrl.u32 %v1469, 7
        %v1471 = vsub.s32 %v1468, %v1470
        %v1472 = vrot.slane %v1456, %v1471
        %v1474 = vunpack.c.l.s4 1966171168
        %v1475 = vunpack.c.0.s8 %v1474
        %v1476 = vlaneseq
        %v1477 = vshrl.u32 %v1476, 7
        %v1478 = vsub.s32 %v1475, %v1477
        %v1479 = vrot.slane %v1457, %v1478
        %v1481 = vunpack.c.l.s4 1966171168
        %v1482 = vunpack.c.0.s8 %v1481
        %v1483 = vlaneseq
        %v1484 = vshrl.u32 %v1483, 7
        %v1485 = vsub.s32 %v1482, %v1484
        %v1486 = vrot.slane %v1458, %v1485
        %v1487 = vcombine.low %v1465, %v1472
        %v1488 = vcombine.low %v1479, %v1486
        %v1490 = vunpack.c.l.s4 1966171168
        %v1491 = vunpack.c.0.s8 %v1490
        %v1492 = vlaneseq
        %v1493 = vshrl.u32 %v1492, 7
        %v1494 = vsub.s32 %v1491, %v1493
        %v1495 = vrot.slane %v1487, %v1494
        %v1497 = vunpack.c.l.s4 1966171168
        %v1498 = vunpack.c.0.s8 %v1497
        %v1499 = vlaneseq
        %v1500 = vshrl.u32 %v1499, 7
        %v1501 = vsub.s32 %v1498, %v1500
        %v1502 = vrot.slane %v1488, %v1501
        %v1503 = vcombine.low %v1495, %v1502
        %v1504 = vcombine.low %v969, %v983
        %v1505 = vcombine.low %v984, %v985
        %v1506 = vcombine.low %v976, %v1008
        %v1507 = vcombine.low %v1022, %v1023
        %v1509 = vunpack.c.l.s4 1966171168
        %v1510 = vunpack.c.0.s8 %v1509
        %v1511 = vlaneseq
        %v1512 = vshrl.u32 %v1511, 7
        %v1513 = vsub.s32 %v1510, %v1512
        %v1514 = vrot.slane %v1504, %v1513
        %v1516 = vunpack.c.l.s4 1966171168
        %v1517 = vunpack.c.0.s8 %v1516
        %v1518 = vlaneseq
        %v1519 = vshrl.u32 %v1518, 7
        %v1520 = vsub.s32 %v1517, %v1519
        %v1521 = vrot.slane %v1505, %v1520
        %v1523 = vunpack.c.l.s4 1966171168
        %v1524 = vunpack.c.0.s8 %v1523
        %v1525 = vlaneseq
        %v1526 = vshrl.u32 %v1525, 7
        %v1527 = vsub.s32 %v1524, %v1526
        %v1528 = vrot.slane %v1506, %v1527
        %v1530 = vunpack.c.l.s4 1966171168
        %v1531 = vunpack.c.0.s8 %v1530
        %v1532 = vlaneseq
        %v1533 = vshrl.u32 %v1532, 7
        %v1534 = vsub.s32 %v1531, %v1533
        %v1535 = vrot.slane %v1507, %v1534
        %v1536 = vcombine.low %v1514, %v1521
        %v1537 = vcombine.low %v1528, %v1535
        %v1539 = vunpack.c.l.s4 1966171168
        %v1540 = vunpack.c.0.s8 %v1539
        %v1541 = vlaneseq
        %v1542 = vshrl.u32 %v1541, 7
        %v1543 = vsub.s32 %v1540, %v1542
        %v1544 = vrot.slane %v1536, %v1543
        %v1546 = vunpack.c.l.s4 1966171168
        %v1547 = vunpack.c.0.s8 %v1546
        %v1548 = vlaneseq
        %v1549 = vshrl.u32 %v1548, 7
        %v1550 = vsub.s32 %v1547, %v1549
        %v1551 = vrot.slane %v1537, %v1550
        %v1552 = vcombine.low %v1544, %v1551
        %v1553 = vcombine.low %v1024, %v1015
        %v1554 = vcombine.low %v1047, %v1061
        %v1555 = vcombine.low %v1062, %v1063
        %v1556 = vcombine.low %v1054, %v1086
        %v1558 = vunpack.c.l.s4 1966171168
        %v1559 = vunpack.c.0.s8 %v1558
        %v1560 = vlaneseq
        %v1561 = vshrl.u32 %v1560, 7
        %v1562 = vsub.s32 %v1559, %v1561
        %v1563 = vrot.slane %v1553, %v1562
        %v1565 = vunpack.c.l.s4 1966171168
        %v1566 = vunpack.c.0.s8 %v1565
        %v1567 = vlaneseq
        %v1568 = vshrl.u32 %v1567, 7
        %v1569 = vsub.s32 %v1566, %v1568
        %v1570 = vrot.slane %v1554, %v1569
        %v1572 = vunpack.c.l.s4 1966171168
        %v1573 = vunpack.c.0.s8 %v1572
        %v1574 = vlaneseq
        %v1575 = vshrl.u32 %v1574, 7
        %v1576 = vsub.s32 %v1573, %v1575
        %v1577 = vrot.slane %v1555, %v1576
        %v1579 = vunpack.c.l.s4 1966171168
        %v1580 = vunpack.c.0.s8 %v1579
        %v1581 = vlaneseq
        %v1582 = vshrl.u32 %v1581, 7
        %v1583 = vsub.s32 %v1580, %v1582
        %v1584 = vrot.slane %v1556, %v1583
        %v1585 = vcombine.low %v1563, %v1570
        %v1586 = vcombine.low %v1577, %v1584
        %v1588 = vunpack.c.l.s4 1966171168
        %v1589 = vunpack.c.0.s8 %v1588
        %v1590 = vlaneseq
        %v1591 = vshrl.u32 %v1590, 7
        %v1592 = vsub.s32 %v1589, %v1591
        %v1593 = vrot.slane %v1585, %v1592
        %v1595 = vunpack.c.l.s4 1966171168
        %v1596 = vunpack.c.0.s8 %v1595
        %v1597 = vlaneseq
        %v1598 = vshrl.u32 %v1597, 7
        %v1599 = vsub.s32 %v1596, %v1598
        %v1600 = vrot.slane %v1586, %v1599
        %v1601 = vcombine.low %v1593, %v1600
        %v1602 = vcombine.low %v1100, %v1101
        %v1603 = vcombine.low %v1102, %v1093
        %v1604 = vcombine.low %v1125, %v1139
        %v1605 = vcombine.low %v1140, %v1141
        %v1607 = vunpack.c.l.s4 1966171168
        %v1608 = vunpack.c.0.s8 %v1607
        %v1609 = vlaneseq
        %v1610 = vshrl.u32 %v1609, 7
        %v1611 = vsub.s32 %v1608, %v1610
        %v1612 = vrot.slane %v1602, %v1611
        %v1614 = vunpack.c.l.s4 1966171168
        %v1615 = vunpack.c.0.s8 %v1614
        %v1616 = vlaneseq
        %v1617 = vshrl.u32 %v1616, 7
        %v1618 = vsub.s32 %v1615, %v1617
        %v1619 = vrot.slane %v1603, %v1618
        %v1621 = vunpack.c.l.s4 1966171168
        %v1622 = vunpack.c.0.s8 %v1621
        %v1623 = vlaneseq
        %v1624 = vshrl.u32 %v1623, 7
        %v1625 = vsub.s32 %v1622, %v1624
        %v1626 = vrot.slane %v1604, %v1625
        %v1628 = vunpack.c.l.s4 1966171168
        %v1629 = vunpack.c.0.s8 %v1628
        %v1630 = vlaneseq
        %v1631 = vshrl.u32 %v1630, 7
        %v1632 = vsub.s32 %v1629, %v1631
        %v1633 = vrot.slane %v1605, %v1632
        %v1634 = vcombine.low %v1612, %v1619
        %v1635 = vcombine.low %v1626, %v1633
        %v1637 = vunpack.c.l.s4 1966171168
        %v1638 = vunpack.c.0.s8 %v1637
        %v1639 = vlaneseq
        %v1640 = vshrl.u32 %v1639, 7
        %v1641 = vsub.s32 %v1638, %v1640
        %v1642 = vrot.slane %v1634, %v1641
        %v1644 = vunpack.c.l.s4 1966171168
        %v1645 = vunpack.c.0.s8 %v1644
        %v1646 = vlaneseq
        %v1647 = vshrl.u32 %v1646, 7
        %v1648 = vsub.s32 %v1645, %v1647
        %v1649 = vrot.slane %v1635, %v1648
        %v1650 = vcombine.low %v1642, %v1649
        %v1651 = vcombine.low %v1132, %v1164
        %v1652 = vcombine.low %v1178, %v1179
        %v1653 = vcombine.low %v1180, %v1171
        %v1654 = vcombine.low %v1203, %v1217
        %v1656 = vunpack.c.l.s4 1966171168
        %v1657 = vunpack.c.0.s8 %v1656
        %v1658 = vlaneseq
        %v1659 = vshrl.u32 %v1658, 7
        %v1660 = vsub.s32 %v1657, %v1659
        %v1661 = vrot.slane %v1651, %v1660
        %v1663 = vunpack.c.l.s4 1966171168
        %v1664 = vunpack.c.0.s8 %v1663
        %v1665 = vlaneseq
        %v1666 = vshrl.u32 %v1665, 7
        %v1667 = vsub.s32 %v1664, %v1666
        %v1668 = vrot.slane %v1652, %v1667
        %v1670 = vunpack.c.l.s4 1966171168
        %v1671 = vunpack.c.0.s8 %v1670
        %v1672 = vlaneseq
        %v1673 = vshrl.u32 %v1672, 7
        %v1674 = vsub.s32 %v1671, %v1673
        %v1675 = vrot.slane %v1653, %v1674
        %v1677 = vunpack.c.l.s4 1966171168
        %v1678 = vunpack.c.0.s8 %v1677
        %v1679 = vlaneseq
        %v1680 = vshrl.u32 %v1679, 7
        %v1681 = vsub.s32 %v1678, %v1680
        %v1682 = vrot.slane %v1654, %v1681
        %v1683 = vcombine.low %v1661, %v1668
        %v1684 = vcombine.low %v1675, %v1682
        %v1686 = vunpack.c.l.s4 1966171168
        %v1687 = vunpack.c.0.s8 %v1686
        %v1688 = vlaneseq
        %v1689 = vshrl.u32 %v1688, 7
        %v1690 = vsub.s32 %v1687, %v1689
        %v1691 = vrot.slane %v1683, %v1690
        %v1693 = vunpack.c.l.s4 1966171168
        %v1694 = vunpack.c.0.s8 %v1693
        %v1695 = vlaneseq
        %v1696 = vshrl.u32 %v1695, 7
        %v1697 = vsub.s32 %v1694, %v1696
        %v1698 = vrot.slane %v1684, %v1697
        %v1699 = vcombine.low %v1691, %v1698
        %v1700 = vcombine.low %v1218, %v1219
        %v1701 = vcombine.low %v1210, %v1242
        %v1702 = vcombine.low %v1256, %v1257
        %v1703 = vcombine.low %v1258, %v1249
        %v1705 = vunpack.c.l.s4 1966171168
        %v1706 = vunpack.c.0.s8 %v1705
        %v1707 = vlaneseq
        %v1708 = vshrl.u32 %v1707, 7
        %v1709 = vsub.s32 %v1706, %v1708
        %v1710 = vrot.slane %v1700, %v1709
        %v1712 = vunpack.c.l.s4 1966171168
        %v1713 = vunpack.c.0.s8 %v1712
        %v1714 = vlaneseq
        %v1715 = vshrl.u32 %v1714, 7
        %v1716 = vsub.s32 %v1713, %v1715
        %v1717 = vrot.slane %v1701, %v1716
        %v1719 = vunpack.c.l.s4 1966171168
        %v1720 = vunpack.c.0.s8 %v1719
        %v1721 = vlaneseq
        %v1722 = vshrl.u32 %v1721, 7
        %v1723 = vsub.s32 %v1720, %v1722
        %v1724 = vrot.slane %v1702, %v1723
        %v1726 = vunpack.c.l.s4 1966171168
        %v1727 = vunpack.c.0.s8 %v1726
        %v1728 = vlaneseq
        %v1729 = vshrl.u32 %v1728, 7
        %v1730 = vsub.s32 %v1727, %v1729
        %v1731 = vrot.slane %v1703, %v1730
        %v1732 = vcombine.low %v1710, %v1717
        %v1733 = vcombine.low %v1724, %v1731
        %v1735 = vunpack.c.l.s4 1966171168
        %v1736 = vunpack.c.0.s8 %v1735
        %v1737 = vlaneseq
        %v1738 = vshrl.u32 %v1737, 7
        %v1739 = vsub.s32 %v1736, %v1738
        %v1740 = vrot.slane %v1732, %v1739
        %v1742 = vunpack.c.l.s4 1966171168
        %v1743 = vunpack.c.0.s8 %v1742
        %v1744 = vlaneseq
        %v1745 = vshrl.u32 %v1744, 7
        %v1746 = vsub.s32 %v1743, %v1745
        %v1747 = vrot.slane %v1733, %v1746
        %v1748 = vcombine.low %v1740, %v1747
        %v1775 = vunpack.c.l.b16 %v603
        %v1776 = vunpack.c.l.b16 %v604
        %v1777 = vunpack.c.l.b16 %v605
        %v1778 = vunpack.c.l.b16 %v606
        %v1779 = vunpack.c.l.b16 %v607
        %v1780 = vunpack.c.l.b16 %v608
        %v1781 = vunpack.c.l.b16 %v609
        %v1782 = vunpack.c.l.b16 %v610
        %v1783 = vunpack.c.l.b16 %v611
        %v1784 = vunpack.c.l.b16 %v612
        %v1785 = vunpack.c.l.b16 %v613
        %v1786 = vunpack.c.l.b16 %v614
        %v1787 = vunpack.c.l.b16 %v615
        %v1788 = vunpack.c.l.b16 %v616
        %v1789 = vunpack.c.l.b16 %v617
        %v1790 = vunpack.c.l.b16 %v618
        %v1791 = vpack.c.b16 %v1776, %v1775
        %v1792 = vpack.c.b16 %v1778, %v1777
        %v1793 = vpack.c.b16 %v1780, %v1779
        %v1794 = vpack.c.b16 %v1782, %v1781
        %v1795 = vpack.c.b16 %v1784, %v1783
        %v1796 = vpack.c.b16 %v1786, %v1785
        %v1797 = vpack.c.b16 %v1788, %v1787
        %v1798 = vpack.c.b16 %v1790, %v1789
        %1807 = vmatprep.subr.bf16.mxu0 0
        %1808 = vmatpush1.bf16.msra.mxu0 %v1798
        %1809 = vmatprep.subr.bf16.mxu0 0
        %1810 = vmatpush1.bf16.msra.mxu0 %v1797
        %1811 = vmatprep.subr.bf16.mxu0 0
        %1812 = vmatpush1.bf16.msra.mxu0 %v1796
        %1813 = vmatprep.subr.bf16.mxu0 0
        %1814 = vmatpush1.bf16.msra.mxu0 %v1795
        %1815 = vmatprep.subr.bf16.mxu0 0
        %1816 = vmatpush1.bf16.msra.mxu0 %v1794
        %1817 = vmatprep.subr.bf16.mxu0 0
        %1818 = vmatpush1.bf16.msra.mxu0 %v1793
        %1819 = vmatprep.subr.bf16.mxu0 0
        %1820 = vmatpush1.bf16.msra.mxu0 %v1792
        %1821 = vmatprep.subr.bf16.mxu0 0
        %1822 = vmatpush1.bf16.msra.mxu0 %v1791
        %1823 = vmatprep.subr.bf16.mxu0 0
        %1824 = vmatpush2.bf16.msra.mxu0 0
        %1825 = vmatprep.subr.bf16.mxu0 0
        %1826 = vmatpush2.bf16.msra.mxu0 0
        %1827 = vmatprep.subr.bf16.mxu0 0
        %1828 = vmatpush2.bf16.msra.mxu0 0
        %1829 = vmatprep.subr.bf16.mxu0 0
        %1830 = vmatpush2.bf16.msra.mxu0 0
        %1831 = vmatprep.subr.bf16.mxu0 0
        %1832 = vmatpush2.bf16.msra.mxu0 0
        %1833 = vmatprep.subr.bf16.mxu0 0
        %1834 = vmatpush2.bf16.msra.mxu0 0
        %1835 = vmatprep.subr.bf16.mxu0 0
        %1836 = vmatpush2.bf16.msra.mxu0 0
        %1837 = vmatprep.subr.bf16.mxu0 0
        %1838 = vmatpush2.bf16.msra.mxu0 0
        %1839 = vmatprep.mubr.bf16.mxu0 0
        %1840 = vmatmul.mubr.bf16.gmra.mxu0 %v1307
        %v1841 = vpop.f32.mrf.mxu0
        %v1842 = vadd.f32 0.0, %v1841
        %v1843 = vpop.f32.mrf.mxu0
        %v1844 = vpop.f32.mrf.mxu0
        %v1845 = vadd.f32 0.0, %v1844
        %v1846 = vpop.f32.mrf.mxu0
        %1847 = vmatprep.mubr.bf16.mxu0 0
        %1848 = vmatmul.mubr.bf16.gmra.mxu0 %v1356
        %v1849 = vpop.f32.mrf.mxu0
        %v1850 = vadd.f32 0.0, %v1849
        %v1851 = vpop.f32.mrf.mxu0
        %v1852 = vpop.f32.mrf.mxu0
        %v1853 = vadd.f32 0.0, %v1852
        %v1854 = vpop.f32.mrf.mxu0
        %1855 = vmatprep.mubr.bf16.mxu0 0
        %1856 = vmatmul.mubr.bf16.gmra.mxu0 %v1405
        %v1857 = vpop.f32.mrf.mxu0
        %v1858 = vadd.f32 0.0, %v1857
        %v1859 = vpop.f32.mrf.mxu0
        %v1860 = vpop.f32.mrf.mxu0
        %v1861 = vadd.f32 0.0, %v1860
        %v1862 = vpop.f32.mrf.mxu0
        %1863 = vmatprep.mubr.bf16.mxu0 0
        %1864 = vmatmul.mubr.bf16.gmra.mxu0 %v1454
        %v1865 = vpop.f32.mrf.mxu0
        %v1866 = vadd.f32 0.0, %v1865
        %v1867 = vpop.f32.mrf.mxu0
        %v1868 = vpop.f32.mrf.mxu0
        %v1869 = vadd.f32 0.0, %v1868
        %v1870 = vpop.f32.mrf.mxu0
        %1871 = vmatprep.mubr.bf16.mxu0 0
        %1872 = vmatmul.mubr.bf16.gmra.mxu0 %v1503
        %v1873 = vpop.f32.mrf.mxu0
        %v1874 = vadd.f32 0.0, %v1873
        %v1875 = vpop.f32.mrf.mxu0
        %v1876 = vpop.f32.mrf.mxu0
        %v1877 = vadd.f32 0.0, %v1876
        %v1878 = vpop.f32.mrf.mxu0
        %1879 = vmatprep.mubr.bf16.mxu0 0
        %1880 = vmatmul.mubr.bf16.gmra.mxu0 %v1552
        %v1881 = vpop.f32.mrf.mxu0
        %v1882 = vadd.f32 0.0, %v1881
        %v1883 = vpop.f32.mrf.mxu0
        %v1884 = vpop.f32.mrf.mxu0
        %v1885 = vadd.f32 0.0, %v1884
        %v1886 = vpop.f32.mrf.mxu0
        %1887 = vmatprep.mubr.bf16.mxu0 0
        %1888 = vmatmul.mubr.bf16.gmra.mxu0 %v1601
        %v1889 = vpop.f32.mrf.mxu0
        %v1890 = vadd.f32 0.0, %v1889
        %v1891 = vpop.f32.mrf.mxu0
        %v1892 = vpop.f32.mrf.mxu0
        %v1893 = vadd.f32 0.0, %v1892
        %v1894 = vpop.f32.mrf.mxu0
        %1895 = vmatprep.mubr.bf16.mxu0 0
        %1896 = vmatmul.mubr.bf16.gmra.mxu0 %v1650
        %v1897 = vpop.f32.mrf.mxu0
        %v1898 = vadd.f32 0.0, %v1897
        %v1899 = vpop.f32.mrf.mxu0
        %v1900 = vpop.f32.mrf.mxu0
        %v1901 = vadd.f32 0.0, %v1900
        %v1902 = vpop.f32.mrf.mxu0
        %1903 = vmatprep.mubr.bf16.mxu0 0
        %1904 = vmatmul.mubr.bf16.gmra.mxu0 %v1699
        %v1905 = vpop.f32.mrf.mxu0
        %v1906 = vadd.f32 0.0, %v1905
        %v1907 = vpop.f32.mrf.mxu0
        %v1908 = vpop.f32.mrf.mxu0
        %v1909 = vadd.f32 0.0, %v1908
        %v1910 = vpop.f32.mrf.mxu0
        %1911 = vmatprep.mubr.bf16.mxu0 0
        %1912 = vmatmul.mubr.bf16.gmra.mxu0 %v1748
        %v1913 = vpop.f32.mrf.mxu0
        %v1914 = vadd.f32 0.0, %v1913
        %v1915 = vpop.f32.mrf.mxu0
        %v1916 = vpop.f32.mrf.mxu0
        %v1917 = vadd.f32 0.0, %v1916
        %v1918 = vpop.f32.mrf.mxu0
        %1919 = vdwg.mxu0
        %v1940 = vcombine.high %v1842, %v1842
        %v1942 = vunpack.c.l.s4 1983009808
        %v1943 = vunpack.c.0.s8 %v1942
        %v1944 = vlaneseq
        %v1945 = vshrl.u32 %v1944, 7
        %v1946 = vsub.s32 %v1943, %v1945
        %v1947 = vrot.slane %v1842, %v1946
        %v1949 = vunpack.c.l.s4 1983009808
        %v1950 = vunpack.c.0.s8 %v1949
        %v1951 = vlaneseq
        %v1952 = vshrl.u32 %v1951, 7
        %v1953 = vsub.s32 %v1950, %v1952
        %v1954 = vrot.slane %v1940, %v1953
        %v1955 = vcombine.high %v1947, %v1947
        %v1956 = vcombine.high %v1954, %v1954
        %v1957 = vcombine.high %v1845, %v1845
        %v1959 = vunpack.c.l.s4 1983009808
        %v1960 = vunpack.c.0.s8 %v1959
        %v1961 = vlaneseq
        %v1962 = vshrl.u32 %v1961, 7
        %v1963 = vsub.s32 %v1960, %v1962
        %v1964 = vrot.slane %v1845, %v1963
        %v1966 = vunpack.c.l.s4 1983009808
        %v1967 = vunpack.c.0.s8 %v1966
        %v1968 = vlaneseq
        %v1969 = vshrl.u32 %v1968, 7
        %v1970 = vsub.s32 %v1967, %v1969
        %v1971 = vrot.slane %v1957, %v1970
        %v1972 = vcombine.high %v1964, %v1964
        %v1973 = vcombine.high %v1971, %v1971
        %v1974 = vcombine.high %v1850, %v1850
        %v1976 = vunpack.c.l.s4 1983009808
        %v1977 = vunpack.c.0.s8 %v1976
        %v1978 = vlaneseq
        %v1979 = vshrl.u32 %v1978, 7
        %v1980 = vsub.s32 %v1977, %v1979
        %v1981 = vrot.slane %v1850, %v1980
        %v1983 = vunpack.c.l.s4 1983009808
        %v1984 = vunpack.c.0.s8 %v1983
        %v1985 = vlaneseq
        %v1986 = vshrl.u32 %v1985, 7
        %v1987 = vsub.s32 %v1984, %v1986
        %v1988 = vrot.slane %v1974, %v1987
        %v1989 = vcombine.high %v1981, %v1981
        %v1990 = vcombine.high %v1988, %v1988
        %v1991 = vcombine.high %v1853, %v1853
        %v1993 = vunpack.c.l.s4 1983009808
        %v1994 = vunpack.c.0.s8 %v1993
        %v1995 = vlaneseq
        %v1996 = vshrl.u32 %v1995, 7
        %v1997 = vsub.s32 %v1994, %v1996
        %v1998 = vrot.slane %v1853, %v1997
        %v2000 = vunpack.c.l.s4 1983009808
        %v2001 = vunpack.c.0.s8 %v2000
        %v2002 = vlaneseq
        %v2003 = vshrl.u32 %v2002, 7
        %v2004 = vsub.s32 %v2001, %v2003
        %v2005 = vrot.slane %v1991, %v2004
        %v2006 = vcombine.high %v1998, %v1998
        %v2007 = vcombine.high %v2005, %v2005
        %v2008 = vcombine.high %v1858, %v1858
        %v2010 = vunpack.c.l.s4 1983009808
        %v2011 = vunpack.c.0.s8 %v2010
        %v2012 = vlaneseq
        %v2013 = vshrl.u32 %v2012, 7
        %v2014 = vsub.s32 %v2011, %v2013
        %v2015 = vrot.slane %v1858, %v2014
        %v2017 = vunpack.c.l.s4 1983009808
        %v2018 = vunpack.c.0.s8 %v2017
        %v2019 = vlaneseq
        %v2020 = vshrl.u32 %v2019, 7
        %v2021 = vsub.s32 %v2018, %v2020
        %v2022 = vrot.slane %v2008, %v2021
        %v2023 = vcombine.high %v2015, %v2015
        %v2024 = vcombine.high %v2022, %v2022
        %v2025 = vcombine.high %v1861, %v1861
        %v2027 = vunpack.c.l.s4 1983009808
        %v2028 = vunpack.c.0.s8 %v2027
        %v2029 = vlaneseq
        %v2030 = vshrl.u32 %v2029, 7
        %v2031 = vsub.s32 %v2028, %v2030
        %v2032 = vrot.slane %v1861, %v2031
        %v2034 = vunpack.c.l.s4 1983009808
        %v2035 = vunpack.c.0.s8 %v2034
        %v2036 = vlaneseq
        %v2037 = vshrl.u32 %v2036, 7
        %v2038 = vsub.s32 %v2035, %v2037
        %v2039 = vrot.slane %v2025, %v2038
        %v2040 = vcombine.high %v2032, %v2032
        %v2041 = vcombine.high %v2039, %v2039
        %v2042 = vcombine.high %v1866, %v1866
        %v2044 = vunpack.c.l.s4 1983009808
        %v2045 = vunpack.c.0.s8 %v2044
        %v2046 = vlaneseq
        %v2047 = vshrl.u32 %v2046, 7
        %v2048 = vsub.s32 %v2045, %v2047
        %v2049 = vrot.slane %v1866, %v2048
        %v2051 = vunpack.c.l.s4 1983009808
        %v2052 = vunpack.c.0.s8 %v2051
        %v2053 = vlaneseq
        %v2054 = vshrl.u32 %v2053, 7
        %v2055 = vsub.s32 %v2052, %v2054
        %v2056 = vrot.slane %v2042, %v2055
        %v2057 = vcombine.high %v2049, %v2049
        %v2058 = vcombine.high %v2056, %v2056
        %v2059 = vcombine.high %v1869, %v1869
        %v2061 = vunpack.c.l.s4 1983009808
        %v2062 = vunpack.c.0.s8 %v2061
        %v2063 = vlaneseq
        %v2064 = vshrl.u32 %v2063, 7
        %v2065 = vsub.s32 %v2062, %v2064
        %v2066 = vrot.slane %v1869, %v2065
        %v2068 = vunpack.c.l.s4 1983009808
        %v2069 = vunpack.c.0.s8 %v2068
        %v2070 = vlaneseq
        %v2071 = vshrl.u32 %v2070, 7
        %v2072 = vsub.s32 %v2069, %v2071
        %v2073 = vrot.slane %v2059, %v2072
        %v2074 = vcombine.high %v2066, %v2066
        %v2075 = vcombine.high %v2073, %v2073
        %v2076 = vcombine.high %v1874, %v1874
        %v2078 = vunpack.c.l.s4 1983009808
        %v2079 = vunpack.c.0.s8 %v2078
        %v2080 = vlaneseq
        %v2081 = vshrl.u32 %v2080, 7
        %v2082 = vsub.s32 %v2079, %v2081
        %v2083 = vrot.slane %v1874, %v2082
        %v2085 = vunpack.c.l.s4 1983009808
        %v2086 = vunpack.c.0.s8 %v2085
        %v2087 = vlaneseq
        %v2088 = vshrl.u32 %v2087, 7
        %v2089 = vsub.s32 %v2086, %v2088
        %v2090 = vrot.slane %v2076, %v2089
        %v2091 = vcombine.high %v2083, %v2083
        %v2092 = vcombine.high %v2090, %v2090
        %v2093 = vcombine.high %v1877, %v1877
        %v2095 = vunpack.c.l.s4 1983009808
        %v2096 = vunpack.c.0.s8 %v2095
        %v2097 = vlaneseq
        %v2098 = vshrl.u32 %v2097, 7
        %v2099 = vsub.s32 %v2096, %v2098
        %v2100 = vrot.slane %v1877, %v2099
        %v2102 = vunpack.c.l.s4 1983009808
        %v2103 = vunpack.c.0.s8 %v2102
        %v2104 = vlaneseq
        %v2105 = vshrl.u32 %v2104, 7
        %v2106 = vsub.s32 %v2103, %v2105
        %v2107 = vrot.slane %v2093, %v2106
        %v2108 = vcombine.high %v2100, %v2100
        %v2109 = vcombine.high %v2107, %v2107
        %v2110 = vcombine.high %v1882, %v1882
        %v2112 = vunpack.c.l.s4 1983009808
        %v2113 = vunpack.c.0.s8 %v2112
        %v2114 = vlaneseq
        %v2115 = vshrl.u32 %v2114, 7
        %v2116 = vsub.s32 %v2113, %v2115
        %v2117 = vrot.slane %v1882, %v2116
        %v2119 = vunpack.c.l.s4 1983009808
        %v2120 = vunpack.c.0.s8 %v2119
        %v2121 = vlaneseq
        %v2122 = vshrl.u32 %v2121, 7
        %v2123 = vsub.s32 %v2120, %v2122
        %v2124 = vrot.slane %v2110, %v2123
        %v2125 = vcombine.high %v2117, %v2117
        %v2126 = vcombine.high %v2124, %v2124
        %v2127 = vcombine.high %v1885, %v1885
        %v2129 = vunpack.c.l.s4 1983009808
        %v2130 = vunpack.c.0.s8 %v2129
        %v2131 = vlaneseq
        %v2132 = vshrl.u32 %v2131, 7
        %v2133 = vsub.s32 %v2130, %v2132
        %v2134 = vrot.slane %v1885, %v2133
        %v2136 = vunpack.c.l.s4 1983009808
        %v2137 = vunpack.c.0.s8 %v2136
        %v2138 = vlaneseq
        %v2139 = vshrl.u32 %v2138, 7
        %v2140 = vsub.s32 %v2137, %v2139
        %v2141 = vrot.slane %v2127, %v2140
        %v2142 = vcombine.high %v2134, %v2134
        %v2143 = vcombine.high %v2141, %v2141
        %v2144 = vcombine.high %v1890, %v1890
        %v2146 = vunpack.c.l.s4 1983009808
        %v2147 = vunpack.c.0.s8 %v2146
        %v2148 = vlaneseq
        %v2149 = vshrl.u32 %v2148, 7
        %v2150 = vsub.s32 %v2147, %v2149
        %v2151 = vrot.slane %v1890, %v2150
        %v2153 = vunpack.c.l.s4 1983009808
        %v2154 = vunpack.c.0.s8 %v2153
        %v2155 = vlaneseq
        %v2156 = vshrl.u32 %v2155, 7
        %v2157 = vsub.s32 %v2154, %v2156
        %v2158 = vrot.slane %v2144, %v2157
        %v2159 = vcombine.high %v2151, %v2151
        %v2160 = vcombine.high %v2158, %v2158
        %v2161 = vcombine.high %v1893, %v1893
        %v2163 = vunpack.c.l.s4 1983009808
        %v2164 = vunpack.c.0.s8 %v2163
        %v2165 = vlaneseq
        %v2166 = vshrl.u32 %v2165, 7
        %v2167 = vsub.s32 %v2164, %v2166
        %v2168 = vrot.slane %v1893, %v2167
        %v2170 = vunpack.c.l.s4 1983009808
        %v2171 = vunpack.c.0.s8 %v2170
        %v2172 = vlaneseq
        %v2173 = vshrl.u32 %v2172, 7
        %v2174 = vsub.s32 %v2171, %v2173
        %v2175 = vrot.slane %v2161, %v2174
        %v2176 = vcombine.high %v2168, %v2168
        %v2177 = vcombine.high %v2175, %v2175
        %v2178 = vcombine.high %v1898, %v1898
        %v2180 = vunpack.c.l.s4 1983009808
        %v2181 = vunpack.c.0.s8 %v2180
        %v2182 = vlaneseq
        %v2183 = vshrl.u32 %v2182, 7
        %v2184 = vsub.s32 %v2181, %v2183
        %v2185 = vrot.slane %v1898, %v2184
        %v2187 = vunpack.c.l.s4 1983009808
        %v2188 = vunpack.c.0.s8 %v2187
        %v2189 = vlaneseq
        %v2190 = vshrl.u32 %v2189, 7
        %v2191 = vsub.s32 %v2188, %v2190
        %v2192 = vrot.slane %v2178, %v2191
        %v2193 = vcombine.high %v2185, %v2185
        %v2194 = vcombine.high %v2192, %v2192
        %v2195 = vcombine.high %v1901, %v1901
        %v2197 = vunpack.c.l.s4 1983009808
        %v2198 = vunpack.c.0.s8 %v2197
        %v2199 = vlaneseq
        %v2200 = vshrl.u32 %v2199, 7
        %v2201 = vsub.s32 %v2198, %v2200
        %v2202 = vrot.slane %v1901, %v2201
        %v2204 = vunpack.c.l.s4 1983009808
        %v2205 = vunpack.c.0.s8 %v2204
        %v2206 = vlaneseq
        %v2207 = vshrl.u32 %v2206, 7
        %v2208 = vsub.s32 %v2205, %v2207
        %v2209 = vrot.slane %v2195, %v2208
        %v2210 = vcombine.high %v2202, %v2202
        %v2211 = vcombine.high %v2209, %v2209
        %v2212 = vcombine.high %v1906, %v1906
        %v2214 = vunpack.c.l.s4 1983009808
        %v2215 = vunpack.c.0.s8 %v2214
        %v2216 = vlaneseq
        %v2217 = vshrl.u32 %v2216, 7
        %v2218 = vsub.s32 %v2215, %v2217
        %v2219 = vrot.slane %v1906, %v2218
        %v2221 = vunpack.c.l.s4 1983009808
        %v2222 = vunpack.c.0.s8 %v2221
        %v2223 = vlaneseq
        %v2224 = vshrl.u32 %v2223, 7
        %v2225 = vsub.s32 %v2222, %v2224
        %v2226 = vrot.slane %v2212, %v2225
        %v2227 = vcombine.high %v2219, %v2219
        %v2228 = vcombine.high %v2226, %v2226
        %v2229 = vcombine.high %v1909, %v1909
        %v2231 = vunpack.c.l.s4 1983009808
        %v2232 = vunpack.c.0.s8 %v2231
        %v2233 = vlaneseq
        %v2234 = vshrl.u32 %v2233, 7
        %v2235 = vsub.s32 %v2232, %v2234
        %v2236 = vrot.slane %v1909, %v2235
        %v2238 = vunpack.c.l.s4 1983009808
        %v2239 = vunpack.c.0.s8 %v2238
        %v2240 = vlaneseq
        %v2241 = vshrl.u32 %v2240, 7
        %v2242 = vsub.s32 %v2239, %v2241
        %v2243 = vrot.slane %v2229, %v2242
        %v2244 = vcombine.high %v2236, %v2236
        %v2245 = vcombine.high %v2243, %v2243
        %v2246 = vcombine.high %v1914, %v1914
        %v2248 = vunpack.c.l.s4 1983009808
        %v2249 = vunpack.c.0.s8 %v2248
        %v2250 = vlaneseq
        %v2251 = vshrl.u32 %v2250, 7
        %v2252 = vsub.s32 %v2249, %v2251
        %v2253 = vrot.slane %v1914, %v2252
        %v2255 = vunpack.c.l.s4 1983009808
        %v2256 = vunpack.c.0.s8 %v2255
        %v2257 = vlaneseq
        %v2258 = vshrl.u32 %v2257, 7
        %v2259 = vsub.s32 %v2256, %v2258
        %v2260 = vrot.slane %v2246, %v2259
        %v2261 = vcombine.high %v2253, %v2253
        %v2262 = vcombine.high %v2260, %v2260
        %v2263 = vcombine.high %v1917, %v1917
        %v2265 = vunpack.c.l.s4 1983009808
        %v2266 = vunpack.c.0.s8 %v2265
        %v2267 = vlaneseq
        %v2268 = vshrl.u32 %v2267, 7
        %v2269 = vsub.s32 %v2266, %v2268
        %v2270 = vrot.slane %v1917, %v2269
        %v2272 = vunpack.c.l.s4 1983009808
        %v2273 = vunpack.c.0.s8 %v2272
        %v2274 = vlaneseq
        %v2275 = vshrl.u32 %v2274, 7
        %v2276 = vsub.s32 %v2273, %v2275
        %v2277 = vrot.slane %v2263, %v2276
        %v2278 = vcombine.high %v2270, %v2270
        %v2279 = vcombine.high %v2277, %v2277
        %v2280 = vcombine.low %v1947, %v1955
        %v2281 = vcombine.low %v1954, %v1956
        %v2283 = vunpack.c.l.s4 1983009808
        %v2284 = vunpack.c.0.s8 %v2283
        %v2285 = vlaneseq
        %v2286 = vshrl.u32 %v2285, 7
        %v2287 = vsub.s32 %v2284, %v2286
        %v2288 = vrot.slane %v2280, %v2287
        %v2290 = vunpack.c.l.s4 1983009808
        %v2291 = vunpack.c.0.s8 %v2290
        %v2292 = vlaneseq
        %v2293 = vshrl.u32 %v2292, 7
        %v2294 = vsub.s32 %v2291, %v2293
        %v2295 = vrot.slane %v2281, %v2294
        %v2296 = vcombine.low %v2288, %v2295
        %v2298 = vunpack.c.l.s4 1983009808
        %v2299 = vunpack.c.0.s8 %v2298
        %v2300 = vlaneseq
        %v2301 = vshrl.u32 %v2300, 7
        %v2302 = vsub.s32 %v2299, %v2301
        %v2303 = vrot.slane %v1964, %v2302
        %v2304 = vcombine.low %v1972, %v1971
        %v2305 = vcombine.low %v1973, %v1981
        %v2307 = vunpack.c.l.s4 1983009808
        %v2308 = vunpack.c.0.s8 %v2307
        %v2309 = vlaneseq
        %v2310 = vshrl.u32 %v2309, 7
        %v2311 = vsub.s32 %v2308, %v2310
        %v2312 = vrot.slane %v2304, %v2311
        %v2314 = vunpack.c.l.s4 1983009808
        %v2315 = vunpack.c.0.s8 %v2314
        %v2316 = vlaneseq
        %v2317 = vshrl.u32 %v2316, 7
        %v2318 = vsub.s32 %v2315, %v2317
        %v2319 = vrot.slane %v2305, %v2318
        %v2320 = vcombine.low %v2312, %v2319
        %v2322 = vunpack.c.l.s4 1983009808
        %v2323 = vunpack.c.0.s8 %v2322
        %v2324 = vlaneseq
        %v2325 = vshrl.u32 %v2324, 7
        %v2326 = vsub.s32 %v2323, %v2325
        %v2327 = vrot.slane %v1989, %v2326
        %v2328 = vcombine.low %v1988, %v1990
        %v2329 = vcombine.low %v1998, %v2006
        %v2331 = vunpack.c.l.s4 1983009808
        %v2332 = vunpack.c.0.s8 %v2331
        %v2333 = vlaneseq
        %v2334 = vshrl.u32 %v2333, 7
        %v2335 = vsub.s32 %v2332, %v2334
        %v2336 = vrot.slane %v2328, %v2335
        %v2338 = vunpack.c.l.s4 1983009808
        %v2339 = vunpack.c.0.s8 %v2338
        %v2340 = vlaneseq
        %v2341 = vshrl.u32 %v2340, 7
        %v2342 = vsub.s32 %v2339, %v2341
        %v2343 = vrot.slane %v2329, %v2342
        %v2344 = vcombine.low %v2336, %v2343
        %v2346 = vunpack.c.l.s4 1983009808
        %v2347 = vunpack.c.0.s8 %v2346
        %v2348 = vlaneseq
        %v2349 = vshrl.u32 %v2348, 7
        %v2350 = vsub.s32 %v2347, %v2349
        %v2351 = vrot.slane %v2005, %v2350
        %v2352 = vcombine.low %v2007, %v2015
        %v2353 = vcombine.low %v2023, %v2022
        %v2355 = vunpack.c.l.s4 1983009808
        %v2356 = vunpack.c.0.s8 %v2355
        %v2357 = vlaneseq
        %v2358 = vshrl.u32 %v2357, 7
        %v2359 = vsub.s32 %v2356, %v2358
        %v2360 = vrot.slane %v2352, %v2359
        %v2362 = vunpack.c.l.s4 1983009808
        %v2363 = vunpack.c.0.s8 %v2362
        %v2364 = vlaneseq
        %v2365 = vshrl.u32 %v2364, 7
        %v2366 = vsub.s32 %v2363, %v2365
        %v2367 = vrot.slane %v2353, %v2366
        %v2368 = vcombine.low %v2360, %v2367
        %v2370 = vunpack.c.l.s4 1983009808
        %v2371 = vunpack.c.0.s8 %v2370
        %v2372 = vlaneseq
        %v2373 = vshrl.u32 %v2372, 7
        %v2374 = vsub.s32 %v2371, %v2373
        %v2375 = vrot.slane %v2024, %v2374
        %v2376 = vcombine.low %v2032, %v2040
        %v2377 = vcombine.low %v2039, %v2041
        %v2379 = vunpack.c.l.s4 1983009808
        %v2380 = vunpack.c.0.s8 %v2379
        %v2381 = vlaneseq
        %v2382 = vshrl.u32 %v2381, 7
        %v2383 = vsub.s32 %v2380, %v2382
        %v2384 = vrot.slane %v2376, %v2383
        %v2386 = vunpack.c.l.s4 1983009808
        %v2387 = vunpack.c.0.s8 %v2386
        %v2388 = vlaneseq
        %v2389 = vshrl.u32 %v2388, 7
        %v2390 = vsub.s32 %v2387, %v2389
        %v2391 = vrot.slane %v2377, %v2390
        %v2392 = vcombine.low %v2384, %v2391
        %v2394 = vunpack.c.l.s4 1983009808
        %v2395 = vunpack.c.0.s8 %v2394
        %v2396 = vlaneseq
        %v2397 = vshrl.u32 %v2396, 7
        %v2398 = vsub.s32 %v2395, %v2397
        %v2399 = vrot.slane %v2049, %v2398
        %v2400 = vcombine.low %v2057, %v2056
        %v2401 = vcombine.low %v2058, %v2066
        %v2403 = vunpack.c.l.s4 1983009808
        %v2404 = vunpack.c.0.s8 %v2403
        %v2405 = vlaneseq
        %v2406 = vshrl.u32 %v2405, 7
        %v2407 = vsub.s32 %v2404, %v2406
        %v2408 = vrot.slane %v2400, %v2407
        %v2410 = vunpack.c.l.s4 1983009808
        %v2411 = vunpack.c.0.s8 %v2410
        %v2412 = vlaneseq
        %v2413 = vshrl.u32 %v2412, 7
        %v2414 = vsub.s32 %v2411, %v2413
        %v2415 = vrot.slane %v2401, %v2414
        %v2416 = vcombine.low %v2408, %v2415
        %v2418 = vunpack.c.l.s4 1983009808
        %v2419 = vunpack.c.0.s8 %v2418
        %v2420 = vlaneseq
        %v2421 = vshrl.u32 %v2420, 7
        %v2422 = vsub.s32 %v2419, %v2421
        %v2423 = vrot.slane %v2074, %v2422
        %v2424 = vcombine.low %v2073, %v2075
        %v2425 = vcombine.low %v2083, %v2091
        %v2427 = vunpack.c.l.s4 1983009808
        %v2428 = vunpack.c.0.s8 %v2427
        %v2429 = vlaneseq
        %v2430 = vshrl.u32 %v2429, 7
        %v2431 = vsub.s32 %v2428, %v2430
        %v2432 = vrot.slane %v2424, %v2431
        %v2434 = vunpack.c.l.s4 1983009808
        %v2435 = vunpack.c.0.s8 %v2434
        %v2436 = vlaneseq
        %v2437 = vshrl.u32 %v2436, 7
        %v2438 = vsub.s32 %v2435, %v2437
        %v2439 = vrot.slane %v2425, %v2438
        %v2440 = vcombine.low %v2432, %v2439
        %v2442 = vunpack.c.l.s4 1983009808
        %v2443 = vunpack.c.0.s8 %v2442
        %v2444 = vlaneseq
        %v2445 = vshrl.u32 %v2444, 7
        %v2446 = vsub.s32 %v2443, %v2445
        %v2447 = vrot.slane %v2090, %v2446
        %v2448 = vcombine.low %v2092, %v2100
        %v2449 = vcombine.low %v2108, %v2107
        %v2451 = vunpack.c.l.s4 1983009808
        %v2452 = vunpack.c.0.s8 %v2451
        %v2453 = vlaneseq
        %v2454 = vshrl.u32 %v2453, 7
        %v2455 = vsub.s32 %v2452, %v2454
        %v2456 = vrot.slane %v2448, %v2455
        %v2458 = vunpack.c.l.s4 1983009808
        %v2459 = vunpack.c.0.s8 %v2458
        %v2460 = vlaneseq
        %v2461 = vshrl.u32 %v2460, 7
        %v2462 = vsub.s32 %v2459, %v2461
        %v2463 = vrot.slane %v2449, %v2462
        %v2464 = vcombine.low %v2456, %v2463
        %v2466 = vunpack.c.l.s4 1983009808
        %v2467 = vunpack.c.0.s8 %v2466
        %v2468 = vlaneseq
        %v2469 = vshrl.u32 %v2468, 7
        %v2470 = vsub.s32 %v2467, %v2469
        %v2471 = vrot.slane %v2109, %v2470
        %v2472 = vcombine.low %v2117, %v2125
        %v2473 = vcombine.low %v2124, %v2126
        %v2475 = vunpack.c.l.s4 1983009808
        %v2476 = vunpack.c.0.s8 %v2475
        %v2477 = vlaneseq
        %v2478 = vshrl.u32 %v2477, 7
        %v2479 = vsub.s32 %v2476, %v2478
        %v2480 = vrot.slane %v2472, %v2479
        %v2482 = vunpack.c.l.s4 1983009808
        %v2483 = vunpack.c.0.s8 %v2482
        %v2484 = vlaneseq
        %v2485 = vshrl.u32 %v2484, 7
        %v2486 = vsub.s32 %v2483, %v2485
        %v2487 = vrot.slane %v2473, %v2486
        %v2488 = vcombine.low %v2480, %v2487
        %v2490 = vunpack.c.l.s4 1983009808
        %v2491 = vunpack.c.0.s8 %v2490
        %v2492 = vlaneseq
        %v2493 = vshrl.u32 %v2492, 7
        %v2494 = vsub.s32 %v2491, %v2493
        %v2495 = vrot.slane %v2134, %v2494
        %v2496 = vcombine.low %v2142, %v2141
        %v2497 = vcombine.low %v2143, %v2151
        %v2499 = vunpack.c.l.s4 1983009808
        %v2500 = vunpack.c.0.s8 %v2499
        %v2501 = vlaneseq
        %v2502 = vshrl.u32 %v2501, 7
        %v2503 = vsub.s32 %v2500, %v2502
        %v2504 = vrot.slane %v2496, %v2503
        %v2506 = vunpack.c.l.s4 1983009808
        %v2507 = vunpack.c.0.s8 %v2506
        %v2508 = vlaneseq
        %v2509 = vshrl.u32 %v2508, 7
        %v2510 = vsub.s32 %v2507, %v2509
        %v2511 = vrot.slane %v2497, %v2510
        %v2512 = vcombine.low %v2504, %v2511
        %v2514 = vunpack.c.l.s4 1983009808
        %v2515 = vunpack.c.0.s8 %v2514
        %v2516 = vlaneseq
        %v2517 = vshrl.u32 %v2516, 7
        %v2518 = vsub.s32 %v2515, %v2517
        %v2519 = vrot.slane %v2159, %v2518
        %v2520 = vcombine.low %v2158, %v2160
        %v2521 = vcombine.low %v2168, %v2176
        %v2523 = vunpack.c.l.s4 1983009808
        %v2524 = vunpack.c.0.s8 %v2523
        %v2525 = vlaneseq
        %v2526 = vshrl.u32 %v2525, 7
        %v2527 = vsub.s32 %v2524, %v2526
        %v2528 = vrot.slane %v2520, %v2527
        %v2530 = vunpack.c.l.s4 1983009808
        %v2531 = vunpack.c.0.s8 %v2530
        %v2532 = vlaneseq
        %v2533 = vshrl.u32 %v2532, 7
        %v2534 = vsub.s32 %v2531, %v2533
        %v2535 = vrot.slane %v2521, %v2534
        %v2536 = vcombine.low %v2528, %v2535
        %v2538 = vunpack.c.l.s4 1983009808
        %v2539 = vunpack.c.0.s8 %v2538
        %v2540 = vlaneseq
        %v2541 = vshrl.u32 %v2540, 7
        %v2542 = vsub.s32 %v2539, %v2541
        %v2543 = vrot.slane %v2175, %v2542
        %v2544 = vcombine.low %v2177, %v2185
        %v2545 = vcombine.low %v2193, %v2192
        %v2547 = vunpack.c.l.s4 1983009808
        %v2548 = vunpack.c.0.s8 %v2547
        %v2549 = vlaneseq
        %v2550 = vshrl.u32 %v2549, 7
        %v2551 = vsub.s32 %v2548, %v2550
        %v2552 = vrot.slane %v2544, %v2551
        %v2554 = vunpack.c.l.s4 1983009808
        %v2555 = vunpack.c.0.s8 %v2554
        %v2556 = vlaneseq
        %v2557 = vshrl.u32 %v2556, 7
        %v2558 = vsub.s32 %v2555, %v2557
        %v2559 = vrot.slane %v2545, %v2558
        %v2560 = vcombine.low %v2552, %v2559
        %v2562 = vunpack.c.l.s4 1983009808
        %v2563 = vunpack.c.0.s8 %v2562
        %v2564 = vlaneseq
        %v2565 = vshrl.u32 %v2564, 7
        %v2566 = vsub.s32 %v2563, %v2565
        %v2567 = vrot.slane %v2194, %v2566
        %v2568 = vcombine.low %v2202, %v2210
        %v2569 = vcombine.low %v2209, %v2211
        %v2571 = vunpack.c.l.s4 1983009808
        %v2572 = vunpack.c.0.s8 %v2571
        %v2573 = vlaneseq
        %v2574 = vshrl.u32 %v2573, 7
        %v2575 = vsub.s32 %v2572, %v2574
        %v2576 = vrot.slane %v2568, %v2575
        %v2578 = vunpack.c.l.s4 1983009808
        %v2579 = vunpack.c.0.s8 %v2578
        %v2580 = vlaneseq
        %v2581 = vshrl.u32 %v2580, 7
        %v2582 = vsub.s32 %v2579, %v2581
        %v2583 = vrot.slane %v2569, %v2582
        %v2584 = vcombine.low %v2576, %v2583
        %v2586 = vunpack.c.l.s4 1983009808
        %v2587 = vunpack.c.0.s8 %v2586
        %v2588 = vlaneseq
        %v2589 = vshrl.u32 %v2588, 7
        %v2590 = vsub.s32 %v2587, %v2589
        %v2591 = vrot.slane %v2219, %v2590
        %v2592 = vcombine.low %v2227, %v2226
        %v2593 = vcombine.low %v2228, %v2236
        %v2595 = vunpack.c.l.s4 1983009808
        %v2596 = vunpack.c.0.s8 %v2595
        %v2597 = vlaneseq
        %v2598 = vshrl.u32 %v2597, 7
        %v2599 = vsub.s32 %v2596, %v2598
        %v2600 = vrot.slane %v2592, %v2599
        %v2602 = vunpack.c.l.s4 1983009808
        %v2603 = vunpack.c.0.s8 %v2602
        %v2604 = vlaneseq
        %v2605 = vshrl.u32 %v2604, 7
        %v2606 = vsub.s32 %v2603, %v2605
        %v2607 = vrot.slane %v2593, %v2606
        %v2608 = vcombine.low %v2600, %v2607
        %v2610 = vunpack.c.l.s4 1983009808
        %v2611 = vunpack.c.0.s8 %v2610
        %v2612 = vlaneseq
        %v2613 = vshrl.u32 %v2612, 7
        %v2614 = vsub.s32 %v2611, %v2613
        %v2615 = vrot.slane %v2244, %v2614
        %v2616 = vcombine.low %v2243, %v2245
        %v2617 = vcombine.low %v2253, %v2261
        %v2619 = vunpack.c.l.s4 1983009808
        %v2620 = vunpack.c.0.s8 %v2619
        %v2621 = vlaneseq
        %v2622 = vshrl.u32 %v2621, 7
        %v2623 = vsub.s32 %v2620, %v2622
        %v2624 = vrot.slane %v2616, %v2623
        %v2626 = vunpack.c.l.s4 1983009808
        %v2627 = vunpack.c.0.s8 %v2626
        %v2628 = vlaneseq
        %v2629 = vshrl.u32 %v2628, 7
        %v2630 = vsub.s32 %v2627, %v2629
        %v2631 = vrot.slane %v2617, %v2630
        %v2632 = vcombine.low %v2624, %v2631
        %v2634 = vunpack.c.l.s4 1983009808
        %v2635 = vunpack.c.0.s8 %v2634
        %v2636 = vlaneseq
        %v2637 = vshrl.u32 %v2636, 7
        %v2638 = vsub.s32 %v2635, %v2637
        %v2639 = vrot.slane %v2260, %v2638
        %v2640 = vcombine.low %v2262, %v2270
        %v2641 = vcombine.low %v2278, %v2277
        %v2643 = vunpack.c.l.s4 1983009808
        %v2644 = vunpack.c.0.s8 %v2643
        %v2645 = vlaneseq
        %v2646 = vshrl.u32 %v2645, 7
        %v2647 = vsub.s32 %v2644, %v2646
        %v2648 = vrot.slane %v2640, %v2647
        %v2650 = vunpack.c.l.s4 1983009808
        %v2651 = vunpack.c.0.s8 %v2650
        %v2652 = vlaneseq
        %v2653 = vshrl.u32 %v2652, 7
        %v2654 = vsub.s32 %v2651, %v2653
        %v2655 = vrot.slane %v2641, %v2654
        %v2656 = vcombine.low %v2648, %v2655
        %v2658 = vunpack.c.l.s4 1983009808
        %v2659 = vunpack.c.0.s8 %v2658
        %v2660 = vlaneseq
        %v2661 = vshrl.u32 %v2660, 7
        %v2662 = vsub.s32 %v2659, %v2661
        %v2663 = vrot.slane %v2279, %v2662
        %v2696 = vpack.c.bf16 %v2303, %v2296
        %v2697 = vpack.c.bf16 %v2327, %v2320
        %v2698 = vpack.c.bf16 %v2351, %v2344
        %v2699 = vpack.c.bf16 %v2375, %v2368
        %v2700 = vpack.c.bf16 %v2399, %v2392
        %v2701 = vpack.c.bf16 %v2423, %v2416
        %v2702 = vpack.c.bf16 %v2447, %v2440
        %v2703 = vpack.c.bf16 %v2471, %v2464
        %v2704 = vpack.c.bf16 %v2495, %v2488
        %v2705 = vpack.c.bf16 %v2519, %v2512
        %v2706 = vpack.c.bf16 %v2543, %v2536
        %v2707 = vpack.c.bf16 %v2567, %v2560
        %v2708 = vpack.c.bf16 %v2591, %v2584
        %v2709 = vpack.c.bf16 %v2615, %v2608
        %v2710 = vpack.c.bf16 %v2639, %v2632
        %v2711 = vpack.c.bf16 %v2663, %v2656
        %v2713 = vshrl.u32 %v2696, 16
        %v2715 = vshll.u32 %v2696, 16
        %v2717 = vrot.slane %v2715, 1
        %v2718 = vor.u32 %v2713, %v2717
        %v2720 = vshrl.u32 %v2697, 16
        %v2722 = vshll.u32 %v2697, 16
        %v2724 = vrot.slane %v2722, 1
        %v2725 = vor.u32 %v2720, %v2724
        %v2727 = vshrl.u32 %v2698, 16
        %v2729 = vshll.u32 %v2698, 16
        %v2731 = vrot.slane %v2729, 1
        %v2732 = vor.u32 %v2727, %v2731
        %v2734 = vshrl.u32 %v2699, 16
        %v2736 = vshll.u32 %v2699, 16
        %v2738 = vrot.slane %v2736, 1
        %v2739 = vor.u32 %v2734, %v2738
        %v2741 = vshrl.u32 %v2700, 16
        %v2743 = vshll.u32 %v2700, 16
        %v2745 = vrot.slane %v2743, 1
        %v2746 = vor.u32 %v2741, %v2745
        %v2748 = vshrl.u32 %v2701, 16
        %v2750 = vshll.u32 %v2701, 16
        %v2752 = vrot.slane %v2750, 1
        %v2753 = vor.u32 %v2748, %v2752
        %v2755 = vshrl.u32 %v2702, 16
        %v2757 = vshll.u32 %v2702, 16
        %v2759 = vrot.slane %v2757, 1
        %v2760 = vor.u32 %v2755, %v2759
        %v2762 = vshrl.u32 %v2703, 16
        %v2764 = vshll.u32 %v2703, 16
        %v2766 = vrot.slane %v2764, 1
        %v2767 = vor.u32 %v2762, %v2766
        %v2769 = vshrl.u32 %v2704, 16
        %v2771 = vshll.u32 %v2704, 16
        %v2773 = vrot.slane %v2771, 1
        %v2774 = vor.u32 %v2769, %v2773
        %v2776 = vshrl.u32 %v2705, 16
        %v2778 = vshll.u32 %v2705, 16
        %v2780 = vrot.slane %v2778, 1
        %v2781 = vor.u32 %v2776, %v2780
        %v2783 = vshrl.u32 %v2706, 16
        %v2785 = vshll.u32 %v2706, 16
        %v2787 = vrot.slane %v2785, 1
        %v2788 = vor.u32 %v2783, %v2787
        %v2790 = vshrl.u32 %v2707, 16
        %v2792 = vshll.u32 %v2707, 16
        %v2794 = vrot.slane %v2792, 1
        %v2795 = vor.u32 %v2790, %v2794
        %v2797 = vshrl.u32 %v2708, 16
        %v2799 = vshll.u32 %v2708, 16
        %v2801 = vrot.slane %v2799, 1
        %v2802 = vor.u32 %v2797, %v2801
        %v2804 = vshrl.u32 %v2709, 16
        %v2806 = vshll.u32 %v2709, 16
        %v2808 = vrot.slane %v2806, 1
        %v2809 = vor.u32 %v2804, %v2808
        %v2811 = vshrl.u32 %v2710, 16
        %v2813 = vshll.u32 %v2710, 16
        %v2815 = vrot.slane %v2813, 1
        %v2816 = vor.u32 %v2811, %v2815
        %v2818 = vshrl.u32 %v2711, 16
        %v2820 = vshll.u32 %v2711, 16
        %v2822 = vrot.slane %v2820, 1
        %v2823 = vor.u32 %v2818, %v2822
        %2824 = vrot.lane.b32.xlu0 %v2718, 32
        %v2825 = vpop.permute.xlu0 %2824
        %2826 = vrot.lane.b32.xlu0 %v2725, 32
        %v2827 = vpop.permute.xlu0 %2826
        %2828 = vrot.lane.b32.xlu0 %v2732, 32
        %v2829 = vpop.permute.xlu0 %2828
        %2830 = vrot.lane.b32.xlu0 %v2739, 32
        %v2831 = vpop.permute.xlu0 %2830
        %2832 = vrot.lane.b32.xlu0 %v2746, 32
        %v2833 = vpop.permute.xlu0 %2832
        %2834 = vrot.lane.b32.xlu0 %v2753, 32
        %v2835 = vpop.permute.xlu0 %2834
        %2836 = vrot.lane.b32.xlu0 %v2760, 32
        %v2837 = vpop.permute.xlu0 %2836
        %2838 = vrot.lane.b32.xlu0 %v2767, 32
        %v2839 = vpop.permute.xlu0 %2838
        %2840 = vrot.lane.b32.xlu0 %v2774, 32
        %v2841 = vpop.permute.xlu0 %2840
        %2842 = vrot.lane.b32.xlu0 %v2781, 32
        %v2843 = vpop.permute.xlu0 %2842
        %2844 = vrot.lane.b32.xlu0 %v2788, 32
        %v2845 = vpop.permute.xlu0 %2844
        %2846 = vrot.lane.b32.xlu0 %v2795, 32
        %v2847 = vpop.permute.xlu0 %2846
        %2848 = vrot.lane.b32.xlu0 %v2802, 32
        %v2849 = vpop.permute.xlu0 %2848
        %2850 = vrot.lane.b32.xlu0 %v2809, 32
        %v2851 = vpop.permute.xlu0 %2850
        %2852 = vrot.lane.b32.xlu0 %v2816, 32
        %v2853 = vpop.permute.xlu0 %2852
        %2854 = vrot.lane.b32.xlu0 %v2823, 32
        %v2855 = vpop.permute.xlu0 %2854
        %v2872 = vrot.slane %v2696, 1
        %v2873 = vrot.slane %v2697, 1
        %v2874 = vrot.slane %v2698, 1
        %v2875 = vrot.slane %v2699, 1
        %v2876 = vrot.slane %v2700, 1
        %v2877 = vrot.slane %v2701, 1
        %v2878 = vrot.slane %v2702, 1
        %v2879 = vrot.slane %v2703, 1
        %v2880 = vrot.slane %v2704, 1
        %v2881 = vrot.slane %v2705, 1
        %v2882 = vrot.slane %v2706, 1
        %v2883 = vrot.slane %v2707, 1
        %v2884 = vrot.slane %v2708, 1
        %v2885 = vrot.slane %v2709, 1
        %v2886 = vrot.slane %v2710, 1
        %v2887 = vrot.slane %v2711, 1
        %2888 = vrot.lane.b32.xlu0 %v2872, 64
        %v2889 = vpop.permute.xlu0 %2888
        %2890 = vrot.lane.b32.xlu0 %v2873, 64
        %v2891 = vpop.permute.xlu0 %2890
        %2892 = vrot.lane.b32.xlu0 %v2874, 64
        %v2893 = vpop.permute.xlu0 %2892
        %2894 = vrot.lane.b32.xlu0 %v2875, 64
        %v2895 = vpop.permute.xlu0 %2894
        %2896 = vrot.lane.b32.xlu0 %v2876, 64
        %v2897 = vpop.permute.xlu0 %2896
        %2898 = vrot.lane.b32.xlu0 %v2877, 64
        %v2899 = vpop.permute.xlu0 %2898
        %2900 = vrot.lane.b32.xlu0 %v2878, 64
        %v2901 = vpop.permute.xlu0 %2900
        %2902 = vrot.lane.b32.xlu0 %v2879, 64
        %v2903 = vpop.permute.xlu0 %2902
        %2904 = vrot.lane.b32.xlu0 %v2880, 64
        %v2905 = vpop.permute.xlu0 %2904
        %2906 = vrot.lane.b32.xlu0 %v2881, 64
        %v2907 = vpop.permute.xlu0 %2906
        %2908 = vrot.lane.b32.xlu0 %v2882, 64
        %v2909 = vpop.permute.xlu0 %2908
        %2910 = vrot.lane.b32.xlu0 %v2883, 64
        %v2911 = vpop.permute.xlu0 %2910
        %2912 = vrot.lane.b32.xlu0 %v2884, 64
        %v2913 = vpop.permute.xlu0 %2912
        %2914 = vrot.lane.b32.xlu0 %v2885, 64
        %v2915 = vpop.permute.xlu0 %2914
        %2916 = vrot.lane.b32.xlu0 %v2886, 64
        %v2917 = vpop.permute.xlu0 %2916
        %2918 = vrot.lane.b32.xlu0 %v2887, 64
        %v2919 = vpop.permute.xlu0 %2918
        %v2920 = vrot.slane %v2713, 1
        %v2921 = vrot.slane %v2715, 2
        %v2922 = vor.u32 %v2920, %v2921
        %v2923 = vrot.slane %v2720, 1
        %v2924 = vrot.slane %v2722, 2
        %v2925 = vor.u32 %v2923, %v2924
        %v2926 = vrot.slane %v2727, 1
        %v2927 = vrot.slane %v2729, 2
        %v2928 = vor.u32 %v2926, %v2927
        %v2929 = vrot.slane %v2734, 1
        %v2930 = vrot.slane %v2736, 2
        %v2931 = vor.u32 %v2929, %v2930
        %v2932 = vrot.slane %v2741, 1
        %v2933 = vrot.slane %v2743, 2
        %v2934 = vor.u32 %v2932, %v2933
        %v2935 = vrot.slane %v2748, 1
        %v2936 = vrot.slane %v2750, 2
        %v2937 = vor.u32 %v2935, %v2936
        %v2938 = vrot.slane %v2755, 1
        %v2939 = vrot.slane %v2757, 2
        %v2940 = vor.u32 %v2938, %v2939
        %v2941 = vrot.slane %v2762, 1
        %v2942 = vrot.slane %v2764, 2
        %v2943 = vor.u32 %v2941, %v2942
        %v2944 = vrot.slane %v2769, 1
        %v2945 = vrot.slane %v2771, 2
        %v2946 = vor.u32 %v2944, %v2945
        %v2947 = vrot.slane %v2776, 1
        %v2948 = vrot.slane %v2778, 2
        %v2949 = vor.u32 %v2947, %v2948
        %v2950 = vrot.slane %v2783, 1
        %v2951 = vrot.slane %v2785, 2
        %v2952 = vor.u32 %v2950, %v2951
        %v2953 = vrot.slane %v2790, 1
        %v2954 = vrot.slane %v2792, 2
        %v2955 = vor.u32 %v2953, %v2954
        %v2956 = vrot.slane %v2797, 1
        %v2957 = vrot.slane %v2799, 2
        %v2958 = vor.u32 %v2956, %v2957
        %v2959 = vrot.slane %v2804, 1
        %v2960 = vrot.slane %v2806, 2
        %v2961 = vor.u32 %v2959, %v2960
        %v2962 = vrot.slane %v2811, 1
        %v2963 = vrot.slane %v2813, 2
        %v2964 = vor.u32 %v2962, %v2963
        %v2965 = vrot.slane %v2818, 1
        %v2966 = vrot.slane %v2820, 2
        %v2967 = vor.u32 %v2965, %v2966
        %2968 = vrot.lane.b32.xlu0 %v2922, 96
        %v2969 = vpop.permute.xlu0 %2968
        %2970 = vrot.lane.b32.xlu0 %v2925, 96
        %v2971 = vpop.permute.xlu0 %2970
        %2972 = vrot.lane.b32.xlu0 %v2928, 96
        %v2973 = vpop.permute.xlu0 %2972
        %2974 = vrot.lane.b32.xlu0 %v2931, 96
        %v2975 = vpop.permute.xlu0 %2974
        %2976 = vrot.lane.b32.xlu0 %v2934, 96
        %v2977 = vpop.permute.xlu0 %2976
        %2978 = vrot.lane.b32.xlu0 %v2937, 96
        %v2979 = vpop.permute.xlu0 %2978
        %2980 = vrot.lane.b32.xlu0 %v2940, 96
        %v2981 = vpop.permute.xlu0 %2980
        %2982 = vrot.lane.b32.xlu0 %v2943, 96
        %v2983 = vpop.permute.xlu0 %2982
        %2984 = vrot.lane.b32.xlu0 %v2946, 96
        %v2985 = vpop.permute.xlu0 %2984
        %2986 = vrot.lane.b32.xlu0 %v2949, 96
        %v2987 = vpop.permute.xlu0 %2986
        %2988 = vrot.lane.b32.xlu0 %v2952, 96
        %v2989 = vpop.permute.xlu0 %2988
        %2990 = vrot.lane.b32.xlu0 %v2955, 96
        %v2991 = vpop.permute.xlu0 %2990
        %2992 = vrot.lane.b32.xlu0 %v2958, 96
        %v2993 = vpop.permute.xlu0 %2992
        %2994 = vrot.lane.b32.xlu0 %v2961, 96
        %v2995 = vpop.permute.xlu0 %2994
        %2996 = vrot.lane.b32.xlu0 %v2964, 96
        %v2997 = vpop.permute.xlu0 %2996
        %2998 = vrot.lane.b32.xlu0 %v2967, 96
        %v2999 = vpop.permute.xlu0 %2998
        %v3000 = vrot.slane %v2696, 2
        %v3001 = vrot.slane %v2697, 2
        %v3002 = vrot.slane %v2698, 2
        %v3003 = vrot.slane %v2699, 2
        %v3004 = vrot.slane %v2700, 2
        %v3005 = vrot.slane %v2701, 2
        %v3006 = vrot.slane %v2702, 2
        %v3007 = vrot.slane %v2703, 2
        %v3008 = vrot.slane %v2704, 2
        %v3009 = vrot.slane %v2705, 2
        %v3010 = vrot.slane %v2706, 2
        %v3011 = vrot.slane %v2707, 2
        %v3012 = vrot.slane %v2708, 2
        %v3013 = vrot.slane %v2709, 2
        %v3014 = vrot.slane %v2710, 2
        %v3015 = vrot.slane %v2711, 2
        %vm3016 = vcmask 261120
        %v3018 = vsel %vm3016, %v2696, %v2825
        %v3020 = vsel %vm3016, %v2697, %v2827
        %v3022 = vsel %vm3016, %v2698, %v2829
        %v3024 = vsel %vm3016, %v2699, %v2831
        %v3026 = vsel %vm3016, %v2700, %v2833
        %v3028 = vsel %vm3016, %v2701, %v2835
        %v3030 = vsel %vm3016, %v2702, %v2837
        %v3032 = vsel %vm3016, %v2703, %v2839
        %v3034 = vsel %vm3016, %v2704, %v2841
        %v3036 = vsel %vm3016, %v2705, %v2843
        %v3038 = vsel %vm3016, %v2706, %v2845
        %v3040 = vsel %vm3016, %v2707, %v2847
        %v3042 = vsel %vm3016, %v2708, %v2849
        %v3044 = vsel %vm3016, %v2709, %v2851
        %v3046 = vsel %vm3016, %v2710, %v2853
        %v3048 = vsel %vm3016, %v2711, %v2855
        %vm3049 = vcmask 523264
        %v3051 = vsel %vm3049, %v3018, %v2889
        %v3053 = vsel %vm3049, %v3020, %v2891
        %v3055 = vsel %vm3049, %v3022, %v2893
        %v3057 = vsel %vm3049, %v3024, %v2895
        %v3059 = vsel %vm3049, %v3026, %v2897
        %v3061 = vsel %vm3049, %v3028, %v2899
        %v3063 = vsel %vm3049, %v3030, %v2901
        %v3065 = vsel %vm3049, %v3032, %v2903
        %v3067 = vsel %vm3049, %v3034, %v2905
        %v3069 = vsel %vm3049, %v3036, %v2907
        %v3071 = vsel %vm3049, %v3038, %v2909
        %v3073 = vsel %vm3049, %v3040, %v2911
        %v3075 = vsel %vm3049, %v3042, %v2913
        %v3077 = vsel %vm3049, %v3044, %v2915
        %v3079 = vsel %vm3049, %v3046, %v2917
        %v3081 = vsel %vm3049, %v3048, %v2919
        %vm3082 = vcmask 785408
        %v3084 = vsel %vm3082, %v3051, %v2969
        %v3086 = vsel %vm3082, %v3053, %v2971
        %v3088 = vsel %vm3082, %v3055, %v2973
        %v3090 = vsel %vm3082, %v3057, %v2975
        %v3092 = vsel %vm3082, %v3059, %v2977
        %v3094 = vsel %vm3082, %v3061, %v2979
        %v3096 = vsel %vm3082, %v3063, %v2981
        %v3098 = vsel %vm3082, %v3065, %v2983
        %v3100 = vsel %vm3082, %v3067, %v2985
        %v3102 = vsel %vm3082, %v3069, %v2987
        %v3104 = vsel %vm3082, %v3071, %v2989
        %v3106 = vsel %vm3082, %v3073, %v2991
        %v3108 = vsel %vm3082, %v3075, %v2993
        %v3110 = vsel %vm3082, %v3077, %v2995
        %v3112 = vsel %vm3082, %v3079, %v2997
        %v3114 = vsel %vm3082, %v3081, %v2999
        %v3115 = vld [vmem:[%s2] sm:$0xf]
        %v3116 = vld [vmem:[%s2 + $0x4] sm:$0xf]
        %v3117 = vld [vmem:[%s2 + $0x8] sm:$0xf]
        %v3118 = vld [vmem:[%s2 + $0xc] sm:$0xf]
        %v3119 = vld [vmem:[%s2 + $0x10] sm:$0xf]
        %v3120 = vld [vmem:[%s2 + $0x14] sm:$0xf]
        %v3121 = vld [vmem:[%s2 + $0x18] sm:$0xf]
        %v3122 = vld [vmem:[%s2 + $0x1c] sm:$0xf]
        %v3123 = vld [vmem:[%s2 + $0x20] sm:$0xf]
        %v3124 = vld [vmem:[%s2 + $0x24] sm:$0xf]
        %v3125 = vld [vmem:[%s2 + $0x28] sm:$0xf]
        %v3126 = vld [vmem:[%s2 + $0x2c] sm:$0xf]
        %v3127 = vld [vmem:[%s2 + $0x30] sm:$0xf]
        %v3128 = vld [vmem:[%s2 + $0x34] sm:$0xf]
        %v3129 = vld [vmem:[%s2 + $0x38] sm:$0xf]
        %v3130 = vld [vmem:[%s2 + $0x3c] sm:$0xf]
        %v3131 = vld [vmem:[%s2 + $0x40] sm:$0xf]
        %v3132 = vld [vmem:[%s2 + $0x44] sm:$0xf]
        %v3133 = vld [vmem:[%s2 + $0x48] sm:$0xf]
        %v3134 = vld [vmem:[%s2 + $0x4c] sm:$0xf]
        %v3135 = vld [vmem:[%s4] sm:$0x3f]
        %v3152 = vcombine.low %v3084, %v3000
        %v3154 = vunpack.c.l.s4 1966171168
        %v3155 = vunpack.c.0.s8 %v3154
        %v3156 = vlaneseq
        %v3157 = vshrl.u32 %v3156, 7
        %v3158 = vsub.s32 %v3155, %v3157
        %v3159 = vrot.slane %v3152, %v3158
        %v3160 = vcombine.high %v3159, %v3159
        %v3162 = vunpack.c.l.s4 1966171168
        %v3163 = vunpack.c.0.s8 %v3162
        %v3164 = vlaneseq
        %v3165 = vshrl.u32 %v3164, 7
        %v3166 = vsub.s32 %v3163, %v3165
        %v3167 = vrot.slane %v3159, %v3166
        %v3169 = vunpack.c.l.s4 1966171168
        %v3170 = vunpack.c.0.s8 %v3169
        %v3171 = vlaneseq
        %v3172 = vshrl.u32 %v3171, 7
        %v3173 = vsub.s32 %v3170, %v3172
        %v3174 = vrot.slane %v3160, %v3173
        %v3175 = vcombine.high %v3167, %v3167
        %v3176 = vcombine.low %v3086, %v3001
        %v3178 = vunpack.c.l.s4 1966171168
        %v3179 = vunpack.c.0.s8 %v3178
        %v3180 = vlaneseq
        %v3181 = vshrl.u32 %v3180, 7
        %v3182 = vsub.s32 %v3179, %v3181
        %v3183 = vrot.slane %v3176, %v3182
        %v3184 = vcombine.high %v3183, %v3183
        %v3186 = vunpack.c.l.s4 1966171168
        %v3187 = vunpack.c.0.s8 %v3186
        %v3188 = vlaneseq
        %v3189 = vshrl.u32 %v3188, 7
        %v3190 = vsub.s32 %v3187, %v3189
        %v3191 = vrot.slane %v3183, %v3190
        %v3193 = vunpack.c.l.s4 1966171168
        %v3194 = vunpack.c.0.s8 %v3193
        %v3195 = vlaneseq
        %v3196 = vshrl.u32 %v3195, 7
        %v3197 = vsub.s32 %v3194, %v3196
        %v3198 = vrot.slane %v3184, %v3197
        %v3199 = vcombine.high %v3191, %v3191
        %v3200 = vcombine.low %v3088, %v3002
        %v3202 = vunpack.c.l.s4 1966171168
        %v3203 = vunpack.c.0.s8 %v3202
        %v3204 = vlaneseq
        %v3205 = vshrl.u32 %v3204, 7
        %v3206 = vsub.s32 %v3203, %v3205
        %v3207 = vrot.slane %v3200, %v3206
        %v3208 = vcombine.high %v3207, %v3207
        %v3210 = vunpack.c.l.s4 1966171168
        %v3211 = vunpack.c.0.s8 %v3210
        %v3212 = vlaneseq
        %v3213 = vshrl.u32 %v3212, 7
        %v3214 = vsub.s32 %v3211, %v3213
        %v3215 = vrot.slane %v3207, %v3214
        %v3217 = vunpack.c.l.s4 1966171168
        %v3218 = vunpack.c.0.s8 %v3217
        %v3219 = vlaneseq
        %v3220 = vshrl.u32 %v3219, 7
        %v3221 = vsub.s32 %v3218, %v3220
        %v3222 = vrot.slane %v3208, %v3221
        %v3223 = vcombine.high %v3215, %v3215
        %v3224 = vcombine.low %v3090, %v3003
        %v3226 = vunpack.c.l.s4 1966171168
        %v3227 = vunpack.c.0.s8 %v3226
        %v3228 = vlaneseq
        %v3229 = vshrl.u32 %v3228, 7
        %v3230 = vsub.s32 %v3227, %v3229
        %v3231 = vrot.slane %v3224, %v3230
        %v3232 = vcombine.high %v3231, %v3231
        %v3234 = vunpack.c.l.s4 1966171168
        %v3235 = vunpack.c.0.s8 %v3234
        %v3236 = vlaneseq
        %v3237 = vshrl.u32 %v3236, 7
        %v3238 = vsub.s32 %v3235, %v3237
        %v3239 = vrot.slane %v3231, %v3238
        %v3241 = vunpack.c.l.s4 1966171168
        %v3242 = vunpack.c.0.s8 %v3241
        %v3243 = vlaneseq
        %v3244 = vshrl.u32 %v3243, 7
        %v3245 = vsub.s32 %v3242, %v3244
        %v3246 = vrot.slane %v3232, %v3245
        %v3247 = vcombine.high %v3239, %v3239
        %v3248 = vcombine.low %v3092, %v3004
        %v3250 = vunpack.c.l.s4 1966171168
        %v3251 = vunpack.c.0.s8 %v3250
        %v3252 = vlaneseq
        %v3253 = vshrl.u32 %v3252, 7
        %v3254 = vsub.s32 %v3251, %v3253
        %v3255 = vrot.slane %v3248, %v3254
        %v3256 = vcombine.high %v3255, %v3255
        %v3258 = vunpack.c.l.s4 1966171168
        %v3259 = vunpack.c.0.s8 %v3258
        %v3260 = vlaneseq
        %v3261 = vshrl.u32 %v3260, 7
        %v3262 = vsub.s32 %v3259, %v3261
        %v3263 = vrot.slane %v3255, %v3262
        %v3265 = vunpack.c.l.s4 1966171168
        %v3266 = vunpack.c.0.s8 %v3265
        %v3267 = vlaneseq
        %v3268 = vshrl.u32 %v3267, 7
        %v3269 = vsub.s32 %v3266, %v3268
        %v3270 = vrot.slane %v3256, %v3269
        %v3271 = vcombine.high %v3263, %v3263
        %v3272 = vcombine.low %v3094, %v3005
        %v3274 = vunpack.c.l.s4 1966171168
        %v3275 = vunpack.c.0.s8 %v3274
        %v3276 = vlaneseq
        %v3277 = vshrl.u32 %v3276, 7
        %v3278 = vsub.s32 %v3275, %v3277
        %v3279 = vrot.slane %v3272, %v3278
        %v3280 = vcombine.high %v3279, %v3279
        %v3282 = vunpack.c.l.s4 1966171168
        %v3283 = vunpack.c.0.s8 %v3282
        %v3284 = vlaneseq
        %v3285 = vshrl.u32 %v3284, 7
        %v3286 = vsub.s32 %v3283, %v3285
        %v3287 = vrot.slane %v3279, %v3286
        %v3289 = vunpack.c.l.s4 1966171168
        %v3290 = vunpack.c.0.s8 %v3289
        %v3291 = vlaneseq
        %v3292 = vshrl.u32 %v3291, 7
        %v3293 = vsub.s32 %v3290, %v3292
        %v3294 = vrot.slane %v3280, %v3293
        %v3295 = vcombine.high %v3287, %v3287
        %v3296 = vcombine.low %v3096, %v3006
        %v3298 = vunpack.c.l.s4 1966171168
        %v3299 = vunpack.c.0.s8 %v3298
        %v3300 = vlaneseq
        %v3301 = vshrl.u32 %v3300, 7
        %v3302 = vsub.s32 %v3299, %v3301
        %v3303 = vrot.slane %v3296, %v3302
        %v3304 = vcombine.high %v3303, %v3303
        %v3306 = vunpack.c.l.s4 1966171168
        %v3307 = vunpack.c.0.s8 %v3306
        %v3308 = vlaneseq
        %v3309 = vshrl.u32 %v3308, 7
        %v3310 = vsub.s32 %v3307, %v3309
        %v3311 = vrot.slane %v3303, %v3310
        %v3313 = vunpack.c.l.s4 1966171168
        %v3314 = vunpack.c.0.s8 %v3313
        %v3315 = vlaneseq
        %v3316 = vshrl.u32 %v3315, 7
        %v3317 = vsub.s32 %v3314, %v3316
        %v3318 = vrot.slane %v3304, %v3317
        %v3319 = vcombine.high %v3311, %v3311
        %v3320 = vcombine.low %v3098, %v3007
        %v3322 = vunpack.c.l.s4 1966171168
        %v3323 = vunpack.c.0.s8 %v3322
        %v3324 = vlaneseq
        %v3325 = vshrl.u32 %v3324, 7
        %v3326 = vsub.s32 %v3323, %v3325
        %v3327 = vrot.slane %v3320, %v3326
        %v3328 = vcombine.high %v3327, %v3327
        %v3330 = vunpack.c.l.s4 1966171168
        %v3331 = vunpack.c.0.s8 %v3330
        %v3332 = vlaneseq
        %v3333 = vshrl.u32 %v3332, 7
        %v3334 = vsub.s32 %v3331, %v3333
        %v3335 = vrot.slane %v3327, %v3334
        %v3337 = vunpack.c.l.s4 1966171168
        %v3338 = vunpack.c.0.s8 %v3337
        %v3339 = vlaneseq
        %v3340 = vshrl.u32 %v3339, 7
        %v3341 = vsub.s32 %v3338, %v3340
        %v3342 = vrot.slane %v3328, %v3341
        %v3343 = vcombine.high %v3335, %v3335
        %v3344 = vcombine.low %v3100, %v3008
        %v3346 = vunpack.c.l.s4 1966171168
        %v3347 = vunpack.c.0.s8 %v3346
        %v3348 = vlaneseq
        %v3349 = vshrl.u32 %v3348, 7
        %v3350 = vsub.s32 %v3347, %v3349
        %v3351 = vrot.slane %v3344, %v3350
        %v3352 = vcombine.high %v3351, %v3351
        %v3354 = vunpack.c.l.s4 1966171168
        %v3355 = vunpack.c.0.s8 %v3354
        %v3356 = vlaneseq
        %v3357 = vshrl.u32 %v3356, 7
        %v3358 = vsub.s32 %v3355, %v3357
        %v3359 = vrot.slane %v3351, %v3358
        %v3361 = vunpack.c.l.s4 1966171168
        %v3362 = vunpack.c.0.s8 %v3361
        %v3363 = vlaneseq
        %v3364 = vshrl.u32 %v3363, 7
        %v3365 = vsub.s32 %v3362, %v3364
        %v3366 = vrot.slane %v3352, %v3365
        %v3367 = vcombine.high %v3359, %v3359
        %v3368 = vcombine.low %v3102, %v3009
        %v3370 = vunpack.c.l.s4 1966171168
        %v3371 = vunpack.c.0.s8 %v3370
        %v3372 = vlaneseq
        %v3373 = vshrl.u32 %v3372, 7
        %v3374 = vsub.s32 %v3371, %v3373
        %v3375 = vrot.slane %v3368, %v3374
        %v3376 = vcombine.high %v3375, %v3375
        %v3378 = vunpack.c.l.s4 1966171168
        %v3379 = vunpack.c.0.s8 %v3378
        %v3380 = vlaneseq
        %v3381 = vshrl.u32 %v3380, 7
        %v3382 = vsub.s32 %v3379, %v3381
        %v3383 = vrot.slane %v3375, %v3382
        %v3385 = vunpack.c.l.s4 1966171168
        %v3386 = vunpack.c.0.s8 %v3385
        %v3387 = vlaneseq
        %v3388 = vshrl.u32 %v3387, 7
        %v3389 = vsub.s32 %v3386, %v3388
        %v3390 = vrot.slane %v3376, %v3389
        %v3391 = vcombine.high %v3383, %v3383
        %v3392 = vcombine.low %v3104, %v3010
        %v3394 = vunpack.c.l.s4 1966171168
        %v3395 = vunpack.c.0.s8 %v3394
        %v3396 = vlaneseq
        %v3397 = vshrl.u32 %v3396, 7
        %v3398 = vsub.s32 %v3395, %v3397
        %v3399 = vrot.slane %v3392, %v3398
        %v3400 = vcombine.high %v3399, %v3399
        %v3402 = vunpack.c.l.s4 1966171168
        %v3403 = vunpack.c.0.s8 %v3402
        %v3404 = vlaneseq
        %v3405 = vshrl.u32 %v3404, 7
        %v3406 = vsub.s32 %v3403, %v3405
        %v3407 = vrot.slane %v3399, %v3406
        %v3409 = vunpack.c.l.s4 1966171168
        %v3410 = vunpack.c.0.s8 %v3409
        %v3411 = vlaneseq
        %v3412 = vshrl.u32 %v3411, 7
        %v3413 = vsub.s32 %v3410, %v3412
        %v3414 = vrot.slane %v3400, %v3413
        %v3415 = vcombine.high %v3407, %v3407
        %v3416 = vcombine.low %v3106, %v3011
        %v3418 = vunpack.c.l.s4 1966171168
        %v3419 = vunpack.c.0.s8 %v3418
        %v3420 = vlaneseq
        %v3421 = vshrl.u32 %v3420, 7
        %v3422 = vsub.s32 %v3419, %v3421
        %v3423 = vrot.slane %v3416, %v3422
        %v3424 = vcombine.high %v3423, %v3423
        %v3426 = vunpack.c.l.s4 1966171168
        %v3427 = vunpack.c.0.s8 %v3426
        %v3428 = vlaneseq
        %v3429 = vshrl.u32 %v3428, 7
        %v3430 = vsub.s32 %v3427, %v3429
        %v3431 = vrot.slane %v3423, %v3430
        %v3433 = vunpack.c.l.s4 1966171168
        %v3434 = vunpack.c.0.s8 %v3433
        %v3435 = vlaneseq
        %v3436 = vshrl.u32 %v3435, 7
        %v3437 = vsub.s32 %v3434, %v3436
        %v3438 = vrot.slane %v3424, %v3437
        %v3439 = vcombine.high %v3431, %v3431
        %v3440 = vcombine.low %v3108, %v3012
        %v3442 = vunpack.c.l.s4 1966171168
        %v3443 = vunpack.c.0.s8 %v3442
        %v3444 = vlaneseq
        %v3445 = vshrl.u32 %v3444, 7
        %v3446 = vsub.s32 %v3443, %v3445
        %v3447 = vrot.slane %v3440, %v3446
        %v3448 = vcombine.high %v3447, %v3447
        %v3450 = vunpack.c.l.s4 1966171168
        %v3451 = vunpack.c.0.s8 %v3450
        %v3452 = vlaneseq
        %v3453 = vshrl.u32 %v3452, 7
        %v3454 = vsub.s32 %v3451, %v3453
        %v3455 = vrot.slane %v3447, %v3454
        %v3457 = vunpack.c.l.s4 1966171168
        %v3458 = vunpack.c.0.s8 %v3457
        %v3459 = vlaneseq
        %v3460 = vshrl.u32 %v3459, 7
        %v3461 = vsub.s32 %v3458, %v3460
        %v3462 = vrot.slane %v3448, %v3461
        %v3463 = vcombine.high %v3455, %v3455
        %v3464 = vcombine.low %v3110, %v3013
        %v3466 = vunpack.c.l.s4 1966171168
        %v3467 = vunpack.c.0.s8 %v3466
        %v3468 = vlaneseq
        %v3469 = vshrl.u32 %v3468, 7
        %v3470 = vsub.s32 %v3467, %v3469
        %v3471 = vrot.slane %v3464, %v3470
        %v3472 = vcombine.high %v3471, %v3471
        %v3474 = vunpack.c.l.s4 1966171168
        %v3475 = vunpack.c.0.s8 %v3474
        %v3476 = vlaneseq
        %v3477 = vshrl.u32 %v3476, 7
        %v3478 = vsub.s32 %v3475, %v3477
        %v3479 = vrot.slane %v3471, %v3478
        %v3481 = vunpack.c.l.s4 1966171168
        %v3482 = vunpack.c.0.s8 %v3481
        %v3483 = vlaneseq
        %v3484 = vshrl.u32 %v3483, 7
        %v3485 = vsub.s32 %v3482, %v3484
        %v3486 = vrot.slane %v3472, %v3485
        %v3487 = vcombine.high %v3479, %v3479
        %v3488 = vcombine.low %v3112, %v3014
        %v3490 = vunpack.c.l.s4 1966171168
        %v3491 = vunpack.c.0.s8 %v3490
        %v3492 = vlaneseq
        %v3493 = vshrl.u32 %v3492, 7
        %v3494 = vsub.s32 %v3491, %v3493
        %v3495 = vrot.slane %v3488, %v3494
        %v3496 = vcombine.high %v3495, %v3495
        %v3498 = vunpack.c.l.s4 1966171168
        %v3499 = vunpack.c.0.s8 %v3498
        %v3500 = vlaneseq
        %v3501 = vshrl.u32 %v3500, 7
        %v3502 = vsub.s32 %v3499, %v3501
        %v3503 = vrot.slane %v3495, %v3502
        %v3505 = vunpack.c.l.s4 1966171168
        %v3506 = vunpack.c.0.s8 %v3505
        %v3507 = vlaneseq
        %v3508 = vshrl.u32 %v3507, 7
        %v3509 = vsub.s32 %v3506, %v3508
        %v3510 = vrot.slane %v3496, %v3509
        %v3511 = vcombine.high %v3503, %v3503
        %v3512 = vcombine.low %v3114, %v3015
        %v3514 = vunpack.c.l.s4 1966171168
        %v3515 = vunpack.c.0.s8 %v3514
        %v3516 = vlaneseq
        %v3517 = vshrl.u32 %v3516, 7
        %v3518 = vsub.s32 %v3515, %v3517
        %v3519 = vrot.slane %v3512, %v3518
        %v3520 = vcombine.high %v3519, %v3519
        %v3522 = vunpack.c.l.s4 1966171168
        %v3523 = vunpack.c.0.s8 %v3522
        %v3524 = vlaneseq
        %v3525 = vshrl.u32 %v3524, 7
        %v3526 = vsub.s32 %v3523, %v3525
        %v3527 = vrot.slane %v3519, %v3526
        %v3529 = vunpack.c.l.s4 1966171168
        %v3530 = vunpack.c.0.s8 %v3529
        %v3531 = vlaneseq
        %v3532 = vshrl.u32 %v3531, 7
        %v3533 = vsub.s32 %v3530, %v3532
        %v3534 = vrot.slane %v3520, %v3533
        %v3535 = vcombine.high %v3527, %v3527
        %v3537 = vcombine.high %v3135, %v3135
        %v3539 = vunpack.c.l.s4 1983009808
        %v3540 = vunpack.c.0.s8 %v3539
        %v3541 = vlaneseq
        %v3542 = vshrl.u32 %v3541, 7
        %v3543 = vsub.s32 %v3540, %v3542
        %v3544 = vrot.slane %v3135, %v3543
        %v3546 = vunpack.c.l.s4 1983009808
        %v3547 = vunpack.c.0.s8 %v3546
        %v3548 = vlaneseq
        %v3549 = vshrl.u32 %v3548, 7
        %v3550 = vsub.s32 %v3547, %v3549
        %v3551 = vrot.slane %v3537, %v3550
        %v3552 = vcombine.high %v3544, %v3544
        %v3553 = vcombine.low %v3167, %v3174
        %v3554 = vcombine.low %v3175, %v3191
        %v3555 = vcombine.low %v3198, %v3199
        %v3556 = vcombine.low %v3215, %v3222
        %v3558 = vunpack.c.l.s4 1966171168
        %v3559 = vunpack.c.0.s8 %v3558
        %v3560 = vlaneseq
        %v3561 = vshrl.u32 %v3560, 7
        %v3562 = vsub.s32 %v3559, %v3561
        %v3563 = vrot.slane %v3553, %v3562
        %v3565 = vunpack.c.l.s4 1966171168
        %v3566 = vunpack.c.0.s8 %v3565
        %v3567 = vlaneseq
        %v3568 = vshrl.u32 %v3567, 7
        %v3569 = vsub.s32 %v3566, %v3568
        %v3570 = vrot.slane %v3554, %v3569
        %v3572 = vunpack.c.l.s4 1966171168
        %v3573 = vunpack.c.0.s8 %v3572
        %v3574 = vlaneseq
        %v3575 = vshrl.u32 %v3574, 7
        %v3576 = vsub.s32 %v3573, %v3575
        %v3577 = vrot.slane %v3555, %v3576
        %v3579 = vunpack.c.l.s4 1966171168
        %v3580 = vunpack.c.0.s8 %v3579
        %v3581 = vlaneseq
        %v3582 = vshrl.u32 %v3581, 7
        %v3583 = vsub.s32 %v3580, %v3582
        %v3584 = vrot.slane %v3556, %v3583
        %v3585 = vcombine.low %v3563, %v3570
        %v3586 = vcombine.high %v3563, %v3570
        %v3587 = vcombine.low %v3577, %v3584
        %v3588 = vcombine.high %v3577, %v3584
        %v3590 = vunpack.c.l.s4 1966171168
        %v3591 = vunpack.c.0.s8 %v3590
        %v3592 = vlaneseq
        %v3593 = vshrl.u32 %v3592, 7
        %v3594 = vsub.s32 %v3591, %v3593
        %v3595 = vrot.slane %v3585, %v3594
        %v3597 = vunpack.c.l.s4 1966171168
        %v3598 = vunpack.c.0.s8 %v3597
        %v3599 = vlaneseq
        %v3600 = vshrl.u32 %v3599, 7
        %v3601 = vsub.s32 %v3598, %v3600
        %v3602 = vrot.slane %v3586, %v3601
        %v3604 = vunpack.c.l.s4 1966171168
        %v3605 = vunpack.c.0.s8 %v3604
        %v3606 = vlaneseq
        %v3607 = vshrl.u32 %v3606, 7
        %v3608 = vsub.s32 %v3605, %v3607
        %v3609 = vrot.slane %v3587, %v3608
        %v3611 = vunpack.c.l.s4 1966171168
        %v3612 = vunpack.c.0.s8 %v3611
        %v3613 = vlaneseq
        %v3614 = vshrl.u32 %v3613, 7
        %v3615 = vsub.s32 %v3612, %v3614
        %v3616 = vrot.slane %v3588, %v3615
        %v3617 = vcombine.low %v3595, %v3609
        %v3618 = vcombine.low %v3602, %v3616
        %v3619 = vcombine.low %v3223, %v3239
        %v3620 = vcombine.low %v3246, %v3247
        %v3621 = vcombine.low %v3263, %v3270
        %v3622 = vcombine.low %v3271, %v3287
        %v3624 = vunpack.c.l.s4 1966171168
        %v3625 = vunpack.c.0.s8 %v3624
        %v3626 = vlaneseq
        %v3627 = vshrl.u32 %v3626, 7
        %v3628 = vsub.s32 %v3625, %v3627
        %v3629 = vrot.slane %v3619, %v3628
        %v3631 = vunpack.c.l.s4 1966171168
        %v3632 = vunpack.c.0.s8 %v3631
        %v3633 = vlaneseq
        %v3634 = vshrl.u32 %v3633, 7
        %v3635 = vsub.s32 %v3632, %v3634
        %v3636 = vrot.slane %v3620, %v3635
        %v3638 = vunpack.c.l.s4 1966171168
        %v3639 = vunpack.c.0.s8 %v3638
        %v3640 = vlaneseq
        %v3641 = vshrl.u32 %v3640, 7
        %v3642 = vsub.s32 %v3639, %v3641
        %v3643 = vrot.slane %v3621, %v3642
        %v3645 = vunpack.c.l.s4 1966171168
        %v3646 = vunpack.c.0.s8 %v3645
        %v3647 = vlaneseq
        %v3648 = vshrl.u32 %v3647, 7
        %v3649 = vsub.s32 %v3646, %v3648
        %v3650 = vrot.slane %v3622, %v3649
        %v3651 = vcombine.low %v3629, %v3636
        %v3652 = vcombine.high %v3629, %v3636
        %v3653 = vcombine.low %v3643, %v3650
        %v3654 = vcombine.high %v3643, %v3650
        %v3656 = vunpack.c.l.s4 1966171168
        %v3657 = vunpack.c.0.s8 %v3656
        %v3658 = vlaneseq
        %v3659 = vshrl.u32 %v3658, 7
        %v3660 = vsub.s32 %v3657, %v3659
        %v3661 = vrot.slane %v3651, %v3660
        %v3663 = vunpack.c.l.s4 1966171168
        %v3664 = vunpack.c.0.s8 %v3663
        %v3665 = vlaneseq
        %v3666 = vshrl.u32 %v3665, 7
        %v3667 = vsub.s32 %v3664, %v3666
        %v3668 = vrot.slane %v3652, %v3667
        %v3670 = vunpack.c.l.s4 1966171168
        %v3671 = vunpack.c.0.s8 %v3670
        %v3672 = vlaneseq
        %v3673 = vshrl.u32 %v3672, 7
        %v3674 = vsub.s32 %v3671, %v3673
        %v3675 = vrot.slane %v3653, %v3674
        %v3677 = vunpack.c.l.s4 1966171168
        %v3678 = vunpack.c.0.s8 %v3677
        %v3679 = vlaneseq
        %v3680 = vshrl.u32 %v3679, 7
        %v3681 = vsub.s32 %v3678, %v3680
        %v3682 = vrot.slane %v3654, %v3681
        %v3683 = vcombine.low %v3661, %v3675
        %v3684 = vcombine.low %v3668, %v3682
        %v3685 = vcombine.low %v3294, %v3295
        %v3686 = vcombine.low %v3311, %v3318
        %v3687 = vcombine.low %v3319, %v3335
        %v3688 = vcombine.low %v3342, %v3343
        %v3690 = vunpack.c.l.s4 1966171168
        %v3691 = vunpack.c.0.s8 %v3690
        %v3692 = vlaneseq
        %v3693 = vshrl.u32 %v3692, 7
        %v3694 = vsub.s32 %v3691, %v3693
        %v3695 = vrot.slane %v3685, %v3694
        %v3697 = vunpack.c.l.s4 1966171168
        %v3698 = vunpack.c.0.s8 %v3697
        %v3699 = vlaneseq
        %v3700 = vshrl.u32 %v3699, 7
        %v3701 = vsub.s32 %v3698, %v3700
        %v3702 = vrot.slane %v3686, %v3701
        %v3704 = vunpack.c.l.s4 1966171168
        %v3705 = vunpack.c.0.s8 %v3704
        %v3706 = vlaneseq
        %v3707 = vshrl.u32 %v3706, 7
        %v3708 = vsub.s32 %v3705, %v3707
        %v3709 = vrot.slane %v3687, %v3708
        %v3711 = vunpack.c.l.s4 1966171168
        %v3712 = vunpack.c.0.s8 %v3711
        %v3713 = vlaneseq
        %v3714 = vshrl.u32 %v3713, 7
        %v3715 = vsub.s32 %v3712, %v3714
        %v3716 = vrot.slane %v3688, %v3715
        %v3717 = vcombine.low %v3695, %v3702
        %v3718 = vcombine.high %v3695, %v3702
        %v3719 = vcombine.low %v3709, %v3716
        %v3720 = vcombine.high %v3709, %v3716
        %v3722 = vunpack.c.l.s4 1966171168
        %v3723 = vunpack.c.0.s8 %v3722
        %v3724 = vlaneseq
        %v3725 = vshrl.u32 %v3724, 7
        %v3726 = vsub.s32 %v3723, %v3725
        %v3727 = vrot.slane %v3717, %v3726
        %v3729 = vunpack.c.l.s4 1966171168
        %v3730 = vunpack.c.0.s8 %v3729
        %v3731 = vlaneseq
        %v3732 = vshrl.u32 %v3731, 7
        %v3733 = vsub.s32 %v3730, %v3732
        %v3734 = vrot.slane %v3718, %v3733
        %v3736 = vunpack.c.l.s4 1966171168
        %v3737 = vunpack.c.0.s8 %v3736
        %v3738 = vlaneseq
        %v3739 = vshrl.u32 %v3738, 7
        %v3740 = vsub.s32 %v3737, %v3739
        %v3741 = vrot.slane %v3719, %v3740
        %v3743 = vunpack.c.l.s4 1966171168
        %v3744 = vunpack.c.0.s8 %v3743
        %v3745 = vlaneseq
        %v3746 = vshrl.u32 %v3745, 7
        %v3747 = vsub.s32 %v3744, %v3746
        %v3748 = vrot.slane %v3720, %v3747
        %v3749 = vcombine.low %v3727, %v3741
        %v3750 = vcombine.low %v3734, %v3748
        %v3751 = vcombine.low %v3359, %v3366
        %v3752 = vcombine.low %v3367, %v3383
        %v3753 = vcombine.low %v3390, %v3391
        %v3754 = vcombine.low %v3407, %v3414
        %v3756 = vunpack.c.l.s4 1966171168
        %v3757 = vunpack.c.0.s8 %v3756
        %v3758 = vlaneseq
        %v3759 = vshrl.u32 %v3758, 7
        %v3760 = vsub.s32 %v3757, %v3759
        %v3761 = vrot.slane %v3751, %v3760
        %v3763 = vunpack.c.l.s4 1966171168
        %v3764 = vunpack.c.0.s8 %v3763
        %v3765 = vlaneseq
        %v3766 = vshrl.u32 %v3765, 7
        %v3767 = vsub.s32 %v3764, %v3766
        %v3768 = vrot.slane %v3752, %v3767
        %v3770 = vunpack.c.l.s4 1966171168
        %v3771 = vunpack.c.0.s8 %v3770
        %v3772 = vlaneseq
        %v3773 = vshrl.u32 %v3772, 7
        %v3774 = vsub.s32 %v3771, %v3773
        %v3775 = vrot.slane %v3753, %v3774
        %v3777 = vunpack.c.l.s4 1966171168
        %v3778 = vunpack.c.0.s8 %v3777
        %v3779 = vlaneseq
        %v3780 = vshrl.u32 %v3779, 7
        %v3781 = vsub.s32 %v3778, %v3780
        %v3782 = vrot.slane %v3754, %v3781
        %v3783 = vcombine.low %v3761, %v3768
        %v3784 = vcombine.high %v3761, %v3768
        %v3785 = vcombine.low %v3775, %v3782
        %v3786 = vcombine.high %v3775, %v3782
        %v3788 = vunpack.c.l.s4 1966171168
        %v3789 = vunpack.c.0.s8 %v3788
        %v3790 = vlaneseq
        %v3791 = vshrl.u32 %v3790, 7
        %v3792 = vsub.s32 %v3789, %v3791
        %v3793 = vrot.slane %v3783, %v3792
        %v3795 = vunpack.c.l.s4 1966171168
        %v3796 = vunpack.c.0.s8 %v3795
        %v3797 = vlaneseq
        %v3798 = vshrl.u32 %v3797, 7
        %v3799 = vsub.s32 %v3796, %v3798
        %v3800 = vrot.slane %v3784, %v3799
        %v3802 = vunpack.c.l.s4 1966171168
        %v3803 = vunpack.c.0.s8 %v3802
        %v3804 = vlaneseq
        %v3805 = vshrl.u32 %v3804, 7
        %v3806 = vsub.s32 %v3803, %v3805
        %v3807 = vrot.slane %v3785, %v3806
        %v3809 = vunpack.c.l.s4 1966171168
        %v3810 = vunpack.c.0.s8 %v3809
        %v3811 = vlaneseq
        %v3812 = vshrl.u32 %v3811, 7
        %v3813 = vsub.s32 %v3810, %v3812
        %v3814 = vrot.slane %v3786, %v3813
        %v3815 = vcombine.low %v3793, %v3807
        %v3816 = vcombine.low %v3800, %v3814
        %v3817 = vcombine.low %v3415, %v3431
        %v3818 = vcombine.low %v3438, %v3439
        %v3819 = vcombine.low %v3455, %v3462
        %v3820 = vcombine.low %v3463, %v3479
        %v3822 = vunpack.c.l.s4 1966171168
        %v3823 = vunpack.c.0.s8 %v3822
        %v3824 = vlaneseq
        %v3825 = vshrl.u32 %v3824, 7
        %v3826 = vsub.s32 %v3823, %v3825
        %v3827 = vrot.slane %v3817, %v3826
        %v3829 = vunpack.c.l.s4 1966171168
        %v3830 = vunpack.c.0.s8 %v3829
        %v3831 = vlaneseq
        %v3832 = vshrl.u32 %v3831, 7
        %v3833 = vsub.s32 %v3830, %v3832
        %v3834 = vrot.slane %v3818, %v3833
        %v3836 = vunpack.c.l.s4 1966171168
        %v3837 = vunpack.c.0.s8 %v3836
        %v3838 = vlaneseq
        %v3839 = vshrl.u32 %v3838, 7
        %v3840 = vsub.s32 %v3837, %v3839
        %v3841 = vrot.slane %v3819, %v3840
        %v3843 = vunpack.c.l.s4 1966171168
        %v3844 = vunpack.c.0.s8 %v3843
        %v3845 = vlaneseq
        %v3846 = vshrl.u32 %v3845, 7
        %v3847 = vsub.s32 %v3844, %v3846
        %v3848 = vrot.slane %v3820, %v3847
        %v3849 = vcombine.low %v3827, %v3834
        %v3850 = vcombine.high %v3827, %v3834
        %v3851 = vcombine.low %v3841, %v3848
        %v3852 = vcombine.high %v3841, %v3848
        %v3854 = vunpack.c.l.s4 1966171168
        %v3855 = vunpack.c.0.s8 %v3854
        %v3856 = vlaneseq
        %v3857 = vshrl.u32 %v3856, 7
        %v3858 = vsub.s32 %v3855, %v3857
        %v3859 = vrot.slane %v3849, %v3858
        %v3861 = vunpack.c.l.s4 1966171168
        %v3862 = vunpack.c.0.s8 %v3861
        %v3863 = vlaneseq
        %v3864 = vshrl.u32 %v3863, 7
        %v3865 = vsub.s32 %v3862, %v3864
        %v3866 = vrot.slane %v3850, %v3865
        %v3868 = vunpack.c.l.s4 1966171168
        %v3869 = vunpack.c.0.s8 %v3868
        %v3870 = vlaneseq
        %v3871 = vshrl.u32 %v3870, 7
        %v3872 = vsub.s32 %v3869, %v3871
        %v3873 = vrot.slane %v3851, %v3872
        %v3875 = vunpack.c.l.s4 1966171168
        %v3876 = vunpack.c.0.s8 %v3875
        %v3877 = vlaneseq
        %v3878 = vshrl.u32 %v3877, 7
        %v3879 = vsub.s32 %v3876, %v3878
        %v3880 = vrot.slane %v3852, %v3879
        %v3881 = vcombine.low %v3859, %v3873
        %v3882 = vcombine.low %v3866, %v3880
        %v3883 = vcombine.low %v3486, %v3487
        %v3884 = vcombine.low %v3503, %v3510
        %v3885 = vcombine.low %v3511, %v3527
        %v3886 = vcombine.low %v3534, %v3535
        %v3888 = vunpack.c.l.s4 1966171168
        %v3889 = vunpack.c.0.s8 %v3888
        %v3890 = vlaneseq
        %v3891 = vshrl.u32 %v3890, 7
        %v3892 = vsub.s32 %v3889, %v3891
        %v3893 = vrot.slane %v3883, %v3892
        %v3895 = vunpack.c.l.s4 1966171168
        %v3896 = vunpack.c.0.s8 %v3895
        %v3897 = vlaneseq
        %v3898 = vshrl.u32 %v3897, 7
        %v3899 = vsub.s32 %v3896, %v3898
        %v3900 = vrot.slane %v3884, %v3899
        %v3902 = vunpack.c.l.s4 1966171168
        %v3903 = vunpack.c.0.s8 %v3902
        %v3904 = vlaneseq
        %v3905 = vshrl.u32 %v3904, 7
        %v3906 = vsub.s32 %v3903, %v3905
        %v3907 = vrot.slane %v3885, %v3906
        %v3909 = vunpack.c.l.s4 1966171168
        %v3910 = vunpack.c.0.s8 %v3909
        %v3911 = vlaneseq
        %v3912 = vshrl.u32 %v3911, 7
        %v3913 = vsub.s32 %v3910, %v3912
        %v3914 = vrot.slane %v3886, %v3913
        %v3915 = vcombine.low %v3893, %v3900
        %v3916 = vcombine.high %v3893, %v3900
        %v3917 = vcombine.low %v3907, %v3914
        %v3918 = vcombine.high %v3907, %v3914
        %v3920 = vunpack.c.l.s4 1966171168
        %v3921 = vunpack.c.0.s8 %v3920
        %v3922 = vlaneseq
        %v3923 = vshrl.u32 %v3922, 7
        %v3924 = vsub.s32 %v3921, %v3923
        %v3925 = vrot.slane %v3915, %v3924
        %v3927 = vunpack.c.l.s4 1966171168
        %v3928 = vunpack.c.0.s8 %v3927
        %v3929 = vlaneseq
        %v3930 = vshrl.u32 %v3929, 7
        %v3931 = vsub.s32 %v3928, %v3930
        %v3932 = vrot.slane %v3916, %v3931
        %v3934 = vunpack.c.l.s4 1966171168
        %v3935 = vunpack.c.0.s8 %v3934
        %v3936 = vlaneseq
        %v3937 = vshrl.u32 %v3936, 7
        %v3938 = vsub.s32 %v3935, %v3937
        %v3939 = vrot.slane %v3917, %v3938
        %v3941 = vunpack.c.l.s4 1966171168
        %v3942 = vunpack.c.0.s8 %v3941
        %v3943 = vlaneseq
        %v3944 = vshrl.u32 %v3943, 7
        %v3945 = vsub.s32 %v3942, %v3944
        %v3946 = vrot.slane %v3918, %v3945
        %v3947 = vcombine.low %v3925, %v3939
        %v3948 = vcombine.low %v3932, %v3946
        %v3975 = vunpack.c.l.b16 %v3115
        %v3976 = vunpack.c.l.b16 %v3116
        %v3977 = vunpack.c.l.b16 %v3117
        %v3978 = vunpack.c.l.b16 %v3118
        %v3979 = vunpack.c.l.b16 %v3119
        %v3980 = vunpack.c.l.b16 %v3120
        %v3981 = vunpack.c.l.b16 %v3121
        %v3982 = vunpack.c.l.b16 %v3122
        %v3983 = vunpack.c.l.b16 %v3123
        %v3984 = vunpack.c.l.b16 %v3124
        %v3985 = vunpack.c.l.b16 %v3125
        %v3986 = vunpack.c.l.b16 %v3126
        %v3987 = vunpack.c.l.b16 %v3127
        %v3988 = vunpack.c.l.b16 %v3128
        %v3989 = vunpack.c.l.b16 %v3129
        %v3990 = vunpack.c.l.b16 %v3130
        %v3991 = vunpack.c.l.b16 %v3131
        %v3992 = vunpack.c.l.b16 %v3132
        %v3993 = vunpack.c.l.b16 %v3133
        %v3994 = vunpack.c.l.b16 %v3134
        %v3995 = vpack.c.b16 %v3976, %v3975
        %v3996 = vpack.c.b16 %v3978, %v3977
        %v3997 = vpack.c.b16 %v3980, %v3979
        %v3998 = vpack.c.b16 %v3982, %v3981
        %v3999 = vpack.c.b16 %v3984, %v3983
        %v4000 = vpack.c.b16 %v3986, %v3985
        %v4001 = vpack.c.b16 %v3988, %v3987
        %v4002 = vpack.c.b16 %v3990, %v3989
        %v4003 = vpack.c.b16 %v3992, %v3991
        %v4004 = vpack.c.b16 %v3994, %v3993
        %v4015 = vcombine.low %v3544, %v3552
        %v4016 = vcombine.low %v3551, %v3544
        %v4018 = vunpack.c.l.s4 1983009808
        %v4019 = vunpack.c.0.s8 %v4018
        %v4020 = vlaneseq
        %v4021 = vshrl.u32 %v4020, 7
        %v4022 = vsub.s32 %v4019, %v4021
        %v4023 = vrot.slane %v4015, %v4022
        %v4025 = vunpack.c.l.s4 1983009808
        %v4026 = vunpack.c.0.s8 %v4025
        %v4027 = vlaneseq
        %v4028 = vshrl.u32 %v4027, 7
        %v4029 = vsub.s32 %v4026, %v4028
        %v4030 = vrot.slane %v4016, %v4029
        %v4031 = vcombine.low %v4023, %v4030
        %v4032 = vcombine.low %v3552, %v3551
        %v4034 = vunpack.c.l.s4 1983009808
        %v4035 = vunpack.c.0.s8 %v4034
        %v4036 = vlaneseq
        %v4037 = vshrl.u32 %v4036, 7
        %v4038 = vsub.s32 %v4035, %v4037
        %v4039 = vrot.slane %v4032, %v4038
        %v4040 = vcombine.low %v4039, %v4023
        %v4041 = vcombine.low %v4030, %v4039
        %v4046 = vsel %vm3016, %v3618, 0
        %v4049 = vsel %vm3016, %v3684, 0
        %v4052 = vsel %vm3016, %v3750, 0
        %v4055 = vsel %vm3016, %v3816, 0
        %v4058 = vsel %vm3016, %v3882, 0
        %v4061 = vsel %vm3016, %v3948, 0
        %4063 = vmatprep.subr.bf16.mxu0 0
        %4064 = vmatpush1.bf16.msra.mxu0 %v4002
        %4065 = vmatprep.subr.bf16.mxu0 0
        %4066 = vmatpush1.bf16.msra.mxu0 %v4001
        %4067 = vmatprep.subr.bf16.mxu0 0
        %4068 = vmatpush1.bf16.msra.mxu0 %v4000
        %4069 = vmatprep.subr.bf16.mxu0 0
        %4070 = vmatpush1.bf16.msra.mxu0 %v3999
        %4071 = vmatprep.subr.bf16.mxu0 0
        %4072 = vmatpush1.bf16.msra.mxu0 %v3998
        %4073 = vmatprep.subr.bf16.mxu0 0
        %4074 = vmatpush1.bf16.msra.mxu0 %v3997
        %4075 = vmatprep.subr.bf16.mxu0 0
        %4076 = vmatpush1.bf16.msra.mxu0 %v3996
        %4077 = vmatprep.subr.bf16.mxu0 0
        %4078 = vmatpush1.bf16.msra.mxu0 %v3995
        %4079 = vmatprep.subr.bf16.mxu0 0
        %4080 = vmatpush2.bf16.msra.mxu0 0
        %4081 = vmatprep.subr.bf16.mxu0 0
        %4082 = vmatpush2.bf16.msra.mxu0 0
        %4083 = vmatprep.subr.bf16.mxu0 0
        %4084 = vmatpush2.bf16.msra.mxu0 0
        %4085 = vmatprep.subr.bf16.mxu0 0
        %4086 = vmatpush2.bf16.msra.mxu0 0
        %4087 = vmatprep.subr.bf16.mxu0 0
        %4088 = vmatpush2.bf16.msra.mxu0 0
        %4089 = vmatprep.subr.bf16.mxu0 0
        %4090 = vmatpush2.bf16.msra.mxu0 0
        %4091 = vmatprep.subr.bf16.mxu0 0
        %4092 = vmatpush2.bf16.msra.mxu0 %v4004
        %4093 = vmatprep.subr.bf16.mxu0 0
        %4094 = vmatpush2.bf16.msra.mxu0 %v4003
        %4095 = vmatprep.mubr.bf16.mxu0 %v4046
        %4096 = vmatmul.mubr.bf16.gmra.mxu0 %v3617
        %v4097 = vpop.f32.mrf.mxu0
        %v4098 = vadd.f32 %v4031, %v4097
        %v4099 = vpop.f32.mrf.mxu0
        %v4100 = vpop.f32.mrf.mxu0
        %v4101 = vadd.f32 %v4040, %v4100
        %v4102 = vpop.f32.mrf.mxu0
        %4103 = vmatprep.mubr.bf16.mxu0 %v4049
        %4104 = vmatmul.mubr.bf16.gmra.mxu0 %v3683
        %v4105 = vpop.f32.mrf.mxu0
        %v4106 = vadd.f32 %v4041, %v4105
        %v4107 = vpop.f32.mrf.mxu0
        %v4108 = vpop.f32.mrf.mxu0
        %v4109 = vadd.f32 %v4031, %v4108
        %v4110 = vpop.f32.mrf.mxu0
        %4111 = vmatprep.mubr.bf16.mxu0 %v4052
        %4112 = vmatmul.mubr.bf16.gmra.mxu0 %v3749
        %v4113 = vpop.f32.mrf.mxu0
        %v4114 = vadd.f32 %v4040, %v4113
        %v4115 = vpop.f32.mrf.mxu0
        %v4116 = vpop.f32.mrf.mxu0
        %v4117 = vadd.f32 %v4041, %v4116
        %v4118 = vpop.f32.mrf.mxu0
        %4119 = vmatprep.mubr.bf16.mxu0 %v4055
        %4120 = vmatmul.mubr.bf16.gmra.mxu0 %v3815
        %v4121 = vpop.f32.mrf.mxu0
        %v4122 = vadd.f32 %v4031, %v4121
        %v4123 = vpop.f32.mrf.mxu0
        %v4124 = vpop.f32.mrf.mxu0
        %v4125 = vadd.f32 %v4040, %v4124
        %v4126 = vpop.f32.mrf.mxu0
        %4127 = vmatprep.mubr.bf16.mxu0 %v4058
        %4128 = vmatmul.mubr.bf16.gmra.mxu0 %v3881
        %v4129 = vpop.f32.mrf.mxu0
        %v4130 = vadd.f32 %v4041, %v4129
        %v4131 = vpop.f32.mrf.mxu0
        %v4132 = vpop.f32.mrf.mxu0
        %v4133 = vadd.f32 %v4031, %v4132
        %v4134 = vpop.f32.mrf.mxu0
        %4135 = vmatprep.mubr.bf16.mxu0 %v4061
        %4136 = vmatmul.mubr.bf16.gmra.mxu0 %v3947
        %v4137 = vpop.f32.mrf.mxu0
        %v4138 = vadd.f32 %v4040, %v4137
        %v4139 = vpop.f32.mrf.mxu0
        %v4140 = vpop.f32.mrf.mxu0
        %v4141 = vadd.f32 %v4041, %v4140
        %v4142 = vpop.f32.mrf.mxu0
        %4143 = vdwg.mxu0
        %v4156 = vcombine.high %v4098, %v4098
        %v4158 = vunpack.c.l.s4 1983009808
        %v4159 = vunpack.c.0.s8 %v4158
        %v4160 = vlaneseq
        %v4161 = vshrl.u32 %v4160, 7
        %v4162 = vsub.s32 %v4159, %v4161
        %v4163 = vrot.slane %v4098, %v4162
        %v4165 = vunpack.c.l.s4 1983009808
        %v4166 = vunpack.c.0.s8 %v4165
        %v4167 = vlaneseq
        %v4168 = vshrl.u32 %v4167, 7
        %v4169 = vsub.s32 %v4166, %v4168
        %v4170 = vrot.slane %v4156, %v4169
        %v4171 = vcombine.high %v4163, %v4163
        %v4172 = vcombine.high %v4170, %v4170
        %v4173 = vcombine.high %v4101, %v4101
        %v4175 = vunpack.c.l.s4 1983009808
        %v4176 = vunpack.c.0.s8 %v4175
        %v4177 = vlaneseq
        %v4178 = vshrl.u32 %v4177, 7
        %v4179 = vsub.s32 %v4176, %v4178
        %v4180 = vrot.slane %v4101, %v4179
        %v4182 = vunpack.c.l.s4 1983009808
        %v4183 = vunpack.c.0.s8 %v4182
        %v4184 = vlaneseq
        %v4185 = vshrl.u32 %v4184, 7
        %v4186 = vsub.s32 %v4183, %v4185
        %v4187 = vrot.slane %v4173, %v4186
        %v4188 = vcombine.high %v4180, %v4180
        %v4189 = vcombine.high %v4187, %v4187
        %v4190 = vcombine.high %v4106, %v4106
        %v4192 = vunpack.c.l.s4 1983009808
        %v4193 = vunpack.c.0.s8 %v4192
        %v4194 = vlaneseq
        %v4195 = vshrl.u32 %v4194, 7
        %v4196 = vsub.s32 %v4193, %v4195
        %v4197 = vrot.slane %v4106, %v4196
        %v4199 = vunpack.c.l.s4 1983009808
        %v4200 = vunpack.c.0.s8 %v4199
        %v4201 = vlaneseq
        %v4202 = vshrl.u32 %v4201, 7
        %v4203 = vsub.s32 %v4200, %v4202
        %v4204 = vrot.slane %v4190, %v4203
        %v4205 = vcombine.high %v4197, %v4197
        %v4206 = vcombine.high %v4204, %v4204
        %v4207 = vcombine.high %v4109, %v4109
        %v4209 = vunpack.c.l.s4 1983009808
        %v4210 = vunpack.c.0.s8 %v4209
        %v4211 = vlaneseq
        %v4212 = vshrl.u32 %v4211, 7
        %v4213 = vsub.s32 %v4210, %v4212
        %v4214 = vrot.slane %v4109, %v4213
        %v4216 = vunpack.c.l.s4 1983009808
        %v4217 = vunpack.c.0.s8 %v4216
        %v4218 = vlaneseq
        %v4219 = vshrl.u32 %v4218, 7
        %v4220 = vsub.s32 %v4217, %v4219
        %v4221 = vrot.slane %v4207, %v4220
        %v4222 = vcombine.high %v4214, %v4214
        %v4223 = vcombine.high %v4221, %v4221
        %v4224 = vcombine.high %v4114, %v4114
        %v4226 = vunpack.c.l.s4 1983009808
        %v4227 = vunpack.c.0.s8 %v4226
        %v4228 = vlaneseq
        %v4229 = vshrl.u32 %v4228, 7
        %v4230 = vsub.s32 %v4227, %v4229
        %v4231 = vrot.slane %v4114, %v4230
        %v4233 = vunpack.c.l.s4 1983009808
        %v4234 = vunpack.c.0.s8 %v4233
        %v4235 = vlaneseq
        %v4236 = vshrl.u32 %v4235, 7
        %v4237 = vsub.s32 %v4234, %v4236
        %v4238 = vrot.slane %v4224, %v4237
        %v4239 = vcombine.high %v4231, %v4231
        %v4240 = vcombine.high %v4238, %v4238
        %v4241 = vcombine.high %v4117, %v4117
        %v4243 = vunpack.c.l.s4 1983009808
        %v4244 = vunpack.c.0.s8 %v4243
        %v4245 = vlaneseq
        %v4246 = vshrl.u32 %v4245, 7
        %v4247 = vsub.s32 %v4244, %v4246
        %v4248 = vrot.slane %v4117, %v4247
        %v4250 = vunpack.c.l.s4 1983009808
        %v4251 = vunpack.c.0.s8 %v4250
        %v4252 = vlaneseq
        %v4253 = vshrl.u32 %v4252, 7
        %v4254 = vsub.s32 %v4251, %v4253
        %v4255 = vrot.slane %v4241, %v4254
        %v4256 = vcombine.high %v4248, %v4248
        %v4257 = vcombine.high %v4255, %v4255
        %v4258 = vcombine.high %v4122, %v4122
        %v4260 = vunpack.c.l.s4 1983009808
        %v4261 = vunpack.c.0.s8 %v4260
        %v4262 = vlaneseq
        %v4263 = vshrl.u32 %v4262, 7
        %v4264 = vsub.s32 %v4261, %v4263
        %v4265 = vrot.slane %v4122, %v4264
        %v4267 = vunpack.c.l.s4 1983009808
        %v4268 = vunpack.c.0.s8 %v4267
        %v4269 = vlaneseq
        %v4270 = vshrl.u32 %v4269, 7
        %v4271 = vsub.s32 %v4268, %v4270
        %v4272 = vrot.slane %v4258, %v4271
        %v4273 = vcombine.high %v4265, %v4265
        %v4274 = vcombine.high %v4272, %v4272
        %v4275 = vcombine.high %v4125, %v4125
        %v4277 = vunpack.c.l.s4 1983009808
        %v4278 = vunpack.c.0.s8 %v4277
        %v4279 = vlaneseq
        %v4280 = vshrl.u32 %v4279, 7
        %v4281 = vsub.s32 %v4278, %v4280
        %v4282 = vrot.slane %v4125, %v4281
        %v4284 = vunpack.c.l.s4 1983009808
        %v4285 = vunpack.c.0.s8 %v4284
        %v4286 = vlaneseq
        %v4287 = vshrl.u32 %v4286, 7
        %v4288 = vsub.s32 %v4285, %v4287
        %v4289 = vrot.slane %v4275, %v4288
        %v4290 = vcombine.high %v4282, %v4282
        %v4291 = vcombine.high %v4289, %v4289
        %v4292 = vcombine.high %v4130, %v4130
        %v4294 = vunpack.c.l.s4 1983009808
        %v4295 = vunpack.c.0.s8 %v4294
        %v4296 = vlaneseq
        %v4297 = vshrl.u32 %v4296, 7
        %v4298 = vsub.s32 %v4295, %v4297
        %v4299 = vrot.slane %v4130, %v4298
        %v4301 = vunpack.c.l.s4 1983009808
        %v4302 = vunpack.c.0.s8 %v4301
        %v4303 = vlaneseq
        %v4304 = vshrl.u32 %v4303, 7
        %v4305 = vsub.s32 %v4302, %v4304
        %v4306 = vrot.slane %v4292, %v4305
        %v4307 = vcombine.high %v4299, %v4299
        %v4308 = vcombine.high %v4306, %v4306
        %v4309 = vcombine.high %v4133, %v4133
        %v4311 = vunpack.c.l.s4 1983009808
        %v4312 = vunpack.c.0.s8 %v4311
        %v4313 = vlaneseq
        %v4314 = vshrl.u32 %v4313, 7
        %v4315 = vsub.s32 %v4312, %v4314
        %v4316 = vrot.slane %v4133, %v4315
        %v4318 = vunpack.c.l.s4 1983009808
        %v4319 = vunpack.c.0.s8 %v4318
        %v4320 = vlaneseq
        %v4321 = vshrl.u32 %v4320, 7
        %v4322 = vsub.s32 %v4319, %v4321
        %v4323 = vrot.slane %v4309, %v4322
        %v4324 = vcombine.high %v4316, %v4316
        %v4325 = vcombine.high %v4323, %v4323
        %v4326 = vcombine.high %v4138, %v4138
        %v4328 = vunpack.c.l.s4 1983009808
        %v4329 = vunpack.c.0.s8 %v4328
        %v4330 = vlaneseq
        %v4331 = vshrl.u32 %v4330, 7
        %v4332 = vsub.s32 %v4329, %v4331
        %v4333 = vrot.slane %v4138, %v4332
        %v4335 = vunpack.c.l.s4 1983009808
        %v4336 = vunpack.c.0.s8 %v4335
        %v4337 = vlaneseq
        %v4338 = vshrl.u32 %v4337, 7
        %v4339 = vsub.s32 %v4336, %v4338
        %v4340 = vrot.slane %v4326, %v4339
        %v4341 = vcombine.high %v4333, %v4333
        %v4342 = vcombine.high %v4340, %v4340
        %v4343 = vcombine.high %v4141, %v4141
        %v4345 = vunpack.c.l.s4 1983009808
        %v4346 = vunpack.c.0.s8 %v4345
        %v4347 = vlaneseq
        %v4348 = vshrl.u32 %v4347, 7
        %v4349 = vsub.s32 %v4346, %v4348
        %v4350 = vrot.slane %v4141, %v4349
        %v4352 = vunpack.c.l.s4 1983009808
        %v4353 = vunpack.c.0.s8 %v4352
        %v4354 = vlaneseq
        %v4355 = vshrl.u32 %v4354, 7
        %v4356 = vsub.s32 %v4353, %v4355
        %v4357 = vrot.slane %v4343, %v4356
        %v4358 = vcombine.high %v4350, %v4350
        %v4359 = vcombine.high %v4357, %v4357
        %v4360 = vcombine.low %v4163, %v4171
        %v4362 = vunpack.c.l.s4 1983009808
        %v4363 = vunpack.c.0.s8 %v4362
        %v4364 = vlaneseq
        %v4365 = vshrl.u32 %v4364, 7
        %v4366 = vsub.s32 %v4363, %v4365
        %v4367 = vrot.slane %v4360, %v4366
        %v4369 = vunpack.c.l.s4 1983009808
        %v4370 = vunpack.c.0.s8 %v4369
        %v4371 = vlaneseq
        %v4372 = vshrl.u32 %v4371, 7
        %v4373 = vsub.s32 %v4370, %v4372
        %v4374 = vrot.slane %v4170, %v4373
        %v4375 = vcombine.low %v4367, %v4374
        %v4376 = vcombine.low %v4172, %v4180
        %v4378 = vunpack.c.l.s4 1983009808
        %v4379 = vunpack.c.0.s8 %v4378
        %v4380 = vlaneseq
        %v4381 = vshrl.u32 %v4380, 7
        %v4382 = vsub.s32 %v4379, %v4381
        %v4383 = vrot.slane %v4376, %v4382
        %v4385 = vunpack.c.l.s4 1983009808
        %v4386 = vunpack.c.0.s8 %v4385
        %v4387 = vlaneseq
        %v4388 = vshrl.u32 %v4387, 7
        %v4389 = vsub.s32 %v4386, %v4388
        %v4390 = vrot.slane %v4188, %v4389
        %v4391 = vcombine.low %v4383, %v4390
        %v4392 = vcombine.low %v4187, %v4189
        %v4394 = vunpack.c.l.s4 1983009808
        %v4395 = vunpack.c.0.s8 %v4394
        %v4396 = vlaneseq
        %v4397 = vshrl.u32 %v4396, 7
        %v4398 = vsub.s32 %v4395, %v4397
        %v4399 = vrot.slane %v4392, %v4398
        %v4401 = vunpack.c.l.s4 1983009808
        %v4402 = vunpack.c.0.s8 %v4401
        %v4403 = vlaneseq
        %v4404 = vshrl.u32 %v4403, 7
        %v4405 = vsub.s32 %v4402, %v4404
        %v4406 = vrot.slane %v4197, %v4405
        %v4407 = vcombine.low %v4399, %v4406
        %v4408 = vcombine.low %v4205, %v4204
        %v4410 = vunpack.c.l.s4 1983009808
        %v4411 = vunpack.c.0.s8 %v4410
        %v4412 = vlaneseq
        %v4413 = vshrl.u32 %v4412, 7
        %v4414 = vsub.s32 %v4411, %v4413
        %v4415 = vrot.slane %v4408, %v4414
        %v4417 = vunpack.c.l.s4 1983009808
        %v4418 = vunpack.c.0.s8 %v4417
        %v4419 = vlaneseq
        %v4420 = vshrl.u32 %v4419, 7
        %v4421 = vsub.s32 %v4418, %v4420
        %v4422 = vrot.slane %v4206, %v4421
        %v4423 = vcombine.low %v4415, %v4422
        %v4424 = vcombine.low %v4214, %v4222
        %v4426 = vunpack.c.l.s4 1983009808
        %v4427 = vunpack.c.0.s8 %v4426
        %v4428 = vlaneseq
        %v4429 = vshrl.u32 %v4428, 7
        %v4430 = vsub.s32 %v4427, %v4429
        %v4431 = vrot.slane %v4424, %v4430
        %v4433 = vunpack.c.l.s4 1983009808
        %v4434 = vunpack.c.0.s8 %v4433
        %v4435 = vlaneseq
        %v4436 = vshrl.u32 %v4435, 7
        %v4437 = vsub.s32 %v4434, %v4436
        %v4438 = vrot.slane %v4221, %v4437
        %v4439 = vcombine.low %v4431, %v4438
        %v4440 = vcombine.low %v4223, %v4231
        %v4442 = vunpack.c.l.s4 1983009808
        %v4443 = vunpack.c.0.s8 %v4442
        %v4444 = vlaneseq
        %v4445 = vshrl.u32 %v4444, 7
        %v4446 = vsub.s32 %v4443, %v4445
        %v4447 = vrot.slane %v4440, %v4446
        %v4449 = vunpack.c.l.s4 1983009808
        %v4450 = vunpack.c.0.s8 %v4449
        %v4451 = vlaneseq
        %v4452 = vshrl.u32 %v4451, 7
        %v4453 = vsub.s32 %v4450, %v4452
        %v4454 = vrot.slane %v4239, %v4453
        %v4455 = vcombine.low %v4447, %v4454
        %v4456 = vcombine.low %v4238, %v4240
        %v4458 = vunpack.c.l.s4 1983009808
        %v4459 = vunpack.c.0.s8 %v4458
        %v4460 = vlaneseq
        %v4461 = vshrl.u32 %v4460, 7
        %v4462 = vsub.s32 %v4459, %v4461
        %v4463 = vrot.slane %v4456, %v4462
        %v4465 = vunpack.c.l.s4 1983009808
        %v4466 = vunpack.c.0.s8 %v4465
        %v4467 = vlaneseq
        %v4468 = vshrl.u32 %v4467, 7
        %v4469 = vsub.s32 %v4466, %v4468
        %v4470 = vrot.slane %v4248, %v4469
        %v4471 = vcombine.low %v4463, %v4470
        %v4472 = vcombine.low %v4256, %v4255
        %v4474 = vunpack.c.l.s4 1983009808
        %v4475 = vunpack.c.0.s8 %v4474
        %v4476 = vlaneseq
        %v4477 = vshrl.u32 %v4476, 7
        %v4478 = vsub.s32 %v4475, %v4477
        %v4479 = vrot.slane %v4472, %v4478
        %v4481 = vunpack.c.l.s4 1983009808
        %v4482 = vunpack.c.0.s8 %v4481
        %v4483 = vlaneseq
        %v4484 = vshrl.u32 %v4483, 7
        %v4485 = vsub.s32 %v4482, %v4484
        %v4486 = vrot.slane %v4257, %v4485
        %v4487 = vcombine.low %v4479, %v4486
        %v4488 = vcombine.low %v4265, %v4273
        %v4490 = vunpack.c.l.s4 1983009808
        %v4491 = vunpack.c.0.s8 %v4490
        %v4492 = vlaneseq
        %v4493 = vshrl.u32 %v4492, 7
        %v4494 = vsub.s32 %v4491, %v4493
        %v4495 = vrot.slane %v4488, %v4494
        %v4497 = vunpack.c.l.s4 1983009808
        %v4498 = vunpack.c.0.s8 %v4497
        %v4499 = vlaneseq
        %v4500 = vshrl.u32 %v4499, 7
        %v4501 = vsub.s32 %v4498, %v4500
        %v4502 = vrot.slane %v4272, %v4501
        %v4503 = vcombine.low %v4495, %v4502
        %v4504 = vcombine.low %v4274, %v4282
        %v4506 = vunpack.c.l.s4 1983009808
        %v4507 = vunpack.c.0.s8 %v4506
        %v4508 = vlaneseq
        %v4509 = vshrl.u32 %v4508, 7
        %v4510 = vsub.s32 %v4507, %v4509
        %v4511 = vrot.slane %v4504, %v4510
        %v4513 = vunpack.c.l.s4 1983009808
        %v4514 = vunpack.c.0.s8 %v4513
        %v4515 = vlaneseq
        %v4516 = vshrl.u32 %v4515, 7
        %v4517 = vsub.s32 %v4514, %v4516
        %v4518 = vrot.slane %v4290, %v4517
        %v4519 = vcombine.low %v4511, %v4518
        %v4520 = vcombine.low %v4289, %v4291
        %v4522 = vunpack.c.l.s4 1983009808
        %v4523 = vunpack.c.0.s8 %v4522
        %v4524 = vlaneseq
        %v4525 = vshrl.u32 %v4524, 7
        %v4526 = vsub.s32 %v4523, %v4525
        %v4527 = vrot.slane %v4520, %v4526
        %v4529 = vunpack.c.l.s4 1983009808
        %v4530 = vunpack.c.0.s8 %v4529
        %v4531 = vlaneseq
        %v4532 = vshrl.u32 %v4531, 7
        %v4533 = vsub.s32 %v4530, %v4532
        %v4534 = vrot.slane %v4299, %v4533
        %v4535 = vcombine.low %v4527, %v4534
        %v4536 = vcombine.low %v4307, %v4306
        %v4538 = vunpack.c.l.s4 1983009808
        %v4539 = vunpack.c.0.s8 %v4538
        %v4540 = vlaneseq
        %v4541 = vshrl.u32 %v4540, 7
        %v4542 = vsub.s32 %v4539, %v4541
        %v4543 = vrot.slane %v4536, %v4542
        %v4545 = vunpack.c.l.s4 1983009808
        %v4546 = vunpack.c.0.s8 %v4545
        %v4547 = vlaneseq
        %v4548 = vshrl.u32 %v4547, 7
        %v4549 = vsub.s32 %v4546, %v4548
        %v4550 = vrot.slane %v4308, %v4549
        %v4551 = vcombine.low %v4543, %v4550
        %v4552 = vcombine.low %v4316, %v4324
        %v4554 = vunpack.c.l.s4 1983009808
        %v4555 = vunpack.c.0.s8 %v4554
        %v4556 = vlaneseq
        %v4557 = vshrl.u32 %v4556, 7
        %v4558 = vsub.s32 %v4555, %v4557
        %v4559 = vrot.slane %v4552, %v4558
        %v4561 = vunpack.c.l.s4 1983009808
        %v4562 = vunpack.c.0.s8 %v4561
        %v4563 = vlaneseq
        %v4564 = vshrl.u32 %v4563, 7
        %v4565 = vsub.s32 %v4562, %v4564
        %v4566 = vrot.slane %v4323, %v4565
        %v4567 = vcombine.low %v4559, %v4566
        %v4568 = vcombine.low %v4325, %v4333
        %v4570 = vunpack.c.l.s4 1983009808
        %v4571 = vunpack.c.0.s8 %v4570
        %v4572 = vlaneseq
        %v4573 = vshrl.u32 %v4572, 7
        %v4574 = vsub.s32 %v4571, %v4573
        %v4575 = vrot.slane %v4568, %v4574
        %v4577 = vunpack.c.l.s4 1983009808
        %v4578 = vunpack.c.0.s8 %v4577
        %v4579 = vlaneseq
        %v4580 = vshrl.u32 %v4579, 7
        %v4581 = vsub.s32 %v4578, %v4580
        %v4582 = vrot.slane %v4341, %v4581
        %v4583 = vcombine.low %v4575, %v4582
        %v4584 = vcombine.low %v4340, %v4342
        %v4586 = vunpack.c.l.s4 1983009808
        %v4587 = vunpack.c.0.s8 %v4586
        %v4588 = vlaneseq
        %v4589 = vshrl.u32 %v4588, 7
        %v4590 = vsub.s32 %v4587, %v4589
        %v4591 = vrot.slane %v4584, %v4590
        %v4593 = vunpack.c.l.s4 1983009808
        %v4594 = vunpack.c.0.s8 %v4593
        %v4595 = vlaneseq
        %v4596 = vshrl.u32 %v4595, 7
        %v4597 = vsub.s32 %v4594, %v4596
        %v4598 = vrot.slane %v4350, %v4597
        %v4599 = vcombine.low %v4591, %v4598
        %v4600 = vcombine.low %v4358, %v4357
        %v4602 = vunpack.c.l.s4 1983009808
        %v4603 = vunpack.c.0.s8 %v4602
        %v4604 = vlaneseq
        %v4605 = vshrl.u32 %v4604, 7
        %v4606 = vsub.s32 %v4603, %v4605
        %v4607 = vrot.slane %v4600, %v4606
        %v4609 = vunpack.c.l.s4 1983009808
        %v4610 = vunpack.c.0.s8 %v4609
        %v4611 = vlaneseq
        %v4612 = vshrl.u32 %v4611, 7
        %v4613 = vsub.s32 %v4610, %v4612
        %v4614 = vrot.slane %v4359, %v4613
        %v4615 = vcombine.low %v4607, %v4614
        %vm4632 = vcmask 1045504
        %v4633 = vsel %vm4632, %v4375, -inf
        %v4634 = vrot.slane %v4633, 4
        %v4635 = vmax.f32 %v4633, %v4634
        %v4636 = vrot.slane %v4635, 2
        %v4637 = vmax.f32 %v4635, %v4636
        %v4638 = vrot.slane %v4637, 1
        %v4639 = vmax.f32 %v4637, %v4638
        %v4640 = vsel %vm4632, %v4391, -inf
        %v4641 = vrot.slane %v4640, 4
        %v4642 = vmax.f32 %v4640, %v4641
        %v4643 = vrot.slane %v4642, 2
        %v4644 = vmax.f32 %v4642, %v4643
        %v4645 = vrot.slane %v4644, 1
        %v4646 = vmax.f32 %v4644, %v4645
        %v4647 = vsel %vm4632, %v4407, -inf
        %v4648 = vrot.slane %v4647, 4
        %v4649 = vmax.f32 %v4647, %v4648
        %v4650 = vrot.slane %v4649, 2
        %v4651 = vmax.f32 %v4649, %v4650
        %v4652 = vrot.slane %v4651, 1
        %v4653 = vmax.f32 %v4651, %v4652
        %v4654 = vsel %vm4632, %v4423, -inf
        %v4655 = vrot.slane %v4654, 4
        %v4656 = vmax.f32 %v4654, %v4655
        %v4657 = vrot.slane %v4656, 2
        %v4658 = vmax.f32 %v4656, %v4657
        %v4659 = vrot.slane %v4658, 1
        %v4660 = vmax.f32 %v4658, %v4659
        %v4661 = vsel %vm4632, %v4439, -inf
        %v4662 = vrot.slane %v4661, 4
        %v4663 = vmax.f32 %v4661, %v4662
        %v4664 = vrot.slane %v4663, 2
        %v4665 = vmax.f32 %v4663, %v4664
        %v4666 = vrot.slane %v4665, 1
        %v4667 = vmax.f32 %v4665, %v4666
        %v4668 = vsel %vm4632, %v4455, -inf
        %v4669 = vrot.slane %v4668, 4
        %v4670 = vmax.f32 %v4668, %v4669
        %v4671 = vrot.slane %v4670, 2
        %v4672 = vmax.f32 %v4670, %v4671
        %v4673 = vrot.slane %v4672, 1
        %v4674 = vmax.f32 %v4672, %v4673
        %v4675 = vsel %vm4632, %v4471, -inf
        %v4676 = vrot.slane %v4675, 4
        %v4677 = vmax.f32 %v4675, %v4676
        %v4678 = vrot.slane %v4677, 2
        %v4679 = vmax.f32 %v4677, %v4678
        %v4680 = vrot.slane %v4679, 1
        %v4681 = vmax.f32 %v4679, %v4680
        %v4682 = vsel %vm4632, %v4487, -inf
        %v4683 = vrot.slane %v4682, 4
        %v4684 = vmax.f32 %v4682, %v4683
        %v4685 = vrot.slane %v4684, 2
        %v4686 = vmax.f32 %v4684, %v4685
        %v4687 = vrot.slane %v4686, 1
        %v4688 = vmax.f32 %v4686, %v4687
        %v4689 = vsel %vm4632, %v4503, -inf
        %v4690 = vrot.slane %v4689, 4
        %v4691 = vmax.f32 %v4689, %v4690
        %v4692 = vrot.slane %v4691, 2
        %v4693 = vmax.f32 %v4691, %v4692
        %v4694 = vrot.slane %v4693, 1
        %v4695 = vmax.f32 %v4693, %v4694
        %v4696 = vsel %vm4632, %v4519, -inf
        %v4697 = vrot.slane %v4696, 4
        %v4698 = vmax.f32 %v4696, %v4697
        %v4699 = vrot.slane %v4698, 2
        %v4700 = vmax.f32 %v4698, %v4699
        %v4701 = vrot.slane %v4700, 1
        %v4702 = vmax.f32 %v4700, %v4701
        %v4703 = vsel %vm4632, %v4535, -inf
        %v4704 = vrot.slane %v4703, 4
        %v4705 = vmax.f32 %v4703, %v4704
        %v4706 = vrot.slane %v4705, 2
        %v4707 = vmax.f32 %v4705, %v4706
        %v4708 = vrot.slane %v4707, 1
        %v4709 = vmax.f32 %v4707, %v4708
        %v4710 = vsel %vm4632, %v4551, -inf
        %v4711 = vrot.slane %v4710, 4
        %v4712 = vmax.f32 %v4710, %v4711
        %v4713 = vrot.slane %v4712, 2
        %v4714 = vmax.f32 %v4712, %v4713
        %v4715 = vrot.slane %v4714, 1
        %v4716 = vmax.f32 %v4714, %v4715
        %v4717 = vsel %vm4632, %v4567, -inf
        %v4718 = vrot.slane %v4717, 4
        %v4719 = vmax.f32 %v4717, %v4718
        %v4720 = vrot.slane %v4719, 2
        %v4721 = vmax.f32 %v4719, %v4720
        %v4722 = vrot.slane %v4721, 1
        %v4723 = vmax.f32 %v4721, %v4722
        %v4724 = vsel %vm4632, %v4583, -inf
        %v4725 = vrot.slane %v4724, 4
        %v4726 = vmax.f32 %v4724, %v4725
        %v4727 = vrot.slane %v4726, 2
        %v4728 = vmax.f32 %v4726, %v4727
        %v4729 = vrot.slane %v4728, 1
        %v4730 = vmax.f32 %v4728, %v4729
        %v4731 = vsel %vm4632, %v4599, -inf
        %v4732 = vrot.slane %v4731, 4
        %v4733 = vmax.f32 %v4731, %v4732
        %v4734 = vrot.slane %v4733, 2
        %v4735 = vmax.f32 %v4733, %v4734
        %v4736 = vrot.slane %v4735, 1
        %v4737 = vmax.f32 %v4735, %v4736
        %v4738 = vsel %vm4632, %v4615, -inf
        %v4739 = vrot.slane %v4738, 4
        %v4740 = vmax.f32 %v4738, %v4739
        %v4741 = vrot.slane %v4740, 2
        %v4742 = vmax.f32 %v4740, %v4741
        %v4743 = vrot.slane %v4742, 1
        %v4744 = vmax.f32 %v4742, %v4743
        %v4745 = vld [vmem:[#allocation2] sm:$0x1]
        %v4747 = vlaneseq
        %v4748 = vshrl.u32 %v4747, 7
        %v4749 = vsub.s32 0, %v4748
        %v4750 = vrot.slane %v4745, %v4749
        %v4752 = vadd.f32 %v4639, %v4750
        %v4753 = vadd.f32 %v4646, %v4750
        %v4754 = vadd.f32 %v4653, %v4750
        %v4755 = vadd.f32 %v4660, %v4750
        %v4756 = vadd.f32 %v4667, %v4750
        %v4757 = vadd.f32 %v4674, %v4750
        %v4758 = vadd.f32 %v4681, %v4750
        %v4759 = vadd.f32 %v4688, %v4750
        %v4760 = vadd.f32 %v4695, %v4750
        %v4761 = vadd.f32 %v4702, %v4750
        %v4762 = vadd.f32 %v4709, %v4750
        %v4763 = vadd.f32 %v4716, %v4750
        %v4764 = vadd.f32 %v4723, %v4750
        %v4765 = vadd.f32 %v4730, %v4750
        %v4766 = vadd.f32 %v4737, %v4750
        %v4767 = vadd.f32 %v4744, %v4750
        %v4768 = vmax.f32 %v4752, 0.0
        %v4769 = vmax.f32 %v4753, 0.0
        %v4770 = vmax.f32 %v4754, 0.0
        %v4771 = vmax.f32 %v4755, 0.0
        %v4772 = vmax.f32 %v4756, 0.0
        %v4773 = vmax.f32 %v4757, 0.0
        %v4774 = vmax.f32 %v4758, 0.0
        %v4775 = vmax.f32 %v4759, 0.0
        %v4776 = vmax.f32 %v4760, 0.0
        %v4777 = vmax.f32 %v4761, 0.0
        %v4778 = vmax.f32 %v4762, 0.0
        %v4779 = vmax.f32 %v4763, 0.0
        %v4780 = vmax.f32 %v4764, 0.0
        %v4781 = vmax.f32 %v4765, 0.0
        %v4782 = vmax.f32 %v4766, 0.0
        %v4783 = vmax.f32 %v4767, 0.0
        %v4784 = vpack.c.bf16 %v4768, %v4768
        %v4785 = vpack.c.bf16 %v4769, %v4769
        %v4786 = vpack.c.bf16 %v4770, %v4770
        %v4787 = vpack.c.bf16 %v4771, %v4771
        %v4788 = vpack.c.bf16 %v4772, %v4772
        %v4789 = vpack.c.bf16 %v4773, %v4773
        %v4790 = vpack.c.bf16 %v4774, %v4774
        %v4791 = vpack.c.bf16 %v4775, %v4775
        %v4792 = vpack.c.bf16 %v4776, %v4776
        %v4793 = vpack.c.bf16 %v4777, %v4777
        %v4794 = vpack.c.bf16 %v4778, %v4778
        %v4795 = vpack.c.bf16 %v4779, %v4779
        %v4796 = vpack.c.bf16 %v4780, %v4780
        %v4797 = vpack.c.bf16 %v4781, %v4781
        %v4798 = vpack.c.bf16 %v4782, %v4782
        %v4799 = vpack.c.bf16 %v4783, %v4783
        %v4800 = vld [vmem:[%s5] sm:$0xf]
        %v4801 = vld [vmem:[%s5 + $0x4] sm:$0xf]
        %v4802 = vld [vmem:[%s5 + $0x8] sm:$0xf]
        %v4803 = vld [vmem:[%s5 + $0xc] sm:$0xf]
        %v4804 = vld [vmem:[%s5 + $0x10] sm:$0xf]
        %v4805 = vld [vmem:[%s5 + $0x14] sm:$0xf]
        %v4806 = vld [vmem:[%s5 + $0x18] sm:$0xf]
        %v4807 = vld [vmem:[%s5 + $0x1c] sm:$0xf]
        %v4808 = vld [vmem:[%s5 + $0x20] sm:$0xf]
        %v4809 = vld [vmem:[%s5 + $0x24] sm:$0xf]
        %v4810 = vld [vmem:[%s5 + $0x28] sm:$0xf]
        %v4811 = vld [vmem:[%s5 + $0x2c] sm:$0xf]
        %v4812 = vld [vmem:[%s5 + $0x30] sm:$0xf]
        %v4813 = vld [vmem:[%s5 + $0x34] sm:$0xf]
        %v4814 = vld [vmem:[%s5 + $0x38] sm:$0xf]
        %v4815 = vld [vmem:[%s5 + $0x3c] sm:$0xf]
        %v4816 = vld [vmem:[%s6] sm:$0x1]
        %v4818 = vlaneseq
        %v4819 = vshrl.u32 %v4818, 7
        %v4820 = vsub.s32 0, %v4819
        %v4821 = vrot.slane %v4816, %v4820
        %v4839 = vunpack.c.l.b16 %v4784
        %v4840 = vunpack.c.l.b16 %v4785
        %v4841 = vunpack.c.l.b16 %v4786
        %v4842 = vunpack.c.l.b16 %v4787
        %v4843 = vunpack.c.l.b16 %v4788
        %v4844 = vunpack.c.l.b16 %v4789
        %v4845 = vunpack.c.l.b16 %v4790
        %v4846 = vunpack.c.l.b16 %v4791
        %v4847 = vunpack.c.l.b16 %v4792
        %v4848 = vunpack.c.l.b16 %v4793
        %v4849 = vunpack.c.l.b16 %v4794
        %v4850 = vunpack.c.l.b16 %v4795
        %v4851 = vunpack.c.l.b16 %v4796
        %v4852 = vunpack.c.l.b16 %v4797
        %v4853 = vunpack.c.l.b16 %v4798
        %v4854 = vunpack.c.l.b16 %v4799
        %v4855 = vrot.slane %v4840, 7
        %vm4856 = vcmask 1041409
        %v4857 = vsel %vm4856, %v4855, %v4839
        %v4858 = vrot.slane %v4841, 6
        %vm4859 = vcmask 1042434
        %v4860 = vsel %vm4859, %v4858, %v4857
        %v4861 = vrot.slane %v4842, 5
        %vm4862 = vcmask 1043459
        %v4863 = vsel %vm4862, %v4861, %v4860
        %v4864 = vrot.slane %v4843, 4
        %vm4865 = vcmask 1044484
        %v4866 = vsel %vm4865, %v4864, %v4863
        %v4867 = vrot.slane %v4844, 3
        %vm4868 = vcmask 1045509
        %v4869 = vsel %vm4868, %v4867, %v4866
        %v4870 = vrot.slane %v4845, 2
        %vm4871 = vcmask 1046534
        %v4872 = vsel %vm4871, %v4870, %v4869
        %v4873 = vrot.slane %v4846, 1
        %vm4874 = vcmask 1047559
        %v4875 = vsel %vm4874, %v4873, %v4872
        %v4876 = vrot.slane %v4848, 7
        %v4877 = vsel %vm4856, %v4876, %v4847
        %v4878 = vrot.slane %v4849, 6
        %v4879 = vsel %vm4859, %v4878, %v4877
        %v4880 = vrot.slane %v4850, 5
        %v4881 = vsel %vm4862, %v4880, %v4879
        %v4882 = vrot.slane %v4851, 4
        %v4883 = vsel %vm4865, %v4882, %v4881
        %v4884 = vrot.slane %v4852, 3
        %v4885 = vsel %vm4868, %v4884, %v4883
        %v4886 = vrot.slane %v4853, 2
        %v4887 = vsel %vm4871, %v4886, %v4885
        %v4888 = vrot.slane %v4854, 1
        %v4889 = vsel %vm4874, %v4888, %v4887
        %v4890 = vpack.c.b16 %v4889, %v4875
        %v4908 = vunpack.c.l.b16 %v4800
        %v4909 = vunpack.c.l.b16 %v4801
        %v4910 = vunpack.c.l.b16 %v4802
        %v4911 = vunpack.c.l.b16 %v4803
        %v4912 = vunpack.c.l.b16 %v4804
        %v4913 = vunpack.c.l.b16 %v4805
        %v4914 = vunpack.c.l.b16 %v4806
        %v4915 = vunpack.c.l.b16 %v4807
        %v4916 = vunpack.c.l.b16 %v4808
        %v4917 = vunpack.c.l.b16 %v4809
        %v4918 = vunpack.c.l.b16 %v4810
        %v4919 = vunpack.c.l.b16 %v4811
        %v4920 = vunpack.c.l.b16 %v4812
        %v4921 = vunpack.c.l.b16 %v4813
        %v4922 = vunpack.c.l.b16 %v4814
        %v4923 = vunpack.c.l.b16 %v4815
        %v4924 = vpack.c.b16 %v4909, %v4908
        %v4925 = vpack.c.b16 %v4911, %v4910
        %v4926 = vpack.c.b16 %v4913, %v4912
        %v4927 = vpack.c.b16 %v4915, %v4914
        %v4928 = vpack.c.b16 %v4917, %v4916
        %v4929 = vpack.c.b16 %v4919, %v4918
        %v4930 = vpack.c.b16 %v4921, %v4920
        %v4931 = vpack.c.b16 %v4923, %v4922
        %4940 = vmatprep.subr.bf16.mxu0 0
        %4941 = vmatpush1.bf16.msra.mxu0 %v4931
        %4942 = vmatprep.subr.bf16.mxu0 0
        %4943 = vmatpush1.bf16.msra.mxu0 %v4930
        %4944 = vmatprep.subr.bf16.mxu0 0
        %4945 = vmatpush1.bf16.msra.mxu0 %v4929
        %4946 = vmatprep.subr.bf16.mxu0 0
        %4947 = vmatpush1.bf16.msra.mxu0 %v4928
        %4948 = vmatprep.subr.bf16.mxu0 0
        %4949 = vmatpush1.bf16.msra.mxu0 %v4927
        %4950 = vmatprep.subr.bf16.mxu0 0
        %4951 = vmatpush1.bf16.msra.mxu0 %v4926
        %4952 = vmatprep.subr.bf16.mxu0 0
        %4953 = vmatpush1.bf16.msra.mxu0 %v4925
        %4954 = vmatprep.subr.bf16.mxu0 0
        %4955 = vmatpush1.bf16.msra.mxu0 %v4924
        %4956 = vmatprep.subr.bf16.mxu0 0
        %4957 = vmatpush2.bf16.msra.mxu0 0
        %4958 = vmatprep.subr.bf16.mxu0 0
        %4959 = vmatpush2.bf16.msra.mxu0 0
        %4960 = vmatprep.subr.bf16.mxu0 0
        %4961 = vmatpush2.bf16.msra.mxu0 0
        %4962 = vmatprep.subr.bf16.mxu0 0
        %4963 = vmatpush2.bf16.msra.mxu0 0
        %4964 = vmatprep.subr.bf16.mxu0 0
        %4965 = vmatpush2.bf16.msra.mxu0 0
        %4966 = vmatprep.subr.bf16.mxu0 0
        %4967 = vmatpush2.bf16.msra.mxu0 0
        %4968 = vmatprep.subr.bf16.mxu0 0
        %4969 = vmatpush2.bf16.msra.mxu0 0
        %4970 = vmatprep.subr.bf16.mxu0 0
        %4971 = vmatpush2.bf16.msra.mxu0 0
        %4972 = vmatprep.mubr.bf16.mxu0 0
        %4973 = vmatmul.mubr.bf16.gmra.mxu0 %v4890
        %v4974 = vpop.f32.mrf.mxu0
        %v4975 = vadd.f32 %v4821, %v4974
        %v4976 = vpop.f32.mrf.mxu0
        %v4977 = vpop.f32.mrf.mxu0
        %v4978 = vadd.f32 %v4821, %v4977
        %v4979 = vpop.f32.mrf.mxu0
        %4980 = vdwg.mxu0
        %v4981 = vmax.f32 %v4975, 0.0
        %v4982 = vmax.f32 %v4978, 0.0
        %v4983 = vld [vmem:[%s339] sm:$0xff]
        %v4984 = vld [vmem:[%s339 + $0x8] sm:$0xff]
        %4986 = vset.pattern.permute.xlu0 0
        %4987 = vperm.xlu0 %4986, %v4983
        %v4988 = vpop.permute.xlu0 %4987
        %4991 = vset.pattern.permute.xlu0 0
        %4992 = vperm.xlu0 %4991, %v4984
        %v4993 = vpop.permute.xlu0 %4992
        %v4995 = vmul.f32 %v4981, %v4988
        %v4996 = vmul.f32 %v4982, %v4993
        %v4997 = vpack.c.bf16 %v4996, %v4995
        %v4999 = vunpack.c.l.b16 %v4997
        %v5000 = vunpack.c.h.b16 %v4997
        %v5001 = vpack.c.b16 %v4999, %v4999
        %v5002 = vpack.c.b16 %v5000, %v5000
        %5005 = vst [vmem:[%s328] sm:$0xf] %v5001
        %5006 = vst [vmem:[%s328 + $0x4] sm:$0xf] %v5002
        %s5007 = sand.u32 %s209, 1
        %s5008 = scalar_lea.sflag [#allocation4], %s5007
        %s5009 = sand.u32 %s209, 1
        %s5010 = smul.addr %s5009, 8
        %s5011 = scalar_lea.vmem [#allocation5], %s5010
        // Predicated region
        $region57: #{tpu_custom_call.1} parent=51 // pred_check
          %p5012 = pneg %p219
        $region58: #{tpu_custom_call.1} parent=51 // pred_check_branch
          %5014 = sbr.rel (%p5012) target = $region60
        $region59: #{tpu_custom_call.1} parent=51 // pred_region
          %s5015 = smul.u32 2, %s23
          %s5017 = ssub.s32 128, 128
          %5018 = vsyncadd %s5008, %s5017
          %s5019 = smul.addr %s5015, 64
          %s5020 = scalar_lea.hbm %s8, %s5019
          %s5021 = sshll.u32 %s5011, 4
          %s5022 = int_to_ptr.vmem [resolvable:$true] %s5021
          %5027 = dma.vmem_to_hbm [thread:$0]  %s5022, 128, %s5020, %s5008, 64, 64, 4
        $region60: #{tpu_custom_call.1} parent=51 // pred_fallthru
          _
      $region52: #{tpu_custom_call.1} parent=5 // pred_fallthru
        _
      %p5028 = scmp.le.s32.totalorder 2, %s18
      // Predicated region
      $region61: #{tpu_custom_call.1} parent=5 // pred_check
        %p5029 = pneg %p5028
      $region62: #{tpu_custom_call.1} parent=5 // pred_check_branch
        %5031 = sbr.rel (%p5029) target = $region64
      $region63: #{tpu_custom_call.1} parent=5 // pred_region
        %s5032 = ssub.s32 %s18, 2
        // Predicated region
        $region65: #{tpu_custom_call.1} parent=63 // pred_check
          %p5033 = pneg %p225
        $region66: #{tpu_custom_call.1} parent=63 // pred_check_branch
          %5035 = sbr.rel (%p5033) target = $region68
        $region67: #{tpu_custom_call.1} parent=63 // pred_region
          %s5036 = sand.u32 %s210, 1
          %s5037 = scalar_lea.sflag [#allocation4], %s5036
          %s5038 = sand.u32 %s210, 1
          %s5039 = smul.addr %s5038, 8
          %s5040 = scalar_lea.vmem [#allocation5], %s5039
          %5041 = dma.done %s5037, 128
        $region68: #{tpu_custom_call.1} parent=63 // pred_fallthru
          _
      $region64: #{tpu_custom_call.1} parent=5 // pred_fallthru
        _
    $region6: #{tpu_custom_call.1} parent=1 // loop_footer
      %s22 = sadd.s32 1, %s18
    $region7: #{tpu_custom_call.1} parent=1 // loop_footer_branch
      %17 = sbr.rel target = $region3
    $region8: #{tpu_custom_call.1} parent=1 // loop_exit
      _
    %5042 = vsyncpa [#allocation3], 1
    %s5043 = scalar_lea.sflag [#allocation3], 1
    %5044 = vsyncpa %s5043, 1
    %5045 = vsyncpa [#allocation4], 1
    %s5046 = scalar_lea.sflag [#allocation4], 1
    %5047 = vsyncpa %s5046, 1

</llo_original>
